<compile_context>
chip_gen: v6e
topology: v6e:2x2x1
jax: 0.10.0
libtpu: 0.0.40
codegen_flags: <defaults>
</compile_context>

<pallas_src>
import math
import functools

import jax
import jax.numpy as jnp
from jax.experimental import pallas as pl
from jax.experimental.pallas import tpu as pltpu


def cross_attention_kernel(q_in_ref, kt_ref, v_ref,
                           wq_ref, bq_ref, wo_ref, bo_ref,
                           out_ref, *, n_heads, d_head):
    """One (batch, query-tile) grid step.

    q_in_ref : (TQ, D)         query activations (batch squeezed)
    kt_ref   : (H, dh, Lkv)    K — projected, head-split, pre-transposed
    v_ref    : (H, Lkv, dh)    V — projected, head-split
    wq_ref   : (D, D)          Wq^T with 1/sqrt(dh) folded in
    bq_ref   : (1, D)          bq * scale (f32)
    wo_ref   : (H, dh, D)      Wo^T split per head
    bo_ref   : (1, D)          bo (f32)
    out_ref  : (TQ, D)
    """
    x_q = q_in_ref[...]
    cdt = x_q.dtype                      # MXU operand dtype (bf16 stays bf16)

    # Full-width, pre-scaled Q projection (dominates FLOPs; N=D is MXU-dense).
    q = (jnp.dot(x_q, wq_ref[...], preferred_element_type=jnp.float32)
         + bq_ref[...]).astype(cdt)                                   # (TQ, D)

    # Per-head attention with Wo fused as an f32 accumulation.
    acc = jnp.zeros(out_ref.shape, jnp.float32)                       # (TQ, D)
    for h in range(n_heads):                 # static loop, n_heads is small
        lo = h * d_head
        # TODO(synk): lane-align head bands (pad d_head to 128 in the weight
        # layout) to avoid the masked relayout of this sub-128-lane slice.
        qh = q[:, lo:lo + d_head]                                      # (TQ, dh)
        kh_t = kt_ref[h]                                               # (dh, Lkv)
        vh = v_ref[h]                                                  # (Lkv, dh)

        # Scores: plain matmul — K is pre-transposed in the wrapper, the
        # 1/sqrt(dh) scale is already folded into Wq/bq.
        s = jnp.dot(qh, kh_t, preferred_element_type=jnp.float32)      # (TQ, Lkv)

        # Numerically stable softmax; normalisation on the EUP slot.
        s = s - jnp.max(s, axis=-1, keepdims=True)
        p = jnp.exp(s)
        denom = jnp.sum(p, axis=-1, keepdims=True)
        p = p * pl.reciprocal(denom, approx=True)

        oh = jnp.dot(p.astype(cdt), vh,
                     preferred_element_type=jnp.float32)               # (TQ, dh)

        # Fused output projection for this head (lane-dense, f32 accumulate).
        acc = acc + jnp.dot(oh.astype(cdt), wo_ref[h],
                            preferred_element_type=jnp.float32)        # (TQ, D)

    out_ref[...] = (acc + bo_ref[...]).astype(out_ref.dtype)


def _pick_q_tile(lq, d, act_bytes, vmem_budget=24 * 1024 * 1024):
    """Largest query tile whose q-dependent VMEM footprint fits the budget."""
    for cand in (2048, 1024, 512, 256, 128):
        if cand > lq:
            continue
        # Double-buffered q-in + out tiles (act dtype) + f32 Q projection
        # + f32 output accumulator.
        est = cand * d * (4 * act_bytes + 2 * 4)
        if est <= vmem_budget:
            return cand
    # Short sequences: a single full-extent tile (no (8,128) constraint then).
    return lq


def cross_attention(query, keys_n_values, params, n_heads):
    """query: (B, Lq, d_embed); keys_n_values: (B, Lkv, d_cross)."""
    B, Lq, D = query.shape
    _, Lkv, Dc = keys_n_values.shape
    assert D % n_heads == 0
    d_head = D // n_heads

    wq, bq, wk, bk, wv, bv, wo, bo = params
    act_dtype = query.dtype
    scale = 1.0 / math.sqrt(d_head)

    # --- Wrapper-side preparation (plain XLA, once per call) --------------
    # PyTorch Linear stores W as (out, in): pre-transpose to (in, out).
    wq_t = (jnp.transpose(wq) * scale).astype(act_dtype)              # (D, D), scale folded
    bq_s = (bq * scale).astype(jnp.float32).reshape(1, D)
    # Wo^T split per head: rows [h*dh, (h+1)*dh) of Wo^T act on head h.
    wo_h = jnp.transpose(wo).reshape(n_heads, d_head, D).astype(act_dtype)
    bo_r = bo.astype(jnp.float32).reshape(1, D)

    # K / V projections computed ONCE per batch (not per query tile),
    # head-split; K pre-transposed for a transpose-free scores matmul.
    k = keys_n_values @ jnp.transpose(wk) + bk                         # (B, Lkv, D)
    v = keys_n_values @ jnp.transpose(wv) + bv                         # (B, Lkv, D)
    k_t = (k.reshape(B, Lkv, n_heads, d_head)
            .transpose(0, 2, 3, 1).astype(act_dtype))                  # (B, H, dh, Lkv)
    v_h = (v.reshape(B, Lkv, n_heads, d_head)
            .transpose(0, 2, 1, 3).astype(act_dtype))                  # (B, H, Lkv, dh)

    TQ = _pick_q_tile(Lq, D, jnp.dtype(act_dtype).itemsize)
    Lq_pad = ((Lq + TQ - 1) // TQ) * TQ
    q_in = (query if Lq_pad == Lq
            else jnp.pad(query, ((0, 0), (0, Lq_pad - Lq), (0, 0))))

    grid = (B, Lq_pad // TQ)
    kernel = functools.partial(cross_attention_kernel,
                               n_heads=n_heads, d_head=d_head)

    def build(single_buffer_weights):
        const_kw = ({"pipeline_mode": pl.Buffered(1)}
                    if single_buffer_weights else {})
        in_specs = [
            # Query tile: batch squeezed, Lq tiled.
            pl.BlockSpec((pl.Squeezed(), TQ, D), lambda b, qi: (b, qi, 0)),
            # Pre-projected K^T / V: whole per batch (Lkv is small).
            pl.BlockSpec((pl.Squeezed(), n_heads, d_head, Lkv),
                         lambda b, qi: (b, 0, 0, 0)),
            pl.BlockSpec((pl.Squeezed(), n_heads, Lkv, d_head),
                         lambda b, qi: (b, 0, 0, 0)),
            # Constant weight / bias blocks (index never changes).
            pl.BlockSpec((D, D), lambda b, qi: (0, 0), **const_kw),         # Wq^T*scale
            pl.BlockSpec((1, D), lambda b, qi: (0, 0), **const_kw),         # bq*scale
            pl.BlockSpec((n_heads, d_head, D),
                         lambda b, qi: (0, 0, 0), **const_kw),              # Wo^T heads
            pl.BlockSpec((1, D), lambda b, qi: (0, 0), **const_kw),         # bo
        ]
        grid_spec = pltpu.PrefetchScalarGridSpec(
            num_scalar_prefetch=0,
            grid=grid,
            in_specs=in_specs,
            out_specs=pl.BlockSpec((pl.Squeezed(), TQ, D),
                                   lambda b, qi: (b, qi, 0)),
        )
        return pl.pallas_call(
            kernel,
            out_shape=jax.ShapeDtypeStruct((B, Lq_pad, D), act_dtype),
            grid_spec=grid_spec,
            compiler_params=pltpu.CompilerParams(
                dimension_semantics=("parallel", "parallel"),
                # 48 MiB: headroom on v7x's 64 MiB physical VMEM; well within
                # v5e/v6e's 128 MiB.
                vmem_limit_bytes=48 * 1024 * 1024,
            ),
        )

    args = (q_in, k_t, v_h, wq_t, bq_s, wo_h, bo_r)
    try:
        out = build(single_buffer_weights=True)(*args)
    except Exception:
        # pipeline_mode=pl.Buffered(1) not supported by this JAX/Mosaic build;
        # fall back to default double-buffering of the constant blocks.
        out = build(single_buffer_weights=False)(*args)

    return out if Lq_pad == Lq else out[:, :Lq, :]


def reference_cross_attention(query, keys_n_values, params, n_heads):
    """Pure-JAX reference matching the PyTorch forward exactly."""
    wq, bq, wk, bk, wv, bv, wo, bo = params
    B, Lq, D = query.shape
    d_head = D // n_heads

    q = query @ wq.T + bq
    k = keys_n_values @ wk.T + bk
    v = keys_n_values @ wv.T + bv

    def to_heads(x):
        Bx, L, _ = x.shape
        return x.reshape(Bx, L, n_heads, d_head).transpose(0, 2, 1, 3)

    q, k, v = to_heads(q), to_heads(k), to_heads(v)
    scores = jnp.einsum("bhqd,bhkd->bhqk", q, k) / math.sqrt(d_head)
    scores = jax.nn.softmax(scores, axis=-1)
    out = jnp.einsum("bhqk,bhkd->bhqd", scores, v)
    out = out.transpose(0, 2, 1, 3).reshape(B, Lq, D)
    return out @ wo.T + bo


def init_params(key, d_embed, d_cross):
    """Deterministic synthetic parameters (PyTorch Linear weight layout: (out, in))."""
    ks = jax.random.split(key, 8)
    scale_e = 1.0 / math.sqrt(d_embed)
    scale_c = 1.0 / math.sqrt(d_cross)
    wq = jax.random.uniform(ks[0], (d_embed, d_embed), jnp.float32, -scale_e, scale_e)
    bq = jax.random.uniform(ks[1], (d_embed,), jnp.float32, -scale_e, scale_e)
    wk = jax.random.uniform(ks[2], (d_embed, d_cross), jnp.float32, -scale_c, scale_c)
    bk = jax.random.uniform(ks[3], (d_embed,), jnp.float32, -scale_c, scale_c)
    wv = jax.random.uniform(ks[4], (d_embed, d_cross), jnp.float32, -scale_c, scale_c)
    bv = jax.random.uniform(ks[5], (d_embed,), jnp.float32, -scale_c, scale_c)
    wo = jax.random.uniform(ks[6], (d_embed, d_embed), jnp.float32, -scale_e, scale_e)
    bo = jax.random.uniform(ks[7], (d_embed,), jnp.float32, -scale_e, scale_e)
    return (wq, bq, wk, bk, wv, bv, wo, bo)


if __name__ == "__main__":
    # Small shapes consistent with the module's forward.
    B, Lq, Lkv = 2, 16, 8
    n_heads, d_embed, d_cross = 4, 32, 24

    key = jax.random.PRNGKey(0)
    k_q, k_kv, k_p = jax.random.split(key, 3)
    query = jax.random.normal(k_q, (B, Lq, d_embed), jnp.float32)
    keys_n_values = jax.random.normal(k_kv, (B, Lkv, d_cross), jnp.float32)
    params = init_params(k_p, d_embed, d_cross)

    out = cross_attention(query, keys_n_values, params, n_heads)
    out = jax.block_until_ready(out)

    ref = reference_cross_attention(query, keys_n_values, params, n_heads)
    assert out.shape == (B, Lq, d_embed)
    # Tolerance loosened vs 1e-5 because (a) softmax normalisation uses the EUP
    # approximate reciprocal and (b) the 1/sqrt(d_head) scale is folded into
    # Wq/bq before the matmul; everything else here is f32-exact.
    assert jnp.allclose(out, ref, atol=5e-3, rtol=5e-3), "mismatch vs reference"

    print("KERNEL_OK")
</pallas_src>

<mosaic_0001>
module attributes {stable_mosaic.version = 11 : i64} {
  func.func @cross_attention_kernel(%arg0: i32, %arg1: i32, %arg2: memref<1x16x32xf32, #tpu.memory_space<vmem>>, %arg3: memref<1x4x8x8xf32, #tpu.memory_space<vmem>>, %arg4: memref<1x4x8x8xf32, #tpu.memory_space<vmem>>, %arg5: memref<32x32xf32, #tpu.memory_space<vmem>>, %arg6: memref<1x32xf32, #tpu.memory_space<vmem>>, %arg7: memref<4x8x32xf32, #tpu.memory_space<vmem>>, %arg8: memref<1x32xf32, #tpu.memory_space<vmem>>, %arg9: memref<1x16x32xf32, #tpu.memory_space<vmem>>) attributes {dimension_semantics = [#tpu.dimension_semantics<parallel>, #tpu.dimension_semantics<parallel>], iteration_bounds = array<i64: 2, 1>, scalar_prefetch = 0 : i64, scratch_operands = 0 : i64, tpu.core_type = #tpu.core_type<tc>, window_params = [{transform_indices = @transform_0, window_bounds = array<i64: 1, 16, 32>}, {transform_indices = @transform_1, window_bounds = array<i64: 1, 4, 8, 8>}, {transform_indices = @transform_2, window_bounds = array<i64: 1, 4, 8, 8>}, {pipeline_mode = #tpu.pipeline_mode<synchronous>, transform_indices = @transform_3, window_bounds = array<i64: 32, 32>}, {pipeline_mode = #tpu.pipeline_mode<synchronous>, transform_indices = @transform_4, window_bounds = array<i64: 1, 32>}, {pipeline_mode = #tpu.pipeline_mode<synchronous>, transform_indices = @transform_5, window_bounds = array<i64: 4, 8, 32>}, {pipeline_mode = #tpu.pipeline_mode<synchronous>, transform_indices = @transform_6, window_bounds = array<i64: 1, 32>}, {transform_indices = @transform_7, window_bounds = array<i64: 1, 16, 32>}]} {
    %c0 = arith.constant 0 : index
    %c0_0 = arith.constant 0 : index
    %c0_1 = arith.constant 0 : index
    %0 = vector.load %arg2[%c0, %c0_0, %c0_1] : memref<1x16x32xf32, #tpu.memory_space<vmem>>, vector<1x16x32xf32>
    %1 = vector.shape_cast %0 : vector<1x16x32xf32> to vector<16x32xf32>
    %c0_2 = arith.constant 0 : index
    %c0_3 = arith.constant 0 : index
    %2 = vector.load %arg5[%c0_2, %c0_3] : memref<32x32xf32, #tpu.memory_space<vmem>>, vector<32x32xf32>
    %cst = arith.constant dense<0.000000e+00> : vector<16x32xf32>
    %3 = tpu.matmul %1, %2, %cst {dimension_numbers = #tpu.dot_dimension_numbers<[1], [0], [0], [1], [0, 0, 1, 1], [], []>} : vector<16x32xf32>, vector<32x32xf32>, vector<16x32xf32> -> vector<16x32xf32>
    %c0_4 = arith.constant 0 : index
    %c0_5 = arith.constant 0 : index
    %4 = vector.load %arg6[%c0_4, %c0_5] : memref<1x32xf32, #tpu.memory_space<vmem>>, vector<1x32xf32>
    %5 = vector.broadcast %4 : vector<1x32xf32> to vector<16x32xf32>
    %6 = arith.addf %3, %5 : vector<16x32xf32>
    %cst_6 = arith.constant 0.000000e+00 : f32
    %7 = vector.broadcast %cst_6 : f32 to vector<16x32xf32>
    %8 = vector.extract_strided_slice %6 {offsets = [0, 0], sizes = [16, 8], strides = [1, 1]} : vector<16x32xf32> to vector<16x8xf32>
    %c0_7 = arith.constant 0 : index
    %c0_8 = arith.constant 0 : index
    %c0_9 = arith.constant 0 : index
    %c0_10 = arith.constant 0 : index
    %9 = vector.load %arg3[%c0_7, %c0_8, %c0_9, %c0_10] : memref<1x4x8x8xf32, #tpu.memory_space<vmem>>, vector<1x1x8x8xf32>
    %10 = vector.shape_cast %9 : vector<1x1x8x8xf32> to vector<8x8xf32>
    %c0_11 = arith.constant 0 : index
    %c0_12 = arith.constant 0 : index
    %c0_13 = arith.constant 0 : index
    %c0_14 = arith.constant 0 : index
    %11 = vector.load %arg4[%c0_11, %c0_12, %c0_13, %c0_14] : memref<1x4x8x8xf32, #tpu.memory_space<vmem>>, vector<1x1x8x8xf32>
    %12 = vector.shape_cast %11 : vector<1x1x8x8xf32> to vector<8x8xf32>
    %cst_15 = arith.constant dense<0.000000e+00> : vector<16x8xf32>
    %13 = tpu.matmul %8, %10, %cst_15 {dimension_numbers = #tpu.dot_dimension_numbers<[1], [0], [0], [1], [0, 0, 1, 1], [], []>} : vector<16x8xf32>, vector<8x8xf32>, vector<16x8xf32> -> vector<16x8xf32>
    %cst_16 = arith.constant dense<0xFF800000> : vector<16xf32>
    %14 = vector.multi_reduction <maximumf>, %13, %cst_16 [1] : vector<16x8xf32> to vector<16xf32>
    %15 = vector.shape_cast %14 : vector<16xf32> to vector<16x1xf32>
    %16 = vector.broadcast %15 : vector<16x1xf32> to vector<16x8xf32>
    %17 = arith.subf %13, %16 : vector<16x8xf32>
    %18 = math.exp %17 : vector<16x8xf32>
    %cst_17 = arith.constant dense<0.000000e+00> : vector<16xf32>
    %19 = vector.multi_reduction <add>, %18, %cst_17 [1] : vector<16x8xf32> to vector<16xf32>
    %20 = vector.shape_cast %19 : vector<16xf32> to vector<16x1xf32>
    %21 = tpu.reciprocal %20 {approx = true} : vector<16x1xf32> -> vector<16x1xf32>
    %22 = vector.broadcast %21 : vector<16x1xf32> to vector<16x8xf32>
    %23 = arith.mulf %18, %22 : vector<16x8xf32>
    %cst_18 = arith.constant dense<0.000000e+00> : vector<16x8xf32>
    %24 = tpu.matmul %23, %12, %cst_18 {dimension_numbers = #tpu.dot_dimension_numbers<[1], [0], [0], [1], [0, 0, 1, 1], [], []>} : vector<16x8xf32>, vector<8x8xf32>, vector<16x8xf32> -> vector<16x8xf32>
    %c0_19 = arith.constant 0 : index
    %c0_20 = arith.constant 0 : index
    %c0_21 = arith.constant 0 : index
    %25 = vector.load %arg7[%c0_19, %c0_20, %c0_21] : memref<4x8x32xf32, #tpu.memory_space<vmem>>, vector<1x8x32xf32>
    %26 = vector.shape_cast %25 : vector<1x8x32xf32> to vector<8x32xf32>
    %cst_22 = arith.constant dense<0.000000e+00> : vector<16x32xf32>
    %27 = tpu.matmul %24, %26, %cst_22 {dimension_numbers = #tpu.dot_dimension_numbers<[1], [0], [0], [1], [0, 0, 1, 1], [], []>} : vector<16x8xf32>, vector<8x32xf32>, vector<16x32xf32> -> vector<16x32xf32>
    %28 = arith.addf %7, %27 : vector<16x32xf32>
    %29 = vector.extract_strided_slice %6 {offsets = [0, 8], sizes = [16, 8], strides = [1, 1]} : vector<16x32xf32> to vector<16x8xf32>
    %c0_23 = arith.constant 0 : index
    %c1 = arith.constant 1 : index
    %c0_24 = arith.constant 0 : index
    %c0_25 = arith.constant 0 : index
    %30 = vector.load %arg3[%c0_23, %c1, %c0_24, %c0_25] : memref<1x4x8x8xf32, #tpu.memory_space<vmem>>, vector<1x1x8x8xf32>
    %31 = vector.shape_cast %30 : vector<1x1x8x8xf32> to vector<8x8xf32>
    %c0_26 = arith.constant 0 : index
    %c1_27 = arith.constant 1 : index
    %c0_28 = arith.constant 0 : index
    %c0_29 = arith.constant 0 : index
    %32 = vector.load %arg4[%c0_26, %c1_27, %c0_28, %c0_29] : memref<1x4x8x8xf32, #tpu.memory_space<vmem>>, vector<1x1x8x8xf32>
    %33 = vector.shape_cast %32 : vector<1x1x8x8xf32> to vector<8x8xf32>
    %cst_30 = arith.constant dense<0.000000e+00> : vector<16x8xf32>
    %34 = tpu.matmul %29, %31, %cst_30 {dimension_numbers = #tpu.dot_dimension_numbers<[1], [0], [0], [1], [0, 0, 1, 1], [], []>} : vector<16x8xf32>, vector<8x8xf32>, vector<16x8xf32> -> vector<16x8xf32>
    %cst_31 = arith.constant dense<0xFF800000> : vector<16xf32>
    %35 = vector.multi_reduction <maximumf>, %34, %cst_31 [1] : vector<16x8xf32> to vector<16xf32>
    %36 = vector.shape_cast %35 : vector<16xf32> to vector<16x1xf32>
    %37 = vector.broadcast %36 : vector<16x1xf32> to vector<16x8xf32>
    %38 = arith.subf %34, %37 : vector<16x8xf32>
    %39 = math.exp %38 : vector<16x8xf32>
    %cst_32 = arith.constant dense<0.000000e+00> : vector<16xf32>
    %40 = vector.multi_reduction <add>, %39, %cst_32 [1] : vector<16x8xf32> to vector<16xf32>
    %41 = vector.shape_cast %40 : vector<16xf32> to vector<16x1xf32>
    %42 = tpu.reciprocal %41 {approx = true} : vector<16x1xf32> -> vector<16x1xf32>
    %43 = vector.broadcast %42 : vector<16x1xf32> to vector<16x8xf32>
    %44 = arith.mulf %39, %43 : vector<16x8xf32>
    %cst_33 = arith.constant dense<0.000000e+00> : vector<16x8xf32>
    %45 = tpu.matmul %44, %33, %cst_33 {dimension_numbers = #tpu.dot_dimension_numbers<[1], [0], [0], [1], [0, 0, 1, 1], [], []>} : vector<16x8xf32>, vector<8x8xf32>, vector<16x8xf32> -> vector<16x8xf32>
    %c1_34 = arith.constant 1 : index
    %c0_35 = arith.constant 0 : index
    %c0_36 = arith.constant 0 : index
    %46 = vector.load %arg7[%c1_34, %c0_35, %c0_36] : memref<4x8x32xf32, #tpu.memory_space<vmem>>, vector<1x8x32xf32>
    %47 = vector.shape_cast %46 : vector<1x8x32xf32> to vector<8x32xf32>
    %cst_37 = arith.constant dense<0.000000e+00> : vector<16x32xf32>
    %48 = tpu.matmul %45, %47, %cst_37 {dimension_numbers = #tpu.dot_dimension_numbers<[1], [0], [0], [1], [0, 0, 1, 1], [], []>} : vector<16x8xf32>, vector<8x32xf32>, vector<16x32xf32> -> vector<16x32xf32>
    %49 = arith.addf %28, %48 : vector<16x32xf32>
    %50 = vector.extract_strided_slice %6 {offsets = [0, 16], sizes = [16, 8], strides = [1, 1]} : vector<16x32xf32> to vector<16x8xf32>
    %c0_38 = arith.constant 0 : index
    %c2 = arith.constant 2 : index
    %c0_39 = arith.constant 0 : index
    %c0_40 = arith.constant 0 : index
    %51 = vector.load %arg3[%c0_38, %c2, %c0_39, %c0_40] : memref<1x4x8x8xf32, #tpu.memory_space<vmem>>, vector<1x1x8x8xf32>
    %52 = vector.shape_cast %51 : vector<1x1x8x8xf32> to vector<8x8xf32>
    %c0_41 = arith.constant 0 : index
    %c2_42 = arith.constant 2 : index
    %c0_43 = arith.constant 0 : index
    %c0_44 = arith.constant 0 : index
    %53 = vector.load %arg4[%c0_41, %c2_42, %c0_43, %c0_44] : memref<1x4x8x8xf32, #tpu.memory_space<vmem>>, vector<1x1x8x8xf32>
    %54 = vector.shape_cast %53 : vector<1x1x8x8xf32> to vector<8x8xf32>
    %cst_45 = arith.constant dense<0.000000e+00> : vector<16x8xf32>
    %55 = tpu.matmul %50, %52, %cst_45 {dimension_numbers = #tpu.dot_dimension_numbers<[1], [0], [0], [1], [0, 0, 1, 1], [], []>} : vector<16x8xf32>, vector<8x8xf32>, vector<16x8xf32> -> vector<16x8xf32>
    %cst_46 = arith.constant dense<0xFF800000> : vector<16xf32>
    %56 = vector.multi_reduction <maximumf>, %55, %cst_46 [1] : vector<16x8xf32> to vector<16xf32>
    %57 = vector.shape_cast %56 : vector<16xf32> to vector<16x1xf32>
    %58 = vector.broadcast %57 : vector<16x1xf32> to vector<16x8xf32>
    %59 = arith.subf %55, %58 : vector<16x8xf32>
    %60 = math.exp %59 : vector<16x8xf32>
    %cst_47 = arith.constant dense<0.000000e+00> : vector<16xf32>
    %61 = vector.multi_reduction <add>, %60, %cst_47 [1] : vector<16x8xf32> to vector<16xf32>
    %62 = vector.shape_cast %61 : vector<16xf32> to vector<16x1xf32>
    %63 = tpu.reciprocal %62 {approx = true} : vector<16x1xf32> -> vector<16x1xf32>
    %64 = vector.broadcast %63 : vector<16x1xf32> to vector<16x8xf32>
    %65 = arith.mulf %60, %64 : vector<16x8xf32>
    %cst_48 = arith.constant dense<0.000000e+00> : vector<16x8xf32>
    %66 = tpu.matmul %65, %54, %cst_48 {dimension_numbers = #tpu.dot_dimension_numbers<[1], [0], [0], [1], [0, 0, 1, 1], [], []>} : vector<16x8xf32>, vector<8x8xf32>, vector<16x8xf32> -> vector<16x8xf32>
    %c2_49 = arith.constant 2 : index
    %c0_50 = arith.constant 0 : index
    %c0_51 = arith.constant 0 : index
    %67 = vector.load %arg7[%c2_49, %c0_50, %c0_51] : memref<4x8x32xf32, #tpu.memory_space<vmem>>, vector<1x8x32xf32>
    %68 = vector.shape_cast %67 : vector<1x8x32xf32> to vector<8x32xf32>
    %cst_52 = arith.constant dense<0.000000e+00> : vector<16x32xf32>
    %69 = tpu.matmul %66, %68, %cst_52 {dimension_numbers = #tpu.dot_dimension_numbers<[1], [0], [0], [1], [0, 0, 1, 1], [], []>} : vector<16x8xf32>, vector<8x32xf32>, vector<16x32xf32> -> vector<16x32xf32>
    %70 = arith.addf %49, %69 : vector<16x32xf32>
    %71 = vector.extract_strided_slice %6 {offsets = [0, 24], sizes = [16, 8], strides = [1, 1]} : vector<16x32xf32> to vector<16x8xf32>
    %c0_53 = arith.constant 0 : index
    %c3 = arith.constant 3 : index
    %c0_54 = arith.constant 0 : index
    %c0_55 = arith.constant 0 : index
    %72 = vector.load %arg3[%c0_53, %c3, %c0_54, %c0_55] : memref<1x4x8x8xf32, #tpu.memory_space<vmem>>, vector<1x1x8x8xf32>
    %73 = vector.shape_cast %72 : vector<1x1x8x8xf32> to vector<8x8xf32>
    %c0_56 = arith.constant 0 : index
    %c3_57 = arith.constant 3 : index
    %c0_58 = arith.constant 0 : index
    %c0_59 = arith.constant 0 : index
    %74 = vector.load %arg4[%c0_56, %c3_57, %c0_58, %c0_59] : memref<1x4x8x8xf32, #tpu.memory_space<vmem>>, vector<1x1x8x8xf32>
    %75 = vector.shape_cast %74 : vector<1x1x8x8xf32> to vector<8x8xf32>
    %cst_60 = arith.constant dense<0.000000e+00> : vector<16x8xf32>
    %76 = tpu.matmul %71, %73, %cst_60 {dimension_numbers = #tpu.dot_dimension_numbers<[1], [0], [0], [1], [0, 0, 1, 1], [], []>} : vector<16x8xf32>, vector<8x8xf32>, vector<16x8xf32> -> vector<16x8xf32>
    %cst_61 = arith.constant dense<0xFF800000> : vector<16xf32>
    %77 = vector.multi_reduction <maximumf>, %76, %cst_61 [1] : vector<16x8xf32> to vector<16xf32>
    %78 = vector.shape_cast %77 : vector<16xf32> to vector<16x1xf32>
    %79 = vector.broadcast %78 : vector<16x1xf32> to vector<16x8xf32>
    %80 = arith.subf %76, %79 : vector<16x8xf32>
    %81 = math.exp %80 : vector<16x8xf32>
    %cst_62 = arith.constant dense<0.000000e+00> : vector<16xf32>
    %82 = vector.multi_reduction <add>, %81, %cst_62 [1] : vector<16x8xf32> to vector<16xf32>
    %83 = vector.shape_cast %82 : vector<16xf32> to vector<16x1xf32>
    %84 = tpu.reciprocal %83 {approx = true} : vector<16x1xf32> -> vector<16x1xf32>
    %85 = vector.broadcast %84 : vector<16x1xf32> to vector<16x8xf32>
    %86 = arith.mulf %81, %85 : vector<16x8xf32>
    %cst_63 = arith.constant dense<0.000000e+00> : vector<16x8xf32>
    %87 = tpu.matmul %86, %75, %cst_63 {dimension_numbers = #tpu.dot_dimension_numbers<[1], [0], [0], [1], [0, 0, 1, 1], [], []>} : vector<16x8xf32>, vector<8x8xf32>, vector<16x8xf32> -> vector<16x8xf32>
    %c3_64 = arith.constant 3 : index
    %c0_65 = arith.constant 0 : index
    %c0_66 = arith.constant 0 : index
    %88 = vector.load %arg7[%c3_64, %c0_65, %c0_66] : memref<4x8x32xf32, #tpu.memory_space<vmem>>, vector<1x8x32xf32>
    %89 = vector.shape_cast %88 : vector<1x8x32xf32> to vector<8x32xf32>
    %cst_67 = arith.constant dense<0.000000e+00> : vector<16x32xf32>
    %90 = tpu.matmul %87, %89, %cst_67 {dimension_numbers = #tpu.dot_dimension_numbers<[1], [0], [0], [1], [0, 0, 1, 1], [], []>} : vector<16x8xf32>, vector<8x32xf32>, vector<16x32xf32> -> vector<16x32xf32>
    %91 = arith.addf %70, %90 : vector<16x32xf32>
    %c0_68 = arith.constant 0 : index
    %c0_69 = arith.constant 0 : index
    %92 = vector.load %arg8[%c0_68, %c0_69] : memref<1x32xf32, #tpu.memory_space<vmem>>, vector<1x32xf32>
    %93 = vector.broadcast %92 : vector<1x32xf32> to vector<16x32xf32>
    %94 = arith.addf %91, %93 : vector<16x32xf32>
    %c0_70 = arith.constant 0 : index
    %c0_71 = arith.constant 0 : index
    %c0_72 = arith.constant 0 : index
    %95 = vector.load %arg9[%c0_70, %c0_71, %c0_72] : memref<1x16x32xf32, #tpu.memory_space<vmem>>, vector<1x16x32xf32>
    %96 = vector.shape_cast %95 : vector<1x16x32xf32> to vector<16x32xf32>
    %97 = vector.shape_cast %94 : vector<16x32xf32> to vector<1x16x32xf32>
    tpu.vector_store %arg9[%c0_70, %c0_71, %c0_72], %97 {strides = array<i32>} : memref<1x16x32xf32, #tpu.memory_space<vmem>>, vector<1x16x32xf32>,
    return
  }
  func.func @transform_0(%arg0: i32, %arg1: i32) -> (i32, i32, i32) {
    %c0_i32 = arith.constant 0 : i32
    %c0_i32_0 = arith.constant 0 : i32
    return %arg0, %arg1, %c0_i32 : i32, i32, i32
  }
  func.func @transform_1(%arg0: i32, %arg1: i32) -> (i32, i32, i32, i32) {
    %c0_i32 = arith.constant 0 : i32
    %c0_i32_0 = arith.constant 0 : i32
    %c0_i32_1 = arith.constant 0 : i32
    %c0_i32_2 = arith.constant 0 : i32
    return %arg0, %c0_i32, %c0_i32_0, %c0_i32_1 : i32, i32, i32, i32
  }
  func.func @transform_2(%arg0: i32, %arg1: i32) -> (i32, i32, i32, i32) {
    %c0_i32 = arith.constant 0 : i32
    %c0_i32_0 = arith.constant 0 : i32
    %c0_i32_1 = arith.constant 0 : i32
    %c0_i32_2 = arith.constant 0 : i32
    return %arg0, %c0_i32, %c0_i32_0, %c0_i32_1 : i32, i32, i32, i32
  }
  func.func @transform_3(%arg0: i32, %arg1: i32) -> (i32, i32) {
    %c0_i32 = arith.constant 0 : i32
    %c0_i32_0 = arith.constant 0 : i32
    %c0_i32_1 = arith.constant 0 : i32
    return %c0_i32, %c0_i32_0 : i32, i32
  }
  func.func @transform_4(%arg0: i32, %arg1: i32) -> (i32, i32) {
    %c0_i32 = arith.constant 0 : i32
    %c0_i32_0 = arith.constant 0 : i32
    %c0_i32_1 = arith.constant 0 : i32
    return %c0_i32, %c0_i32_0 : i32, i32
  }
  func.func @transform_5(%arg0: i32, %arg1: i32) -> (i32, i32, i32) {
    %c0_i32 = arith.constant 0 : i32
    %c0_i32_0 = arith.constant 0 : i32
    %c0_i32_1 = arith.constant 0 : i32
    %c0_i32_2 = arith.constant 0 : i32
    return %c0_i32, %c0_i32_0, %c0_i32_1 : i32, i32, i32
  }
  func.func @transform_6(%arg0: i32, %arg1: i32) -> (i32, i32) {
    %c0_i32 = arith.constant 0 : i32
    %c0_i32_0 = arith.constant 0 : i32
    %c0_i32_1 = arith.constant 0 : i32
    return %c0_i32, %c0_i32_0 : i32, i32
  }
  func.func @transform_7(%arg0: i32, %arg1: i32) -> (i32, i32, i32) {
    %c0_i32 = arith.constant 0 : i32
    %c0_i32_0 = arith.constant 0 : i32
    return %arg0, %arg1, %c0_i32 : i32, i32, i32
  }
}

module attributes {stable_mosaic.version = 11 : i64} {
  func.func @cross_attention_kernel(%arg0: i32, %arg1: i32, %arg2: memref<1x16x32xf32, #tpu.memory_space<vmem>>, %arg3: memref<1x4x8x8xf32, #tpu.memory_space<vmem>>, %arg4: memref<1x4x8x8xf32, #tpu.memory_space<vmem>>, %arg5: memref<32x32xf32, #tpu.memory_space<vmem>>, %arg6: memref<1x32xf32, #tpu.memory_space<vmem>>, %arg7: memref<4x8x32xf32, #tpu.memory_space<vmem>>, %arg8: memref<1x32xf32, #tpu.memory_space<vmem>>, %arg9: memref<1x16x32xf32, #tpu.memory_space<vmem>>) attributes {dimension_semantics = [#tpu.dimension_semantics<parallel>, #tpu.dimension_semantics<parallel>], iteration_bounds = array<i64: 2, 1>, scalar_prefetch = 0 : i64, scratch_operands = 0 : i64, tpu.core_type = #tpu.core_type<tc>, window_params = [{transform_indices = @transform_0, window_bounds = array<i64: 1, 16, 32>}, {transform_indices = @transform_1, window_bounds = array<i64: 1, 4, 8, 8>}, {transform_indices = @transform_2, window_bounds = array<i64: 1, 4, 8, 8>}, {pipeline_mode = #tpu.pipeline_mode<synchronous>, transform_indices = @transform_3, window_bounds = array<i64: 32, 32>}, {pipeline_mode = #tpu.pipeline_mode<synchronous>, transform_indices = @transform_4, window_bounds = array<i64: 1, 32>}, {pipeline_mode = #tpu.pipeline_mode<synchronous>, transform_indices = @transform_5, window_bounds = array<i64: 4, 8, 32>}, {pipeline_mode = #tpu.pipeline_mode<synchronous>, transform_indices = @transform_6, window_bounds = array<i64: 1, 32>}, {transform_indices = @transform_7, window_bounds = array<i64: 1, 16, 32>}]} {
    %c0 = arith.constant 0 : index
    %c0_0 = arith.constant 0 : index
    %c0_1 = arith.constant 0 : index
    %0 = vector.load %arg2[%c0, %c0_0, %c0_1] : memref<1x16x32xf32, #tpu.memory_space<vmem>>, vector<1x16x32xf32>
    %1 = vector.shape_cast %0 : vector<1x16x32xf32> to vector<16x32xf32>
    %c0_2 = arith.constant 0 : index
    %c0_3 = arith.constant 0 : index
    %2 = vector.load %arg5[%c0_2, %c0_3] : memref<32x32xf32, #tpu.memory_space<vmem>>, vector<32x32xf32>
    %cst = arith.constant dense<0.000000e+00> : vector<16x32xf32>
    %3 = tpu.matmul %1, %2, %cst {dimension_numbers = #tpu.dot_dimension_numbers<[1], [0], [0], [1], [0, 0, 1, 1], [], []>} : vector<16x32xf32>, vector<32x32xf32>, vector<16x32xf32> -> vector<16x32xf32>
    %c0_4 = arith.constant 0 : index
    %c0_5 = arith.constant 0 : index
    %4 = vector.load %arg6[%c0_4, %c0_5] : memref<1x32xf32, #tpu.memory_space<vmem>>, vector<1x32xf32>
    %5 = vector.broadcast %4 : vector<1x32xf32> to vector<16x32xf32>
    %6 = arith.addf %3, %5 : vector<16x32xf32>
    %cst_6 = arith.constant 0.000000e+00 : f32
    %7 = vector.broadcast %cst_6 : f32 to vector<16x32xf32>
    %8 = vector.extract_strided_slice %6 {offsets = [0, 0], sizes = [16, 8], strides = [1, 1]} : vector<16x32xf32> to vector<16x8xf32>
    %c0_7 = arith.constant 0 : index
    %c0_8 = arith.constant 0 : index
    %c0_9 = arith.constant 0 : index
    %c0_10 = arith.constant 0 : index
    %9 = vector.load %arg3[%c0_7, %c0_8, %c0_9, %c0_10] : memref<1x4x8x8xf32, #tpu.memory_space<vmem>>, vector<1x1x8x8xf32>
    %10 = vector.shape_cast %9 : vector<1x1x8x8xf32> to vector<8x8xf32>
    %c0_11 = arith.constant 0 : index
    %c0_12 = arith.constant 0 : index
    %c0_13 = arith.constant 0 : index
    %c0_14 = arith.constant 0 : index
    %11 = vector.load %arg4[%c0_11, %c0_12, %c0_13, %c0_14] : memref<1x4x8x8xf32, #tpu.memory_space<vmem>>, vector<1x1x8x8xf32>
    %12 = vector.shape_cast %11 : vector<1x1x8x8xf32> to vector<8x8xf32>
    %cst_15 = arith.constant dense<0.000000e+00> : vector<16x8xf32>
    %13 = tpu.matmul %8, %10, %cst_15 {dimension_numbers = #tpu.dot_dimension_numbers<[1], [0], [0], [1], [0, 0, 1, 1], [], []>} : vector<16x8xf32>, vector<8x8xf32>, vector<16x8xf32> -> vector<16x8xf32>
    %cst_16 = arith.constant dense<0xFF800000> : vector<16xf32>
    %14 = vector.multi_reduction <maximumf>, %13, %cst_16 [1] : vector<16x8xf32> to vector<16xf32>
    %15 = vector.shape_cast %14 : vector<16xf32> to vector<16x1xf32>
    %16 = vector.broadcast %15 : vector<16x1xf32> to vector<16x8xf32>
    %17 = arith.subf %13, %16 : vector<16x8xf32>
    %18 = math.exp %17 : vector<16x8xf32>
    %cst_17 = arith.constant dense<0.000000e+00> : vector<16xf32>
    %19 = vector.multi_reduction <add>, %18, %cst_17 [1] : vector<16x8xf32> to vector<16xf32>
    %20 = vector.shape_cast %19 : vector<16xf32> to vector<16x1xf32>
    %21 = tpu.reciprocal %20 {approx = true} : vector<16x1xf32> -> vector<16x1xf32>
    %22 = vector.broadcast %21 : vector<16x1xf32> to vector<16x8xf32>
    %23 = arith.mulf %18, %22 : vector<16x8xf32>
    %cst_18 = arith.constant dense<0.000000e+00> : vector<16x8xf32>
    %24 = tpu.matmul %23, %12, %cst_18 {dimension_numbers = #tpu.dot_dimension_numbers<[1], [0], [0], [1], [0, 0, 1, 1], [], []>} : vector<16x8xf32>, vector<8x8xf32>, vector<16x8xf32> -> vector<16x8xf32>
    %c0_19 = arith.constant 0 : index
    %c0_20 = arith.constant 0 : index
    %c0_21 = arith.constant 0 : index
    %25 = vector.load %arg7[%c0_19, %c0_20, %c0_21] : memref<4x8x32xf32, #tpu.memory_space<vmem>>, vector<1x8x32xf32>
    %26 = vector.shape_cast %25 : vector<1x8x32xf32> to vector<8x32xf32>
    %cst_22 = arith.constant dense<0.000000e+00> : vector<16x32xf32>
    %27 = tpu.matmul %24, %26, %cst_22 {dimension_numbers = #tpu.dot_dimension_numbers<[1], [0], [0], [1], [0, 0, 1, 1], [], []>} : vector<16x8xf32>, vector<8x32xf32>, vector<16x32xf32> -> vector<16x32xf32>
    %28 = arith.addf %7, %27 : vector<16x32xf32>
    %29 = vector.extract_strided_slice %6 {offsets = [0, 8], sizes = [16, 8], strides = [1, 1]} : vector<16x32xf32> to vector<16x8xf32>
    %c0_23 = arith.constant 0 : index
    %c1 = arith.constant 1 : index
    %c0_24 = arith.constant 0 : index
    %c0_25 = arith.constant 0 : index
    %30 = vector.load %arg3[%c0_23, %c1, %c0_24, %c0_25] : memref<1x4x8x8xf32, #tpu.memory_space<vmem>>, vector<1x1x8x8xf32>
    %31 = vector.shape_cast %30 : vector<1x1x8x8xf32> to vector<8x8xf32>
    %c0_26 = arith.constant 0 : index
    %c1_27 = arith.constant 1 : index
    %c0_28 = arith.constant 0 : index
    %c0_29 = arith.constant 0 : index
    %32 = vector.load %arg4[%c0_26, %c1_27, %c0_28, %c0_29] : memref<1x4x8x8xf32, #tpu.memory_space<vmem>>, vector<1x1x8x8xf32>
    %33 = vector.shape_cast %32 : vector<1x1x8x8xf32> to vector<8x8xf32>
    %cst_30 = arith.constant dense<0.000000e+00> : vector<16x8xf32>
    %34 = tpu.matmul %29, %31, %cst_30 {dimension_numbers = #tpu.dot_dimension_numbers<[1], [0], [0], [1], [0, 0, 1, 1], [], []>} : vector<16x8xf32>, vector<8x8xf32>, vector<16x8xf32> -> vector<16x8xf32>
    %cst_31 = arith.constant dense<0xFF800000> : vector<16xf32>
    %35 = vector.multi_reduction <maximumf>, %34, %cst_31 [1] : vector<16x8xf32> to vector<16xf32>
    %36 = vector.shape_cast %35 : vector<16xf32> to vector<16x1xf32>
    %37 = vector.broadcast %36 : vector<16x1xf32> to vector<16x8xf32>
    %38 = arith.subf %34, %37 : vector<16x8xf32>
    %39 = math.exp %38 : vector<16x8xf32>
    %cst_32 = arith.constant dense<0.000000e+00> : vector<16xf32>
    %40 = vector.multi_reduction <add>, %39, %cst_32 [1] : vector<16x8xf32> to vector<16xf32>
    %41 = vector.shape_cast %40 : vector<16xf32> to vector<16x1xf32>
    %42 = tpu.reciprocal %41 {approx = true} : vector<16x1xf32> -> vector<16x1xf32>
    %43 = vector.broadcast %42 : vector<16x1xf32> to vector<16x8xf32>
    %44 = arith.mulf %39, %43 : vector<16x8xf32>
    %cst_33 = arith.constant dense<0.000000e+00> : vector<16x8xf32>
    %45 = tpu.matmul %44, %33, %cst_33 {dimension_numbers = #tpu.dot_dimension_numbers<[1], [0], [0], [1], [0, 0, 1, 1], [], []>} : vector<16x8xf32>, vector<8x8xf32>, vector<16x8xf32> -> vector<16x8xf32>
    %c1_34 = arith.constant 1 : index
    %c0_35 = arith.constant 0 : index
    %c0_36 = arith.constant 0 : index
    %46 = vector.load %arg7[%c1_34, %c0_35, %c0_36] : memref<4x8x32xf32, #tpu.memory_space<vmem>>, vector<1x8x32xf32>
    %47 = vector.shape_cast %46 : vector<1x8x32xf32> to vector<8x32xf32>
    %cst_37 = arith.constant dense<0.000000e+00> : vector<16x32xf32>
    %48 = tpu.matmul %45, %47, %cst_37 {dimension_numbers = #tpu.dot_dimension_numbers<[1], [0], [0], [1], [0, 0, 1, 1], [], []>} : vector<16x8xf32>, vector<8x32xf32>, vector<16x32xf32> -> vector<16x32xf32>
    %49 = arith.addf %28, %48 : vector<16x32xf32>
    %50 = vector.extract_strided_slice %6 {offsets = [0, 16], sizes = [16, 8], strides = [1, 1]} : vector<16x32xf32> to vector<16x8xf32>
    %c0_38 = arith.constant 0 : index
    %c2 = arith.constant 2 : index
    %c0_39 = arith.constant 0 : index
    %c0_40 = arith.constant 0 : index
    %51 = vector.load %arg3[%c0_38, %c2, %c0_39, %c0_40] : memref<1x4x8x8xf32, #tpu.memory_space<vmem>>, vector<1x1x8x8xf32>
    %52 = vector.shape_cast %51 : vector<1x1x8x8xf32> to vector<8x8xf32>
    %c0_41 = arith.constant 0 : index
    %c2_42 = arith.constant 2 : index
    %c0_43 = arith.constant 0 : index
    %c0_44 = arith.constant 0 : index
    %53 = vector.load %arg4[%c0_41, %c2_42, %c0_43, %c0_44] : memref<1x4x8x8xf32, #tpu.memory_space<vmem>>, vector<1x1x8x8xf32>
    %54 = vector.shape_cast %53 : vector<1x1x8x8xf32> to vector<8x8xf32>
    %cst_45 = arith.constant dense<0.000000e+00> : vector<16x8xf32>
    %55 = tpu.matmul %50, %52, %cst_45 {dimension_numbers = #tpu.dot_dimension_numbers<[1], [0], [0], [1], [0, 0, 1, 1], [], []>} : vector<16x8xf32>, vector<8x8xf32>, vector<16x8xf32> -> vector<16x8xf32>
    %cst_46 = arith.constant dense<0xFF800000> : vector<16xf32>
    %56 = vector.multi_reduction <maximumf>, %55, %cst_46 [1] : vector<16x8xf32> to vector<16xf32>
    %57 = vector.shape_cast %56 : vector<16xf32> to vector<16x1xf32>
    %58 = vector.broadcast %57 : vector<16x1xf32> to vector<16x8xf32>
    %59 = arith.subf %55, %58 : vector<16x8xf32>
    %60 = math.exp %59 : vector<16x8xf32>
    %cst_47 = arith.constant dense<0.000000e+00> : vector<16xf32>
    %61 = vector.multi_reduction <add>, %60, %cst_47 [1] : vector<16x8xf32> to vector<16xf32>
    %62 = vector.shape_cast %61 : vector<16xf32> to vector<16x1xf32>
    %63 = tpu.reciprocal %62 {approx = true} : vector<16x1xf32> -> vector<16x1xf32>
    %64 = vector.broadcast %63 : vector<16x1xf32> to vector<16x8xf32>
    %65 = arith.mulf %60, %64 : vector<16x8xf32>
    %cst_48 = arith.constant dense<0.000000e+00> : vector<16x8xf32>
    %66 = tpu.matmul %65, %54, %cst_48 {dimension_numbers = #tpu.dot_dimension_numbers<[1], [0], [0], [1], [0, 0, 1, 1], [], []>} : vector<16x8xf32>, vector<8x8xf32>, vector<16x8xf32> -> vector<16x8xf32>
    %c2_49 = arith.constant 2 : index
    %c0_50 = arith.constant 0 : index
    %c0_51 = arith.constant 0 : index
    %67 = vector.load %arg7[%c2_49, %c0_50, %c0_51] : memref<4x8x32xf32, #tpu.memory_space<vmem>>, vector<1x8x32xf32>
    %68 = vector.shape_cast %67 : vector<1x8x32xf32> to vector<8x32xf32>
    %cst_52 = arith.constant dense<0.000000e+00> : vector<16x32xf32>
    %69 = tpu.matmul %66, %68, %cst_52 {dimension_numbers = #tpu.dot_dimension_numbers<[1], [0], [0], [1], [0, 0, 1, 1], [], []>} : vector<16x8xf32>, vector<8x32xf32>, vector<16x32xf32> -> vector<16x32xf32>
    %70 = arith.addf %49, %69 : vector<16x32xf32>
    %71 = vector.extract_strided_slice %6 {offsets = [0, 24], sizes = [16, 8], strides = [1, 1]} : vector<16x32xf32> to vector<16x8xf32>
    %c0_53 = arith.constant 0 : index
    %c3 = arith.constant 3 : index
    %c0_54 = arith.constant 0 : index
    %c0_55 = arith.constant 0 : index
    %72 = vector.load %arg3[%c0_53, %c3, %c0_54, %c0_55] : memref<1x4x8x8xf32, #tpu.memory_space<vmem>>, vector<1x1x8x8xf32>
    %73 = vector.shape_cast %72 : vector<1x1x8x8xf32> to vector<8x8xf32>
    %c0_56 = arith.constant 0 : index
    %c3_57 = arith.constant 3 : index
    %c0_58 = arith.constant 0 : index
    %c0_59 = arith.constant 0 : index
    %74 = vector.load %arg4[%c0_56, %c3_57, %c0_58, %c0_59] : memref<1x4x8x8xf32, #tpu.memory_space<vmem>>, vector<1x1x8x8xf32>
    %75 = vector.shape_cast %74 : vector<1x1x8x8xf32> to vector<8x8xf32>
    %cst_60 = arith.constant dense<0.000000e+00> : vector<16x8xf32>
    %76 = tpu.matmul %71, %73, %cst_60 {dimension_numbers = #tpu.dot_dimension_numbers<[1], [0], [0], [1], [0, 0, 1, 1], [], []>} : vector<16x8xf32>, vector<8x8xf32>, vector<16x8xf32> -> vector<16x8xf32>
    %cst_61 = arith.constant dense<0xFF800000> : vector<16xf32>
    %77 = vector.multi_reduction <maximumf>, %76, %cst_61 [1] : vector<16x8xf32> to vector<16xf32>
    %78 = vector.shape_cast %77 : vector<16xf32> to vector<16x1xf32>
    %79 = vector.broadcast %78 : vector<16x1xf32> to vector<16x8xf32>
    %80 = arith.subf %76, %79 : vector<16x8xf32>
    %81 = math.exp %80 : vector<16x8xf32>
    %cst_62 = arith.constant dense<0.000000e+00> : vector<16xf32>
    %82 = vector.multi_reduction <add>, %81, %cst_62 [1] : vector<16x8xf32> to vector<16xf32>
    %83 = vector.shape_cast %82 : vector<16xf32> to vector<16x1xf32>
    %84 = tpu.reciprocal %83 {approx = true} : vector<16x1xf32> -> vector<16x1xf32>
    %85 = vector.broadcast %84 : vector<16x1xf32> to vector<16x8xf32>
    %86 = arith.mulf %81, %85 : vector<16x8xf32>
    %cst_63 = arith.constant dense<0.000000e+00> : vector<16x8xf32>
    %87 = tpu.matmul %86, %75, %cst_63 {dimension_numbers = #tpu.dot_dimension_numbers<[1], [0], [0], [1], [0, 0, 1, 1], [], []>} : vector<16x8xf32>, vector<8x8xf32>, vector<16x8xf32> -> vector<16x8xf32>
    %c3_64 = arith.constant 3 : index
    %c0_65 = arith.constant 0 : index
    %c0_66 = arith.constant 0 : index
    %88 = vector.load %arg7[%c3_64, %c0_65, %c0_66] : memref<4x8x32xf32, #tpu.memory_space<vmem>>, vector<1x8x32xf32>
    %89 = vector.shape_cast %88 : vector<1x8x32xf32> to vector<8x32xf32>
    %cst_67 = arith.constant dense<0.000000e+00> : vector<16x32xf32>
    %90 = tpu.matmul %87, %89, %cst_67 {dimension_numbers = #tpu.dot_dimension_numbers<[1], [0], [0], [1], [0, 0, 1, 1], [], []>} : vector<16x8xf32>, vector<8x32xf32>, vector<16x32xf32> -> vector<16x32xf32>
    %91 = arith.addf %70, %90 : vector<16x32xf32>
    %c0_68 = arith.constant 0 : index
    %c0_69 = arith.constant 0 : index
    %92 = vector.load %arg8[%c0_68, %c0_69] : memref<1x32xf32, #tpu.memory_space<vmem>>, vector<1x32xf32>
    %93 = vector.broadcast %92 : vector<1x32xf32> to vector<16x32xf32>
    %94 = arith.addf %91, %93 : vector<16x32xf32>
    %c0_70 = arith.constant 0 : index
    %c0_71 = arith.constant 0 : index
    %c0_72 = arith.constant 0 : index
    %95 = vector.load %arg9[%c0_70, %c0_71, %c0_72] : memref<1x16x32xf32, #tpu.memory_space<vmem>>, vector<1x16x32xf32>
    %96 = vector.shape_cast %95 : vector<1x16x32xf32> to vector<16x32xf32>
    %97 = vector.shape_cast %94 : vector<16x32xf32> to vector<1x16x32xf32>
    tpu.vector_store %arg9[%c0_70, %c0_71, %c0_72], %97 {strides = array<i32>} : memref<1x16x32xf32, #tpu.memory_space<vmem>>, vector<1x16x32xf32>,
    return
  }
  func.func @transform_0(%arg0: i32, %arg1: i32) -> (i32, i32, i32) {
    %c0_i32 = arith.constant 0 : i32
    %c0_i32_0 = arith.constant 0 : i32
    return %arg0, %arg1, %c0_i32 : i32, i32, i32
  }
  func.func @transform_1(%arg0: i32, %arg1: i32) -> (i32, i32, i32, i32) {
    %c0_i32 = arith.constant 0 : i32
    %c0_i32_0 = arith.constant 0 : i32
    %c0_i32_1 = arith.constant 0 : i32
    %c0_i32_2 = arith.constant 0 : i32
    return %arg0, %c0_i32, %c0_i32_0, %c0_i32_1 : i32, i32, i32, i32
  }
  func.func @transform_2(%arg0: i32, %arg1: i32) -> (i32, i32, i32, i32) {
    %c0_i32 = arith.constant 0 : i32
    %c0_i32_0 = arith.constant 0 : i32
    %c0_i32_1 = arith.constant 0 : i32
    %c0_i32_2 = arith.constant 0 : i32
    return %arg0, %c0_i32, %c0_i32_0, %c0_i32_1 : i32, i32, i32, i32
  }
  func.func @transform_3(%arg0: i32, %arg1: i32) -> (i32, i32) {
    %c0_i32 = arith.constant 0 : i32
    %c0_i32_0 = arith.constant 0 : i32
    %c0_i32_1 = arith.constant 0 : i32
    return %c0_i32, %c0_i32_0 : i32, i32
  }
  func.func @transform_4(%arg0: i32, %arg1: i32) -> (i32, i32) {
    %c0_i32 = arith.constant 0 : i32
    %c0_i32_0 = arith.constant 0 : i32
    %c0_i32_1 = arith.constant 0 : i32
    return %c0_i32, %c0_i32_0 : i32, i32
  }
  func.func @transform_5(%arg0: i32, %arg1: i32) -> (i32, i32, i32) {
    %c0_i32 = arith.constant 0 : i32
    %c0_i32_0 = arith.constant 0 : i32
    %c0_i32_1 = arith.constant 0 : i32
    %c0_i32_2 = arith.constant 0 : i32
    return %c0_i32, %c0_i32_0, %c0_i32_1 : i32, i32, i32
  }
  func.func @transform_6(%arg0: i32, %arg1: i32) -> (i32, i32) {
    %c0_i32 = arith.constant 0 : i32
    %c0_i32_0 = arith.constant 0 : i32
    %c0_i32_1 = arith.constant 0 : i32
    return %c0_i32, %c0_i32_0 : i32, i32
  }
  func.func @transform_7(%arg0: i32, %arg1: i32) -> (i32, i32, i32) {
    %c0_i32 = arith.constant 0 : i32
    %c0_i32_0 = arith.constant 0 : i32
    return %arg0, %arg1, %c0_i32 : i32, i32, i32
  }
}

</mosaic_0001>

<llo_original>
// kernel: tpu_custom_call.1
$region0: #{tpu_custom_call.1}
  #allocation0 [shape = 'u32[]', space=smem, size = 0x4, offset = 0x4, fixed_abs, tag = 'smem constant byte address 0x4 - core index']
  #allocation1 [shape = 'u32[144,128]{1,0:T(1,128)}', space=vmem, size = 0x12000, scoped, tag = 'internal scratch']
  %s0 = inlined_call_operand.hbm [shape: f32[2,16,32], index: 0, kind: input, shape index: {}]
  %s1 = inlined_call_operand.hbm [shape: f32[2,4,8,8], index: 1, kind: input, shape index: {}]
  %s2 = inlined_call_operand.hbm [shape: f32[2,4,8,8], index: 2, kind: input, shape index: {}]
  %s3 = inlined_call_operand.hbm [shape: f32[32,32], index: 3, kind: input, shape index: {}]
  %s4 = inlined_call_operand.vmem [shape: f32[1,32], index: 4, kind: input, shape index: {}]
  %s5 = inlined_call_operand.hbm [shape: f32[4,8,32], index: 5, kind: input, shape index: {}]
  %s6 = inlined_call_operand.vmem [shape: f32[1,32], index: 6, kind: input, shape index: {}]
  %s7 = inlined_call_operand.hbm [shape: f32[2,16,32], index: 7, kind: output, shape index: {}]
  %s8 = sld [smem:[#allocation0]]
  $region81: #{tpu_custom_call.1} parent=0
    _
  %s10 = ssub.s32 1, %s8
  %s11 = scalar_select 0, %s10, %s8
  $region1: #{tpu_custom_call.1} parent=0
    #allocation2 [shape = 'u8[16384]{0}', space=vmem, size = 0x4000, scoped, tag = 'input window, operand 0']
    #allocation3 [shape = 's32[2]{0}', space=sflag, size = 0x8, scoped, tag = 'scoped memory for tpu_custom_call.1']
    #allocation4 [shape = 's32[2]{0}', space=sflag, size = 0x8, scoped, tag = 'scoped memory for tpu_custom_call.1']
    #allocation5 [shape = 'u8[32768]{0}', space=vmem, size = 0x8000, scoped, tag = 'input window, operand 1']
    #allocation6 [shape = 's32[2]{0}', space=sflag, size = 0x8, scoped, tag = 'scoped memory for tpu_custom_call.1']
    #allocation7 [shape = 'u8[32768]{0}', space=vmem, size = 0x8000, scoped, tag = 'input window, operand 2']
    #allocation8 [shape = 'u8[16384]{0}', space=vmem, size = 0x4000, scoped, tag = 'input window, operand 3, single buffered']
    #allocation9 [shape = 's32[1]{0}', space=sflag, size = 0x4, scoped, tag = 'scoped memory for tpu_custom_call.1']
    #allocation10 [shape = 'u8[16384]{0}', space=vmem, size = 0x4000, scoped, tag = 'input window, operand 5, single buffered']
    #allocation11 [shape = 'u8[16384]{0}', space=vmem, size = 0x4000, scoped, tag = 'output window, operand 0']
    %12 = vsyncpa [#allocation3], 0
    %s13 = scalar_lea.sflag [#allocation3], 1
    %14 = vsyncpa %s13, 0
    %15 = vsyncpa [#allocation6], 0
    %s16 = scalar_lea.sflag [#allocation6], 1
    %17 = vsyncpa %s16, 0
    %18 = vsyncpa [#allocation9], 0
    %19 = vsyncpa [#allocation4], 0
    %s20 = scalar_lea.sflag [#allocation4], 1
    %21 = vsyncpa %s20, 0
    loop: start=0, step=1, limit=4
    $region2: #{tpu_custom_call.1} parent=1 // loop_pre_header
      _
    $region3: #{tpu_custom_call.1} parent=1 // loop_header
      %s23 = sphi 0, %s27
      %p24 = scmp.ge.s32.totalorder %s23, 4
      %s30 = sphi 0, %s42
      %s31 = sphi 0, %s38
      %s32 = sphi 0, %s30
      %s33 = sphi 0, %s31
      %s34 = sphi 0, %s32
      %s35 = sphi 0, %s33
      %s47 = sphi 0, %s49
      %s50 = sphi 0, %s47
      %s51 = sphi 0, %s50
      %s67 = sphi 0, %s51
      %s73 = sphi 0, %s75
      %s76 = sphi 0, %s73
      %s77 = sphi 0, %s76
      %s93 = sphi 0, %s77
      %s99 = sphi 0, %s101
      %s102 = sphi 0, %s99
      %s103 = sphi 0, %s102
      %s119 = sphi 0, %s103
      %s123 = sphi 0, %s123
      %s125 = sphi 0, %s123
      %s126 = sphi 0, %s125
      %s140 = sphi 0, %s126
      %s144 = sphi 0, %s144
      %s146 = sphi 0, %s144
      %s147 = sphi 0, %s146
      %s161 = sphi 0, %s147
      %s165 = sphi 0, %s165
      %s167 = sphi 0, %s165
      %s168 = sphi 0, %s167
      %s182 = sphi 0, %s168
      %s186 = sphi 0, %s186
      %s188 = sphi 0, %s186
      %s189 = sphi 0, %s188
      %s203 = sphi 0, %s189
      %s211 = sphi 0, %s213
      %s214 = sphi 0, %s211
      %s215 = sphi 0, %s214
      %s231 = sphi 0, %s215
    $region4: #{tpu_custom_call.1} parent=1 // loop_header_branch
      %26 = sbr.rel (%p24) target = $region8
    $region5: #{tpu_custom_call.1} parent=1 // loop_body
      %s28 = ssub.s32 %s23, 1
      %s29 = ssub.s32 %s23, 2
      %s36 = sadd.s32 1, %s31
      %p37 = scmp.ge.s32.totalorder %s36, 1
      %s38 = scalar_select %p37, 0, %s36
      %s39 = sadd.s32 1, %s30
      %s40 = scalar_select %p37, %s39, %s30
      %p41 = scmp.ge.s32.totalorder %s40, 2
      %s42 = scalar_select %p41, 0, %s40
      %s43 = ssub.s32 %s30, %s42
      %s44 = ssub.s32 %s31, %s38
      %s45 = sor.u32 %s43, %s44
      %p46 = scmp.eq.s32.totalorder %s45, 0
      %s48 = sadd.s32 %s47, 1
      %s49 = scalar_select %p46, %s47, %s48
      %p52 = pneg %p46
      %p53 = scmp.eq.s32.totalorder %s23, 1
      %p54 = por %p52, %p53
      %p55 = scmp.ne.s32.totalorder %s47, %s50
      %p56 = scmp.eq.s32.totalorder %s23, 0
      %p57 = por %p55, %p56
      %p58 = scmp.ne.s32.totalorder %s47, %s50
      %p59 = scmp.eq.s32.totalorder %s28, 1
      %p60 = por %p58, %p59
      %p61 = scmp.ne.s32.totalorder %s50, %s51
      %p62 = scmp.eq.s32.totalorder %s28, 0
      %p63 = por %p61, %p62
      %p64 = scmp.ne.s32.totalorder %s50, %s51
      %p65 = scmp.eq.s32.totalorder %s29, 1
      %p66 = por %p64, %p65
      %p68 = scmp.ne.s32.totalorder %s51, %s67
      %p69 = scmp.eq.s32.totalorder %s29, 0
      %p70 = por %p68, %p69
      %s71 = ssub.s32 %s30, %s42
      %p72 = scmp.eq.s32.totalorder %s71, 0
      %s74 = sadd.s32 %s73, 1
      %s75 = scalar_select %p72, %s73, %s74
      %p78 = pneg %p72
      %p79 = scmp.eq.s32.totalorder %s23, 1
      %p80 = por %p78, %p79
      %p81 = scmp.ne.s32.totalorder %s73, %s76
      %p82 = scmp.eq.s32.totalorder %s23, 0
      %p83 = por %p81, %p82
      %p84 = scmp.ne.s32.totalorder %s73, %s76
      %p85 = scmp.eq.s32.totalorder %s28, 1
      %p86 = por %p84, %p85
      %p87 = scmp.ne.s32.totalorder %s76, %s77
      %p88 = scmp.eq.s32.totalorder %s28, 0
      %p89 = por %p87, %p88
      %p90 = scmp.ne.s32.totalorder %s76, %s77
      %p91 = scmp.eq.s32.totalorder %s29, 1
      %p92 = por %p90, %p91
      %p94 = scmp.ne.s32.totalorder %s77, %s93
      %p95 = scmp.eq.s32.totalorder %s29, 0
      %p96 = por %p94, %p95
      %s97 = ssub.s32 %s30, %s42
      %p98 = scmp.eq.s32.totalorder %s97, 0
      %s100 = sadd.s32 %s99, 1
      %s101 = scalar_select %p98, %s99, %s100
      %p104 = pneg %p98
      %p105 = scmp.eq.s32.totalorder %s23, 1
      %p106 = por %p104, %p105
      %p107 = scmp.ne.s32.totalorder %s99, %s102
      %p108 = scmp.eq.s32.totalorder %s23, 0
      %p109 = por %p107, %p108
      %p110 = scmp.ne.s32.totalorder %s99, %s102
      %p111 = scmp.eq.s32.totalorder %s28, 1
      %p112 = por %p110, %p111
      %p113 = scmp.ne.s32.totalorder %s102, %s103
      %p114 = scmp.eq.s32.totalorder %s28, 0
      %p115 = por %p113, %p114
      %p116 = scmp.ne.s32.totalorder %s102, %s103
      %p117 = scmp.eq.s32.totalorder %s29, 1
      %p118 = por %p116, %p117
      %p120 = scmp.ne.s32.totalorder %s103, %s119
      %p121 = scmp.eq.s32.totalorder %s29, 0
      %p122 = por %p120, %p121
      %s124 = sadd.s32 %s123, 1
      %p127 = scmp.eq.s32.totalorder %s23, 1
      %p128 = scmp.ne.s32.totalorder %s123, %s125
      %p129 = scmp.eq.s32.totalorder %s23, 0
      %p130 = por %p128, %p129
      %p131 = scmp.ne.s32.totalorder %s123, %s125
      %p132 = scmp.eq.s32.totalorder %s28, 1
      %p133 = por %p131, %p132
      %p134 = scmp.ne.s32.totalorder %s125, %s126
      %p135 = scmp.eq.s32.totalorder %s28, 0
      %p136 = por %p134, %p135
      %p137 = scmp.ne.s32.totalorder %s125, %s126
      %p138 = scmp.eq.s32.totalorder %s29, 1
      %p139 = por %p137, %p138
      %p141 = scmp.ne.s32.totalorder %s126, %s140
      %p142 = scmp.eq.s32.totalorder %s29, 0
      %p143 = por %p141, %p142
      %s145 = sadd.s32 %s144, 1
      %p148 = scmp.eq.s32.totalorder %s23, 1
      %p149 = scmp.ne.s32.totalorder %s144, %s146
      %p150 = scmp.eq.s32.totalorder %s23, 0
      %p151 = por %p149, %p150
      %p152 = scmp.ne.s32.totalorder %s144, %s146
      %p153 = scmp.eq.s32.totalorder %s28, 1
      %p154 = por %p152, %p153
      %p155 = scmp.ne.s32.totalorder %s146, %s147
      %p156 = scmp.eq.s32.totalorder %s28, 0
      %p157 = por %p155, %p156
      %p158 = scmp.ne.s32.totalorder %s146, %s147
      %p159 = scmp.eq.s32.totalorder %s29, 1
      %p160 = por %p158, %p159
      %p162 = scmp.ne.s32.totalorder %s147, %s161
      %p163 = scmp.eq.s32.totalorder %s29, 0
      %p164 = por %p162, %p163
      %s166 = sadd.s32 %s165, 1
      %p169 = scmp.eq.s32.totalorder %s23, 1
      %p170 = scmp.ne.s32.totalorder %s165, %s167
      %p171 = scmp.eq.s32.totalorder %s23, 0
      %p172 = por %p170, %p171
      %p173 = scmp.ne.s32.totalorder %s165, %s167
      %p174 = scmp.eq.s32.totalorder %s28, 1
      %p175 = por %p173, %p174
      %p176 = scmp.ne.s32.totalorder %s167, %s168
      %p177 = scmp.eq.s32.totalorder %s28, 0
      %p178 = por %p176, %p177
      %p179 = scmp.ne.s32.totalorder %s167, %s168
      %p180 = scmp.eq.s32.totalorder %s29, 1
      %p181 = por %p179, %p180
      %p183 = scmp.ne.s32.totalorder %s168, %s182
      %p184 = scmp.eq.s32.totalorder %s29, 0
      %p185 = por %p183, %p184
      %s187 = sadd.s32 %s186, 1
      %p190 = scmp.eq.s32.totalorder %s23, 1
      %p191 = scmp.ne.s32.totalorder %s186, %s188
      %p192 = scmp.eq.s32.totalorder %s23, 0
      %p193 = por %p191, %p192
      %p194 = scmp.ne.s32.totalorder %s186, %s188
      %p195 = scmp.eq.s32.totalorder %s28, 1
      %p196 = por %p194, %p195
      %p197 = scmp.ne.s32.totalorder %s188, %s189
      %p198 = scmp.eq.s32.totalorder %s28, 0
      %p199 = por %p197, %p198
      %p200 = scmp.ne.s32.totalorder %s188, %s189
      %p201 = scmp.eq.s32.totalorder %s29, 1
      %p202 = por %p200, %p201
      %p204 = scmp.ne.s32.totalorder %s189, %s203
      %p205 = scmp.eq.s32.totalorder %s29, 0
      %p206 = por %p204, %p205
      %s207 = ssub.s32 %s30, %s42
      %s208 = ssub.s32 %s31, %s38
      %s209 = sor.u32 %s207, %s208
      %p210 = scmp.eq.s32.totalorder %s209, 0
      %s212 = sadd.s32 %s211, 1
      %s213 = scalar_select %p210, %s211, %s212
      %p216 = pneg %p210
      %p217 = scmp.eq.s32.totalorder %s23, 1
      %p218 = por %p216, %p217
      %p219 = scmp.ne.s32.totalorder %s211, %s214
      %p220 = scmp.eq.s32.totalorder %s23, 0
      %p221 = por %p219, %p220
      %p222 = scmp.ne.s32.totalorder %s211, %s214
      %p223 = scmp.eq.s32.totalorder %s28, 1
      %p224 = por %p222, %p223
      %p225 = scmp.ne.s32.totalorder %s214, %s215
      %p226 = scmp.eq.s32.totalorder %s28, 0
      %p227 = por %p225, %p226
      %p228 = scmp.ne.s32.totalorder %s214, %s215
      %p229 = scmp.eq.s32.totalorder %s29, 1
      %p230 = por %p228, %p229
      %p232 = scmp.ne.s32.totalorder %s215, %s231
      %p233 = scmp.eq.s32.totalorder %s29, 0
      %p234 = por %p232, %p233
      %p235 = scmp.le.s32.totalorder 1, %s23
      %p236 = scmp.lt.s32.totalorder %s23, 3
      %p237 = pnand %p235, %p236
      %p238 = pneg %p237
      // Predicated region
      $region9: #{tpu_custom_call.1} parent=5 // pred_check
        _
      $region10: #{tpu_custom_call.1} parent=5 // pred_check_branch
        %240 = sbr.rel (%p237) target = $region12
      $region11: #{tpu_custom_call.1} parent=5 // pred_region
        %s241 = ssub.s32 %s23, 1
        // Predicated region
        $region13: #{tpu_custom_call.1} parent=11 // pred_check
          %p242 = pneg %p136
        $region14: #{tpu_custom_call.1} parent=11 // pred_check_branch
          %244 = sbr.rel (%p242) target = $region16
        $region15: #{tpu_custom_call.1} parent=11 // pred_region
          %s246 = ssub.s32 512, 512
          %247 = vsyncadd [#allocation9], %s246
          %s248 = sshll.u32 [#allocation8], 4
          %s249 = int_to_ptr.vmem [resolvable:$true] %s248
          %254 = dma.hbm_to_vmem [thread:$0]  %s3, 512, %s249, [#allocation9], 128, 128, 8
        $region16: #{tpu_custom_call.1} parent=11 // pred_fallthru
          _
        // Predicated region
        $region17: #{tpu_custom_call.1} parent=11 // pred_check
          %p255 = pneg %p157
        $region18: #{tpu_custom_call.1} parent=11 // pred_check_branch
          %257 = sbr.rel (%p255) target = $region20
        $region19: #{tpu_custom_call.1} parent=11 // pred_region
          _
        $region20: #{tpu_custom_call.1} parent=11 // pred_fallthru
          _
        // Predicated region
        $region21: #{tpu_custom_call.1} parent=11 // pred_check
          %p258 = pneg %p178
        $region22: #{tpu_custom_call.1} parent=11 // pred_check_branch
          %260 = sbr.rel (%p258) target = $region24
        $region23: #{tpu_custom_call.1} parent=11 // pred_region
          %s262 = ssub.s32 512, 512
          %263 = vsyncadd [#allocation9], %s262
          %s264 = sshll.u32 [#allocation10], 4
          %s265 = int_to_ptr.vmem [resolvable:$true] %s264
          %270 = dma.hbm_to_vmem [thread:$0]  %s5, 512, %s265, [#allocation9], 128, 128, 8
        $region24: #{tpu_custom_call.1} parent=11 // pred_fallthru
          _
        // Predicated region
        $region25: #{tpu_custom_call.1} parent=11 // pred_check
          %p271 = pneg %p199
        $region26: #{tpu_custom_call.1} parent=11 // pred_check_branch
          %273 = sbr.rel (%p271) target = $region28
        $region27: #{tpu_custom_call.1} parent=11 // pred_region
          _
        $region28: #{tpu_custom_call.1} parent=11 // pred_fallthru
          _
      $region12: #{tpu_custom_call.1} parent=5 // pred_fallthru
        _
      %p274 = scmp.lt.s32.totalorder %s23, 2
      // Predicated region
      $region29: #{tpu_custom_call.1} parent=5 // pred_check
        %p275 = pneg %p274
      $region30: #{tpu_custom_call.1} parent=5 // pred_check_branch
        %277 = sbr.rel (%p275) target = $region32
      $region31: #{tpu_custom_call.1} parent=5 // pred_region
        // Predicated region
        $region33: #{tpu_custom_call.1} parent=31 // pred_check
          %p278 = pneg %p57
        $region34: #{tpu_custom_call.1} parent=31 // pred_check_branch
          %280 = sbr.rel (%p278) target = $region36
        $region35: #{tpu_custom_call.1} parent=31 // pred_region
          %s281 = sand.u32 %s47, 1
          %s282 = scalar_lea.sflag [#allocation3], %s281
          %s283 = sand.u32 %s47, 1
          %s284 = smul.addr %s283, 16
          %s285 = scalar_lea.vmem [#allocation2], %s284
          %s286 = smul.u32 2, %s31
          %s288 = ssub.s32 256, 256
          %289 = vsyncadd %s282, %s288
          %s290 = smul.addr %s30, 2
          %s291 = sadd.s32 %s286, %s290
          %s292 = smul.addr %s291, 128
          %s293 = scalar_lea.hbm %s0, %s292
          %s294 = sshll.u32 %s285, 4
          %s295 = int_to_ptr.vmem [resolvable:$true] %s294
          %300 = dma.hbm_to_vmem [thread:$0]  %s293, 256, %s295, %s282, 128, 128, 8
        $region36: #{tpu_custom_call.1} parent=31 // pred_fallthru
          _
        // Predicated region
        $region37: #{tpu_custom_call.1} parent=31 // pred_check
          %p301 = pneg %p83
        $region38: #{tpu_custom_call.1} parent=31 // pred_check_branch
          %303 = sbr.rel (%p301) target = $region40
        $region39: #{tpu_custom_call.1} parent=31 // pred_region
          %s304 = sand.u32 %s23, 1
          %s305 = scalar_lea.sflag [#allocation6], %s304
          %s306 = sand.u32 %s73, 1
          %s307 = smul.addr %s306, 32
          %s308 = scalar_lea.vmem [#allocation5], %s307
          %s310 = ssub.s32 512, 512
          %311 = vsyncadd %s305, %s310
          %s312 = smul.addr %s30, 4
          %s313 = smul.addr %s312, 128
          %s314 = scalar_lea.hbm %s1, %s313
          %s315 = sshll.u32 %s308, 4
          %s316 = int_to_ptr.vmem [resolvable:$true] %s315
          %321 = dma.hbm_to_vmem [thread:$0]  %s314, 512, %s316, %s305, 128, 128, 8
        $region40: #{tpu_custom_call.1} parent=31 // pred_fallthru
          _
        // Predicated region
        $region41: #{tpu_custom_call.1} parent=31 // pred_check
          %p322 = pneg %p109
        $region42: #{tpu_custom_call.1} parent=31 // pred_check_branch
          %324 = sbr.rel (%p322) target = $region44
        $region43: #{tpu_custom_call.1} parent=31 // pred_region
          %s325 = sand.u32 %s23, 1
          %s326 = scalar_lea.sflag [#allocation6], %s325
          %s327 = sand.u32 %s99, 1
          %s328 = smul.addr %s327, 32
          %s329 = scalar_lea.vmem [#allocation7], %s328
          %s331 = ssub.s32 512, 512
          %332 = vsyncadd %s326, %s331
          %s333 = smul.addr %s30, 4
          %s334 = smul.addr %s333, 128
          %s335 = scalar_lea.hbm %s2, %s334
          %s336 = sshll.u32 %s329, 4
          %s337 = int_to_ptr.vmem [resolvable:$true] %s336
          %342 = dma.hbm_to_vmem [thread:$0]  %s335, 512, %s337, %s326, 128, 128, 8
        $region44: #{tpu_custom_call.1} parent=31 // pred_fallthru
          _
      $region32: #{tpu_custom_call.1} parent=5 // pred_fallthru
        _
      %p343 = scmp.le.s32.totalorder 1, %s23
      %p344 = scmp.lt.s32.totalorder %s23, 3
      %p345 = pnand %p343, %p344
      %p346 = pneg %p345
      // Predicated region
      $region45: #{tpu_custom_call.1} parent=5 // pred_check
        _
      $region46: #{tpu_custom_call.1} parent=5 // pred_check_branch
        %348 = sbr.rel (%p345) target = $region48
      $region47: #{tpu_custom_call.1} parent=5 // pred_region
        %s349 = ssub.s32 %s23, 1
        %s350 = sand.u32 %s50, 1
        %s351 = scalar_lea.sflag [#allocation3], %s350
        %s352 = sand.u32 %s50, 1
        %s353 = smul.addr %s352, 16
        %s354 = scalar_lea.vmem [#allocation2], %s353
        // Predicated region
        $region49: #{tpu_custom_call.1} parent=47 // pred_check
          %p355 = pneg %p63
        $region50: #{tpu_custom_call.1} parent=47 // pred_check_branch
          %357 = sbr.rel (%p355) target = $region52
        $region51: #{tpu_custom_call.1} parent=47 // pred_region
          %358 = dma.done %s351, 256
        $region52: #{tpu_custom_call.1} parent=47 // pred_fallthru
          _
        %s359 = sand.u32 %s28, 1
        %s360 = scalar_lea.sflag [#allocation6], %s359
        %s361 = sand.u32 %s76, 1
        %s362 = smul.addr %s361, 32
        %s363 = scalar_lea.vmem [#allocation5], %s362
        // Predicated region
        $region53: #{tpu_custom_call.1} parent=47 // pred_check
          %p364 = pneg %p89
        $region54: #{tpu_custom_call.1} parent=47 // pred_check_branch
          %366 = sbr.rel (%p364) target = $region56
        $region55: #{tpu_custom_call.1} parent=47 // pred_region
          %367 = dma.done %s360, 512
        $region56: #{tpu_custom_call.1} parent=47 // pred_fallthru
          _
        %s368 = sand.u32 %s28, 1
        %s369 = scalar_lea.sflag [#allocation6], %s368
        %s370 = sand.u32 %s102, 1
        %s371 = smul.addr %s370, 32
        %s372 = scalar_lea.vmem [#allocation7], %s371
        // Predicated region
        $region57: #{tpu_custom_call.1} parent=47 // pred_check
          %p373 = pneg %p115
        $region58: #{tpu_custom_call.1} parent=47 // pred_check_branch
          %375 = sbr.rel (%p373) target = $region60
        $region59: #{tpu_custom_call.1} parent=47 // pred_region
          %376 = dma.done %s369, 512
        $region60: #{tpu_custom_call.1} parent=47 // pred_fallthru
          _
        // Predicated region
        $region61: #{tpu_custom_call.1} parent=47 // pred_check
          %p377 = pneg %p136
        $region62: #{tpu_custom_call.1} parent=47 // pred_check_branch
          %379 = sbr.rel (%p377) target = $region64
        $region63: #{tpu_custom_call.1} parent=47 // pred_region
          %380 = dma.done [#allocation9], 512
        $region64: #{tpu_custom_call.1} parent=47 // pred_fallthru
          _
        // Predicated region
        $region65: #{tpu_custom_call.1} parent=47 // pred_check
          %p381 = pneg %p178
        $region66: #{tpu_custom_call.1} parent=47 // pred_check_branch
          %383 = sbr.rel (%p381) target = $region68
        $region67: #{tpu_custom_call.1} parent=47 // pred_region
          %384 = dma.done [#allocation9], 512
        $region68: #{tpu_custom_call.1} parent=47 // pred_fallthru
          _
        %s385 = sand.u32 %s50, 1
        %s386 = scalar_lea.sflag [#allocation3], %s385
        %s387 = sand.u32 %s50, 1
        %s388 = smul.addr %s387, 16
        %s389 = scalar_lea.vmem [#allocation2], %s388
        %p390 = pneg %p63
        %p391 = pneg %p60
        %s392 = sand.u32 %s28, 1
        %s393 = scalar_lea.sflag [#allocation6], %s392
        %s394 = sand.u32 %s76, 1
        %s395 = smul.addr %s394, 32
        %s396 = scalar_lea.vmem [#allocation5], %s395
        %p397 = pneg %p89
        %p398 = pneg %p86
        %s399 = sand.u32 %s28, 1
        %s400 = scalar_lea.sflag [#allocation6], %s399
        %s401 = sand.u32 %s102, 1
        %s402 = smul.addr %s401, 32
        %s403 = scalar_lea.vmem [#allocation7], %s402
        %p404 = pneg %p115
        %p405 = pneg %p112
        %p406 = pneg %p136
        %p407 = pneg %p133
        %p408 = pneg %p157
        %p409 = pneg %p154
        %p410 = pneg %p178
        %p411 = pneg %p175
        %p412 = pneg %p199
        %p413 = pneg %p196
        %p414 = pneg %p227
        %p415 = pneg %p224
        %s416 = sand.u32 %s214, 1
        %s417 = scalar_lea.sflag [#allocation4], %s416
        %s418 = sand.u32 %s214, 1
        %s419 = smul.addr %s418, 16
        %s420 = scalar_lea.vmem [#allocation11], %s419
        %s421 = smul.u32 2, %s33
        %s422 = smul.u32 2, %s33
        %v423 = vld [vmem:[%s354] sm:$0xff]
        %v424 = vld [vmem:[%s354 + $0x8] sm:$0xff]
        %v425 = vld [vmem:[#allocation8] sm:$0xff]
        %v426 = vld [vmem:[#allocation8 + $0x8] sm:$0xff]
        %v427 = vld [vmem:[#allocation8 + $0x10] sm:$0xff]
        %v428 = vld [vmem:[#allocation8 + $0x18] sm:$0xff]
        %v429 = vld [vmem:[%s4] sm:$0x1]
        %v431 = vlaneseq
        %v432 = vshrl.u32 %v431, 7
        %v433 = vsub.s32 0, %v432
        %v434 = vrot.slane %v429, %v433
        %vm436 = vcmask 261120
        %v438 = vsel %vm436, %v423, 0
        %v441 = vsel %vm436, %v424, 0
        %443 = vmatprep.subr.mxu0 0.0
        %444 = vmatpush1.msra.mxu0 0.0
        %445 = vmatprep.subr.mxu0 0.0
        %446 = vmatpush1.msra.mxu0 0.0
        %447 = vmatprep.subr.mxu0 0.0
        %448 = vmatpush1.msra.mxu0 0.0
        %449 = vmatprep.subr.mxu0 0.0
        %450 = vmatpush1.msra.mxu0 0.0
        %451 = vmatprep.subr.mxu0 0.0
        %452 = vmatpush1.msra.mxu0 0.0
        %453 = vmatprep.subr.mxu0 0.0
        %454 = vmatpush1.msra.mxu0 0.0
        %455 = vmatprep.subr.mxu0 0.0
        %456 = vmatpush1.msra.mxu0 0.0
        %457 = vmatprep.subr.mxu0 0.0
        %458 = vmatpush1.msra.mxu0 0.0
        %459 = vmatprep.subr.mxu0 0.0
        %460 = vmatpush1.msra.mxu0 0.0
        %461 = vmatprep.subr.mxu0 0.0
        %462 = vmatpush1.msra.mxu0 0.0
        %463 = vmatprep.subr.mxu0 0.0
        %464 = vmatpush1.msra.mxu0 0.0
        %465 = vmatprep.subr.mxu0 0.0
        %466 = vmatpush1.msra.mxu0 0.0
        %467 = vmatprep.subr.mxu0 0.0
        %468 = vmatpush1.msra.mxu0 %v428
        %469 = vmatprep.subr.mxu0 0.0
        %470 = vmatpush1.msra.mxu0 %v427
        %471 = vmatprep.subr.mxu0 0.0
        %472 = vmatpush1.msra.mxu0 %v426
        %473 = vmatprep.subr.mxu0 0.0
        %474 = vmatpush1.msra.mxu0 %v425
        %475 = vmatprep.subr.mxu0 0.0
        %476 = vmatpush2.msra.mxu0 0.0
        %477 = vmatprep.subr.mxu0 0.0
        %478 = vmatpush2.msra.mxu0 0.0
        %479 = vmatprep.subr.mxu0 0.0
        %480 = vmatpush2.msra.mxu0 0.0
        %481 = vmatprep.subr.mxu0 0.0
        %482 = vmatpush2.msra.mxu0 0.0
        %483 = vmatprep.subr.mxu0 0.0
        %484 = vmatpush2.msra.mxu0 0.0
        %485 = vmatprep.subr.mxu0 0.0
        %486 = vmatpush2.msra.mxu0 0.0
        %487 = vmatprep.subr.mxu0 0.0
        %488 = vmatpush2.msra.mxu0 0.0
        %489 = vmatprep.subr.mxu0 0.0
        %490 = vmatpush2.msra.mxu0 0.0
        %491 = vmatprep.subr.mxu0 0.0
        %492 = vmatpush2.msra.mxu0 0.0
        %493 = vmatprep.subr.mxu0 0.0
        %494 = vmatpush2.msra.mxu0 0.0
        %495 = vmatprep.subr.mxu0 0.0
        %496 = vmatpush2.msra.mxu0 0.0
        %497 = vmatprep.subr.mxu0 0.0
        %498 = vmatpush2.msra.mxu0 0.0
        %499 = vmatprep.subr.mxu0 0.0
        %500 = vmatpush2.msra.mxu0 0.0
        %501 = vmatprep.subr.mxu0 0.0
        %502 = vmatpush2.msra.mxu0 0.0
        %503 = vmatprep.subr.mxu0 0.0
        %504 = vmatpush2.msra.mxu0 0.0
        %505 = vmatprep.subr.mxu0 0.0
        %506 = vmatpush2.msra.mxu0 0.0
        %507 = vmatprep.mubr.f32.mxu0 0.0
        %508 = vmatmul.mubr.f32.gmra.mxu0 %v438
        %v509 = vpop.f32.mrf.mxu0
        %v510 = vadd.f32 %v434, %v509
        %v511 = vpop.f32.mrf.mxu0
        %512 = vmatprep.mubr.f32.mxu0 0.0
        %513 = vmatmul.mubr.f32.gmra.mxu0 %v441
        %v514 = vpop.f32.mrf.mxu0
        %v515 = vadd.f32 %v434, %v514
        %v516 = vpop.f32.mrf.mxu0
        %517 = vdwg.mxu0
        %v518 = vld [vmem:[%s363] sm:$0xff]
        %v519 = vld [vmem:[%s372] sm:$0xff]
        %vm520 = vcmask 64512
        %v522 = vsel %vm520, %v510, 0
        %v525 = vsel %vm520, %v515, 0
        %527 = vmatprep.subr.mxu0 0.0
        %528 = vmatpush1.msra.mxu0 0.0
        %529 = vmatprep.subr.mxu0 0.0
        %530 = vmatpush1.msra.mxu0 0.0
        %531 = vmatprep.subr.mxu0 0.0
        %532 = vmatpush1.msra.mxu0 0.0
        %533 = vmatprep.subr.mxu0 0.0
        %534 = vmatpush1.msra.mxu0 0.0
        %535 = vmatprep.subr.mxu0 0.0
        %536 = vmatpush1.msra.mxu0 0.0
        %537 = vmatprep.subr.mxu0 0.0
        %538 = vmatpush1.msra.mxu0 0.0
        %539 = vmatprep.subr.mxu0 0.0
        %540 = vmatpush1.msra.mxu0 0.0
        %541 = vmatprep.subr.mxu0 0.0
        %542 = vmatpush1.msra.mxu0 0.0
        %543 = vmatprep.subr.mxu0 0.0
        %544 = vmatpush1.msra.mxu0 0.0
        %545 = vmatprep.subr.mxu0 0.0
        %546 = vmatpush1.msra.mxu0 0.0
        %547 = vmatprep.subr.mxu0 0.0
        %548 = vmatpush1.msra.mxu0 0.0
        %549 = vmatprep.subr.mxu0 0.0
        %550 = vmatpush1.msra.mxu0 0.0
        %551 = vmatprep.subr.mxu0 0.0
        %552 = vmatpush1.msra.mxu0 0.0
        %553 = vmatprep.subr.mxu0 0.0
        %554 = vmatpush1.msra.mxu0 0.0
        %555 = vmatprep.subr.mxu0 0.0
        %556 = vmatpush1.msra.mxu0 0.0
        %557 = vmatprep.subr.mxu0 0.0
        %558 = vmatpush1.msra.mxu0 %v518
        %559 = vmatprep.subr.mxu0 0.0
        %560 = vmatpush2.msra.mxu0 0.0
        %561 = vmatprep.subr.mxu0 0.0
        %562 = vmatpush2.msra.mxu0 0.0
        %563 = vmatprep.subr.mxu0 0.0
        %564 = vmatpush2.msra.mxu0 0.0
        %565 = vmatprep.subr.mxu0 0.0
        %566 = vmatpush2.msra.mxu0 0.0
        %567 = vmatprep.subr.mxu0 0.0
        %568 = vmatpush2.msra.mxu0 0.0
        %569 = vmatprep.subr.mxu0 0.0
        %570 = vmatpush2.msra.mxu0 0.0
        %571 = vmatprep.subr.mxu0 0.0
        %572 = vmatpush2.msra.mxu0 0.0
        %573 = vmatprep.subr.mxu0 0.0
        %574 = vmatpush2.msra.mxu0 0.0
        %575 = vmatprep.subr.mxu0 0.0
        %576 = vmatpush2.msra.mxu0 0.0
        %577 = vmatprep.subr.mxu0 0.0
        %578 = vmatpush2.msra.mxu0 0.0
        %579 = vmatprep.subr.mxu0 0.0
        %580 = vmatpush2.msra.mxu0 0.0
        %581 = vmatprep.subr.mxu0 0.0
        %582 = vmatpush2.msra.mxu0 0.0
        %583 = vmatprep.subr.mxu0 0.0
        %584 = vmatpush2.msra.mxu0 0.0
        %585 = vmatprep.subr.mxu0 0.0
        %586 = vmatpush2.msra.mxu0 0.0
        %587 = vmatprep.subr.mxu0 0.0
        %588 = vmatpush2.msra.mxu0 0.0
        %589 = vmatprep.subr.mxu0 0.0
        %590 = vmatpush2.msra.mxu0 0.0
        %591 = vmatprep.mubr.f32.mxu0 0.0
        %592 = vmatmul.mubr.f32.gmra.mxu0 %v522
        %v593 = vpop.f32.mrf.mxu0
        %v594 = vadd.f32 0.0, %v593
        %v595 = vpop.f32.mrf.mxu0
        %596 = vmatprep.mubr.f32.mxu0 0.0
        %597 = vmatmul.mubr.f32.gmra.mxu0 %v525
        %v598 = vpop.f32.mrf.mxu0
        %v599 = vadd.f32 0.0, %v598
        %v600 = vpop.f32.mrf.mxu0
        %601 = vdwg.mxu0
        %v602 = vsel %vm520, %v594, -inf
        %603 = vmax.xlane.f32.xlu0 %v602
        %v604 = vpop.xlane.xlu0 %603
        %v605 = vsel %vm520, %v599, -inf
        %606 = vmax.xlane.f32.xlu0 %v605
        %v607 = vpop.xlane.xlu0 %606
        %v608 = vsub.f32 %v594, %v604
        %v609 = vsub.f32 %v599, %v607
        %v610 = vmul.f32 %v608, 1.442695
        %v611 = vpow.pop %v610
        %v612 = vmul.f32 %v609, 1.442695
        %v613 = vpow.pop %v612
        %v614 = vsel %vm520, %v611, 0.0
        %615 = vadd.xlane.f32.xlu0 %v614
        %v616 = vpop.xlane.xlu0 %615
        %v617 = vsel %vm520, %v613, 0.0
        %618 = vadd.xlane.f32.xlu0 %v617
        %v619 = vpop.xlane.xlu0 %618
        %v620 = vrcp.pop %v616
        %v621 = vrcp.pop %v619
        %v622 = vmul.f32 %v611, %v620
        %v623 = vmul.f32 %v613, %v621
        %v625 = vsel %vm520, %v622, 0
        %v628 = vsel %vm520, %v623, 0
        %630 = vmatprep.subr.mxu0 0.0
        %631 = vmatpush1.msra.mxu0 0.0
        %632 = vmatprep.subr.mxu0 0.0
        %633 = vmatpush1.msra.mxu0 0.0
        %634 = vmatprep.subr.mxu0 0.0
        %635 = vmatpush1.msra.mxu0 0.0
        %636 = vmatprep.subr.mxu0 0.0
        %637 = vmatpush1.msra.mxu0 0.0
        %638 = vmatprep.subr.mxu0 0.0
        %639 = vmatpush1.msra.mxu0 0.0
        %640 = vmatprep.subr.mxu0 0.0
        %641 = vmatpush1.msra.mxu0 0.0
        %642 = vmatprep.subr.mxu0 0.0
        %643 = vmatpush1.msra.mxu0 0.0
        %644 = vmatprep.subr.mxu0 0.0
        %645 = vmatpush1.msra.mxu0 0.0
        %646 = vmatprep.subr.mxu0 0.0
        %647 = vmatpush1.msra.mxu0 0.0
        %648 = vmatprep.subr.mxu0 0.0
        %649 = vmatpush1.msra.mxu0 0.0
        %650 = vmatprep.subr.mxu0 0.0
        %651 = vmatpush1.msra.mxu0 0.0
        %652 = vmatprep.subr.mxu0 0.0
        %653 = vmatpush1.msra.mxu0 0.0
        %654 = vmatprep.subr.mxu0 0.0
        %655 = vmatpush1.msra.mxu0 0.0
        %656 = vmatprep.subr.mxu0 0.0
        %657 = vmatpush1.msra.mxu0 0.0
        %658 = vmatprep.subr.mxu0 0.0
        %659 = vmatpush1.msra.mxu0 0.0
        %660 = vmatprep.subr.mxu0 0.0
        %661 = vmatpush1.msra.mxu0 %v519
        %662 = vmatprep.subr.mxu0 0.0
        %663 = vmatpush2.msra.mxu0 0.0
        %664 = vmatprep.subr.mxu0 0.0
        %665 = vmatpush2.msra.mxu0 0.0
        %666 = vmatprep.subr.mxu0 0.0
        %667 = vmatpush2.msra.mxu0 0.0
        %668 = vmatprep.subr.mxu0 0.0
        %669 = vmatpush2.msra.mxu0 0.0
        %670 = vmatprep.subr.mxu0 0.0
        %671 = vmatpush2.msra.mxu0 0.0
        %672 = vmatprep.subr.mxu0 0.0
        %673 = vmatpush2.msra.mxu0 0.0
        %674 = vmatprep.subr.mxu0 0.0
        %675 = vmatpush2.msra.mxu0 0.0
        %676 = vmatprep.subr.mxu0 0.0
        %677 = vmatpush2.msra.mxu0 0.0
        %678 = vmatprep.subr.mxu0 0.0
        %679 = vmatpush2.msra.mxu0 0.0
        %680 = vmatprep.subr.mxu0 0.0
        %681 = vmatpush2.msra.mxu0 0.0
        %682 = vmatprep.subr.mxu0 0.0
        %683 = vmatpush2.msra.mxu0 0.0
        %684 = vmatprep.subr.mxu0 0.0
        %685 = vmatpush2.msra.mxu0 0.0
        %686 = vmatprep.subr.mxu0 0.0
        %687 = vmatpush2.msra.mxu0 0.0
        %688 = vmatprep.subr.mxu0 0.0
        %689 = vmatpush2.msra.mxu0 0.0
        %690 = vmatprep.subr.mxu0 0.0
        %691 = vmatpush2.msra.mxu0 0.0
        %692 = vmatprep.subr.mxu0 0.0
        %693 = vmatpush2.msra.mxu0 0.0
        %694 = vmatprep.mubr.f32.mxu0 0.0
        %695 = vmatmul.mubr.f32.gmra.mxu0 %v625
        %v696 = vpop.f32.mrf.mxu0
        %v697 = vadd.f32 0.0, %v696
        %v698 = vpop.f32.mrf.mxu0
        %699 = vmatprep.mubr.f32.mxu0 0.0
        %700 = vmatmul.mubr.f32.gmra.mxu0 %v628
        %v701 = vpop.f32.mrf.mxu0
        %v702 = vadd.f32 0.0, %v701
        %v703 = vpop.f32.mrf.mxu0
        %704 = vdwg.mxu0
        %v705 = vld [vmem:[#allocation10] sm:$0xff]
        %s706 = scalar_lea.vmem %s363, 8 [#allocation5]
        %v707 = vld [vmem:[%s706] sm:$0xff]
        %s708 = scalar_lea.vmem %s372, 8 [#allocation7]
        %v709 = vld [vmem:[%s708] sm:$0xff]
        %710 = vrot.lane.b32.xlu0 %v510, 120
        %v711 = vpop.permute.xlu0 %710
        %712 = vrot.lane.b32.xlu0 %v515, 120
        %v713 = vpop.permute.xlu0 %712
        %v714 = vsel %vm520, %v711, 0
        %v716 = vsel %vm520, %v713, 0
        %718 = vmatprep.subr.mxu0 0.0
        %719 = vmatpush1.msra.mxu0 0.0
        %720 = vmatprep.subr.mxu0 0.0
        %721 = vmatpush1.msra.mxu0 0.0
        %722 = vmatprep.subr.mxu0 0.0
        %723 = vmatpush1.msra.mxu0 0.0
        %724 = vmatprep.subr.mxu0 0.0
        %725 = vmatpush1.msra.mxu0 0.0
        %726 = vmatprep.subr.mxu0 0.0
        %727 = vmatpush1.msra.mxu0 0.0
        %728 = vmatprep.subr.mxu0 0.0
        %729 = vmatpush1.msra.mxu0 0.0
        %730 = vmatprep.subr.mxu0 0.0
        %731 = vmatpush1.msra.mxu0 0.0
        %732 = vmatprep.subr.mxu0 0.0
        %733 = vmatpush1.msra.mxu0 0.0
        %734 = vmatprep.subr.mxu0 0.0
        %735 = vmatpush1.msra.mxu0 0.0
        %736 = vmatprep.subr.mxu0 0.0
        %737 = vmatpush1.msra.mxu0 0.0
        %738 = vmatprep.subr.mxu0 0.0
        %739 = vmatpush1.msra.mxu0 0.0
        %740 = vmatprep.subr.mxu0 0.0
        %741 = vmatpush1.msra.mxu0 0.0
        %742 = vmatprep.subr.mxu0 0.0
        %743 = vmatpush1.msra.mxu0 0.0
        %744 = vmatprep.subr.mxu0 0.0
        %745 = vmatpush1.msra.mxu0 0.0
        %746 = vmatprep.subr.mxu0 0.0
        %747 = vmatpush1.msra.mxu0 0.0
        %748 = vmatprep.subr.mxu0 0.0
        %749 = vmatpush1.msra.mxu0 %v707
        %750 = vmatprep.subr.mxu0 0.0
        %751 = vmatpush2.msra.mxu0 0.0
        %752 = vmatprep.subr.mxu0 0.0
        %753 = vmatpush2.msra.mxu0 0.0
        %754 = vmatprep.subr.mxu0 0.0
        %755 = vmatpush2.msra.mxu0 0.0
        %756 = vmatprep.subr.mxu0 0.0
        %757 = vmatpush2.msra.mxu0 0.0
        %758 = vmatprep.subr.mxu0 0.0
        %759 = vmatpush2.msra.mxu0 0.0
        %760 = vmatprep.subr.mxu0 0.0
        %761 = vmatpush2.msra.mxu0 0.0
        %762 = vmatprep.subr.mxu0 0.0
        %763 = vmatpush2.msra.mxu0 0.0
        %764 = vmatprep.subr.mxu0 0.0
        %765 = vmatpush2.msra.mxu0 0.0
        %766 = vmatprep.subr.mxu0 0.0
        %767 = vmatpush2.msra.mxu0 0.0
        %768 = vmatprep.subr.mxu0 0.0
        %769 = vmatpush2.msra.mxu0 0.0
        %770 = vmatprep.subr.mxu0 0.0
        %771 = vmatpush2.msra.mxu0 0.0
        %772 = vmatprep.subr.mxu0 0.0
        %773 = vmatpush2.msra.mxu0 0.0
        %774 = vmatprep.subr.mxu0 0.0
        %775 = vmatpush2.msra.mxu0 0.0
        %776 = vmatprep.subr.mxu0 0.0
        %777 = vmatpush2.msra.mxu0 0.0
        %778 = vmatprep.subr.mxu0 0.0
        %779 = vmatpush2.msra.mxu0 0.0
        %780 = vmatprep.subr.mxu0 0.0
        %781 = vmatpush2.msra.mxu0 0.0
        %782 = vmatprep.mubr.f32.mxu0 0.0
        %783 = vmatmul.mubr.f32.gmra.mxu0 %v714
        %v784 = vpop.f32.mrf.mxu0
        %v785 = vadd.f32 0.0, %v784
        %v786 = vpop.f32.mrf.mxu0
        %787 = vmatprep.mubr.f32.mxu0 0.0
        %788 = vmatmul.mubr.f32.gmra.mxu0 %v716
        %v789 = vpop.f32.mrf.mxu0
        %v790 = vadd.f32 0.0, %v789
        %v791 = vpop.f32.mrf.mxu0
        %792 = vdwg.mxu0
        %v793 = vsel %vm520, %v785, -inf
        %794 = vmax.xlane.f32.xlu0 %v793
        %v795 = vpop.xlane.xlu0 %794
        %v796 = vsel %vm520, %v790, -inf
        %797 = vmax.xlane.f32.xlu0 %v796
        %v798 = vpop.xlane.xlu0 %797
        %v799 = vsub.f32 %v785, %v795
        %v800 = vsub.f32 %v790, %v798
        %v801 = vmul.f32 %v799, 1.442695
        %v802 = vpow.pop %v801
        %v803 = vmul.f32 %v800, 1.442695
        %v804 = vpow.pop %v803
        %v805 = vsel %vm520, %v802, 0.0
        %806 = vadd.xlane.f32.xlu0 %v805
        %v807 = vpop.xlane.xlu0 %806
        %v808 = vsel %vm520, %v804, 0.0
        %809 = vadd.xlane.f32.xlu0 %v808
        %v810 = vpop.xlane.xlu0 %809
        %v811 = vrcp.pop %v807
        %v812 = vrcp.pop %v810
        %v813 = vmul.f32 %v802, %v811
        %v814 = vmul.f32 %v804, %v812
        %v816 = vsel %vm520, %v813, 0
        %v819 = vsel %vm520, %v814, 0
        %821 = vmatprep.subr.mxu0 0.0
        %822 = vmatpush1.msra.mxu0 0.0
        %823 = vmatprep.subr.mxu0 0.0
        %824 = vmatpush1.msra.mxu0 0.0
        %825 = vmatprep.subr.mxu0 0.0
        %826 = vmatpush1.msra.mxu0 0.0
        %827 = vmatprep.subr.mxu0 0.0
        %828 = vmatpush1.msra.mxu0 0.0
        %829 = vmatprep.subr.mxu0 0.0
        %830 = vmatpush1.msra.mxu0 0.0
        %831 = vmatprep.subr.mxu0 0.0
        %832 = vmatpush1.msra.mxu0 0.0
        %833 = vmatprep.subr.mxu0 0.0
        %834 = vmatpush1.msra.mxu0 0.0
        %835 = vmatprep.subr.mxu0 0.0
        %836 = vmatpush1.msra.mxu0 0.0
        %837 = vmatprep.subr.mxu0 0.0
        %838 = vmatpush1.msra.mxu0 0.0
        %839 = vmatprep.subr.mxu0 0.0
        %840 = vmatpush1.msra.mxu0 0.0
        %841 = vmatprep.subr.mxu0 0.0
        %842 = vmatpush1.msra.mxu0 0.0
        %843 = vmatprep.subr.mxu0 0.0
        %844 = vmatpush1.msra.mxu0 0.0
        %845 = vmatprep.subr.mxu0 0.0
        %846 = vmatpush1.msra.mxu0 0.0
        %847 = vmatprep.subr.mxu0 0.0
        %848 = vmatpush1.msra.mxu0 0.0
        %849 = vmatprep.subr.mxu0 0.0
        %850 = vmatpush1.msra.mxu0 0.0
        %851 = vmatprep.subr.mxu0 0.0
        %852 = vmatpush1.msra.mxu0 %v709
        %853 = vmatprep.subr.mxu0 0.0
        %854 = vmatpush2.msra.mxu0 0.0
        %855 = vmatprep.subr.mxu0 0.0
        %856 = vmatpush2.msra.mxu0 0.0
        %857 = vmatprep.subr.mxu0 0.0
        %858 = vmatpush2.msra.mxu0 0.0
        %859 = vmatprep.subr.mxu0 0.0
        %860 = vmatpush2.msra.mxu0 0.0
        %861 = vmatprep.subr.mxu0 0.0
        %862 = vmatpush2.msra.mxu0 0.0
        %863 = vmatprep.subr.mxu0 0.0
        %864 = vmatpush2.msra.mxu0 0.0
        %865 = vmatprep.subr.mxu0 0.0
        %866 = vmatpush2.msra.mxu0 0.0
        %867 = vmatprep.subr.mxu0 0.0
        %868 = vmatpush2.msra.mxu0 0.0
        %869 = vmatprep.subr.mxu0 0.0
        %870 = vmatpush2.msra.mxu0 0.0
        %871 = vmatprep.subr.mxu0 0.0
        %872 = vmatpush2.msra.mxu0 0.0
        %873 = vmatprep.subr.mxu0 0.0
        %874 = vmatpush2.msra.mxu0 0.0
        %875 = vmatprep.subr.mxu0 0.0
        %876 = vmatpush2.msra.mxu0 0.0
        %877 = vmatprep.subr.mxu0 0.0
        %878 = vmatpush2.msra.mxu0 0.0
        %879 = vmatprep.subr.mxu0 0.0
        %880 = vmatpush2.msra.mxu0 0.0
        %881 = vmatprep.subr.mxu0 0.0
        %882 = vmatpush2.msra.mxu0 0.0
        %883 = vmatprep.subr.mxu0 0.0
        %884 = vmatpush2.msra.mxu0 0.0
        %885 = vmatprep.mubr.f32.mxu0 0.0
        %886 = vmatmul.mubr.f32.gmra.mxu0 %v816
        %v887 = vpop.f32.mrf.mxu0
        %v888 = vadd.f32 0.0, %v887
        %v889 = vpop.f32.mrf.mxu0
        %890 = vmatprep.mubr.f32.mxu0 0.0
        %891 = vmatmul.mubr.f32.gmra.mxu0 %v819
        %v892 = vpop.f32.mrf.mxu0
        %v893 = vadd.f32 0.0, %v892
        %v894 = vpop.f32.mrf.mxu0
        %895 = vdwg.mxu0
        %s896 = scalar_lea.vmem [#allocation10], 8
        %v897 = vld [vmem:[%s896] sm:$0xff]
        %v899 = vsel %vm520, %v888, 0
        %v902 = vsel %vm520, %v893, 0
        %904 = vmatprep.subr.mxu0 0.0
        %905 = vmatpush1.msra.mxu0 0.0
        %906 = vmatprep.subr.mxu0 0.0
        %907 = vmatpush1.msra.mxu0 0.0
        %908 = vmatprep.subr.mxu0 0.0
        %909 = vmatpush1.msra.mxu0 0.0
        %910 = vmatprep.subr.mxu0 0.0
        %911 = vmatpush1.msra.mxu0 0.0
        %912 = vmatprep.subr.mxu0 0.0
        %913 = vmatpush1.msra.mxu0 0.0
        %914 = vmatprep.subr.mxu0 0.0
        %915 = vmatpush1.msra.mxu0 0.0
        %916 = vmatprep.subr.mxu0 0.0
        %917 = vmatpush1.msra.mxu0 0.0
        %918 = vmatprep.subr.mxu0 0.0
        %919 = vmatpush1.msra.mxu0 0.0
        %920 = vmatprep.subr.mxu0 0.0
        %921 = vmatpush1.msra.mxu0 0.0
        %922 = vmatprep.subr.mxu0 0.0
        %923 = vmatpush1.msra.mxu0 0.0
        %924 = vmatprep.subr.mxu0 0.0
        %925 = vmatpush1.msra.mxu0 0.0
        %926 = vmatprep.subr.mxu0 0.0
        %927 = vmatpush1.msra.mxu0 0.0
        %928 = vmatprep.subr.mxu0 0.0
        %929 = vmatpush1.msra.mxu0 0.0
        %930 = vmatprep.subr.mxu0 0.0
        %931 = vmatpush1.msra.mxu0 0.0
        %932 = vmatprep.subr.mxu0 0.0
        %933 = vmatpush1.msra.mxu0 0.0
        %934 = vmatprep.subr.mxu0 0.0
        %935 = vmatpush1.msra.mxu0 %v897
        %936 = vmatprep.subr.mxu0 0.0
        %937 = vmatpush2.msra.mxu0 0.0
        %938 = vmatprep.subr.mxu0 0.0
        %939 = vmatpush2.msra.mxu0 0.0
        %940 = vmatprep.subr.mxu0 0.0
        %941 = vmatpush2.msra.mxu0 0.0
        %942 = vmatprep.subr.mxu0 0.0
        %943 = vmatpush2.msra.mxu0 0.0
        %944 = vmatprep.subr.mxu0 0.0
        %945 = vmatpush2.msra.mxu0 0.0
        %946 = vmatprep.subr.mxu0 0.0
        %947 = vmatpush2.msra.mxu0 0.0
        %948 = vmatprep.subr.mxu0 0.0
        %949 = vmatpush2.msra.mxu0 0.0
        %950 = vmatprep.subr.mxu0 0.0
        %951 = vmatpush2.msra.mxu0 0.0
        %952 = vmatprep.subr.mxu0 0.0
        %953 = vmatpush2.msra.mxu0 0.0
        %954 = vmatprep.subr.mxu0 0.0
        %955 = vmatpush2.msra.mxu0 0.0
        %956 = vmatprep.subr.mxu0 0.0
        %957 = vmatpush2.msra.mxu0 0.0
        %958 = vmatprep.subr.mxu0 0.0
        %959 = vmatpush2.msra.mxu0 0.0
        %960 = vmatprep.subr.mxu0 0.0
        %961 = vmatpush2.msra.mxu0 0.0
        %962 = vmatprep.subr.mxu0 0.0
        %963 = vmatpush2.msra.mxu0 0.0
        %964 = vmatprep.subr.mxu0 0.0
        %965 = vmatpush2.msra.mxu0 0.0
        %966 = vmatprep.subr.mxu0 0.0
        %967 = vmatpush2.msra.mxu0 0.0
        %968 = vmatprep.mubr.f32.mxu0 0.0
        %969 = vmatmul.mubr.f32.gmra.mxu0 %v899
        %v970 = vpop.f32.mrf.mxu0
        %v971 = vadd.f32 0.0, %v970
        %v972 = vpop.f32.mrf.mxu0
        %973 = vmatprep.mubr.f32.mxu0 0.0
        %974 = vmatmul.mubr.f32.gmra.mxu0 %v902
        %v975 = vpop.f32.mrf.mxu0
        %v976 = vadd.f32 0.0, %v975
        %v977 = vpop.f32.mrf.mxu0
        %978 = vdwg.mxu0
        %v980 = vsel %vm520, %v697, 0
        %v983 = vsel %vm520, %v702, 0
        %985 = vmatprep.subr.mxu0 0.0
        %986 = vmatpush1.msra.mxu0 0.0
        %987 = vmatprep.subr.mxu0 0.0
        %988 = vmatpush1.msra.mxu0 0.0
        %989 = vmatprep.subr.mxu0 0.0
        %990 = vmatpush1.msra.mxu0 0.0
        %991 = vmatprep.subr.mxu0 0.0
        %992 = vmatpush1.msra.mxu0 0.0
        %993 = vmatprep.subr.mxu0 0.0
        %994 = vmatpush1.msra.mxu0 0.0
        %995 = vmatprep.subr.mxu0 0.0
        %996 = vmatpush1.msra.mxu0 0.0
        %997 = vmatprep.subr.mxu0 0.0
        %998 = vmatpush1.msra.mxu0 0.0
        %999 = vmatprep.subr.mxu0 0.0
        %1000 = vmatpush1.msra.mxu0 0.0
        %1001 = vmatprep.subr.mxu0 0.0
        %1002 = vmatpush1.msra.mxu0 0.0
        %1003 = vmatprep.subr.mxu0 0.0
        %1004 = vmatpush1.msra.mxu0 0.0
        %1005 = vmatprep.subr.mxu0 0.0
        %1006 = vmatpush1.msra.mxu0 0.0
        %1007 = vmatprep.subr.mxu0 0.0
        %1008 = vmatpush1.msra.mxu0 0.0
        %1009 = vmatprep.subr.mxu0 0.0
        %1010 = vmatpush1.msra.mxu0 0.0
        %1011 = vmatprep.subr.mxu0 0.0
        %1012 = vmatpush1.msra.mxu0 0.0
        %1013 = vmatprep.subr.mxu0 0.0
        %1014 = vmatpush1.msra.mxu0 0.0
        %1015 = vmatprep.subr.mxu0 0.0
        %1016 = vmatpush1.msra.mxu0 %v705
        %1017 = vmatprep.subr.mxu0 0.0
        %1018 = vmatpush2.msra.mxu0 0.0
        %1019 = vmatprep.subr.mxu0 0.0
        %1020 = vmatpush2.msra.mxu0 0.0
        %1021 = vmatprep.subr.mxu0 0.0
        %1022 = vmatpush2.msra.mxu0 0.0
        %1023 = vmatprep.subr.mxu0 0.0
        %1024 = vmatpush2.msra.mxu0 0.0
        %1025 = vmatprep.subr.mxu0 0.0
        %1026 = vmatpush2.msra.mxu0 0.0
        %1027 = vmatprep.subr.mxu0 0.0
        %1028 = vmatpush2.msra.mxu0 0.0
        %1029 = vmatprep.subr.mxu0 0.0
        %1030 = vmatpush2.msra.mxu0 0.0
        %1031 = vmatprep.subr.mxu0 0.0
        %1032 = vmatpush2.msra.mxu0 0.0
        %1033 = vmatprep.subr.mxu0 0.0
        %1034 = vmatpush2.msra.mxu0 0.0
        %1035 = vmatprep.subr.mxu0 0.0
        %1036 = vmatpush2.msra.mxu0 0.0
        %1037 = vmatprep.subr.mxu0 0.0
        %1038 = vmatpush2.msra.mxu0 0.0
        %1039 = vmatprep.subr.mxu0 0.0
        %1040 = vmatpush2.msra.mxu0 0.0
        %1041 = vmatprep.subr.mxu0 0.0
        %1042 = vmatpush2.msra.mxu0 0.0
        %1043 = vmatprep.subr.mxu0 0.0
        %1044 = vmatpush2.msra.mxu0 0.0
        %1045 = vmatprep.subr.mxu0 0.0
        %1046 = vmatpush2.msra.mxu0 0.0
        %1047 = vmatprep.subr.mxu0 0.0
        %1048 = vmatpush2.msra.mxu0 0.0
        %1049 = vmatprep.mubr.f32.mxu0 0.0
        %1050 = vmatmul.mubr.f32.gmra.mxu0 %v980
        %v1051 = vpop.f32.mrf.mxu0
        %v1052 = vadd.f32 %v971, %v1051
        %v1053 = vpop.f32.mrf.mxu0
        %1054 = vmatprep.mubr.f32.mxu0 0.0
        %1055 = vmatmul.mubr.f32.gmra.mxu0 %v983
        %v1056 = vpop.f32.mrf.mxu0
        %v1057 = vadd.f32 %v976, %v1056
        %v1058 = vpop.f32.mrf.mxu0
        %1059 = vdwg.mxu0
        %s1060 = scalar_lea.vmem %s363, 16 [#allocation5]
        %v1061 = vld [vmem:[%s1060] sm:$0xff]
        %s1062 = scalar_lea.vmem %s372, 16 [#allocation7]
        %v1063 = vld [vmem:[%s1062] sm:$0xff]
        %1064 = vrot.lane.b32.xlu0 %v510, 112
        %v1065 = vpop.permute.xlu0 %1064
        %1066 = vrot.lane.b32.xlu0 %v515, 112
        %v1067 = vpop.permute.xlu0 %1066
        %v1068 = vsel %vm520, %v1065, 0
        %v1070 = vsel %vm520, %v1067, 0
        %1072 = vmatprep.subr.mxu0 0.0
        %1073 = vmatpush1.msra.mxu0 0.0
        %1074 = vmatprep.subr.mxu0 0.0
        %1075 = vmatpush1.msra.mxu0 0.0
        %1076 = vmatprep.subr.mxu0 0.0
        %1077 = vmatpush1.msra.mxu0 0.0
        %1078 = vmatprep.subr.mxu0 0.0
        %1079 = vmatpush1.msra.mxu0 0.0
        %1080 = vmatprep.subr.mxu0 0.0
        %1081 = vmatpush1.msra.mxu0 0.0
        %1082 = vmatprep.subr.mxu0 0.0
        %1083 = vmatpush1.msra.mxu0 0.0
        %1084 = vmatprep.subr.mxu0 0.0
        %1085 = vmatpush1.msra.mxu0 0.0
        %1086 = vmatprep.subr.mxu0 0.0
        %1087 = vmatpush1.msra.mxu0 0.0
        %1088 = vmatprep.subr.mxu0 0.0
        %1089 = vmatpush1.msra.mxu0 0.0
        %1090 = vmatprep.subr.mxu0 0.0
        %1091 = vmatpush1.msra.mxu0 0.0
        %1092 = vmatprep.subr.mxu0 0.0
        %1093 = vmatpush1.msra.mxu0 0.0
        %1094 = vmatprep.subr.mxu0 0.0
        %1095 = vmatpush1.msra.mxu0 0.0
        %1096 = vmatprep.subr.mxu0 0.0
        %1097 = vmatpush1.msra.mxu0 0.0
        %1098 = vmatprep.subr.mxu0 0.0
        %1099 = vmatpush1.msra.mxu0 0.0
        %1100 = vmatprep.subr.mxu0 0.0
        %1101 = vmatpush1.msra.mxu0 0.0
        %1102 = vmatprep.subr.mxu0 0.0
        %1103 = vmatpush1.msra.mxu0 %v1061
        %1104 = vmatprep.subr.mxu0 0.0
        %1105 = vmatpush2.msra.mxu0 0.0
        %1106 = vmatprep.subr.mxu0 0.0
        %1107 = vmatpush2.msra.mxu0 0.0
        %1108 = vmatprep.subr.mxu0 0.0
        %1109 = vmatpush2.msra.mxu0 0.0
        %1110 = vmatprep.subr.mxu0 0.0
        %1111 = vmatpush2.msra.mxu0 0.0
        %1112 = vmatprep.subr.mxu0 0.0
        %1113 = vmatpush2.msra.mxu0 0.0
        %1114 = vmatprep.subr.mxu0 0.0
        %1115 = vmatpush2.msra.mxu0 0.0
        %1116 = vmatprep.subr.mxu0 0.0
        %1117 = vmatpush2.msra.mxu0 0.0
        %1118 = vmatprep.subr.mxu0 0.0
        %1119 = vmatpush2.msra.mxu0 0.0
        %1120 = vmatprep.subr.mxu0 0.0
        %1121 = vmatpush2.msra.mxu0 0.0
        %1122 = vmatprep.subr.mxu0 0.0
        %1123 = vmatpush2.msra.mxu0 0.0
        %1124 = vmatprep.subr.mxu0 0.0
        %1125 = vmatpush2.msra.mxu0 0.0
        %1126 = vmatprep.subr.mxu0 0.0
        %1127 = vmatpush2.msra.mxu0 0.0
        %1128 = vmatprep.subr.mxu0 0.0
        %1129 = vmatpush2.msra.mxu0 0.0
        %1130 = vmatprep.subr.mxu0 0.0
        %1131 = vmatpush2.msra.mxu0 0.0
        %1132 = vmatprep.subr.mxu0 0.0
        %1133 = vmatpush2.msra.mxu0 0.0
        %1134 = vmatprep.subr.mxu0 0.0
        %1135 = vmatpush2.msra.mxu0 0.0
        %1136 = vmatprep.mubr.f32.mxu0 0.0
        %1137 = vmatmul.mubr.f32.gmra.mxu0 %v1068
        %v1138 = vpop.f32.mrf.mxu0
        %v1139 = vadd.f32 0.0, %v1138
        %v1140 = vpop.f32.mrf.mxu0
        %1141 = vmatprep.mubr.f32.mxu0 0.0
        %1142 = vmatmul.mubr.f32.gmra.mxu0 %v1070
        %v1143 = vpop.f32.mrf.mxu0
        %v1144 = vadd.f32 0.0, %v1143
        %v1145 = vpop.f32.mrf.mxu0
        %1146 = vdwg.mxu0
        %v1147 = vsel %vm520, %v1139, -inf
        %1148 = vmax.xlane.f32.xlu0 %v1147
        %v1149 = vpop.xlane.xlu0 %1148
        %v1150 = vsel %vm520, %v1144, -inf
        %1151 = vmax.xlane.f32.xlu0 %v1150
        %v1152 = vpop.xlane.xlu0 %1151
        %v1153 = vsub.f32 %v1139, %v1149
        %v1154 = vsub.f32 %v1144, %v1152
        %v1155 = vmul.f32 %v1153, 1.442695
        %v1156 = vpow.pop %v1155
        %v1157 = vmul.f32 %v1154, 1.442695
        %v1158 = vpow.pop %v1157
        %v1159 = vsel %vm520, %v1156, 0.0
        %1160 = vadd.xlane.f32.xlu0 %v1159
        %v1161 = vpop.xlane.xlu0 %1160
        %v1162 = vsel %vm520, %v1158, 0.0
        %1163 = vadd.xlane.f32.xlu0 %v1162
        %v1164 = vpop.xlane.xlu0 %1163
        %v1165 = vrcp.pop %v1161
        %v1166 = vrcp.pop %v1164
        %v1167 = vmul.f32 %v1156, %v1165
        %v1168 = vmul.f32 %v1158, %v1166
        %v1170 = vsel %vm520, %v1167, 0
        %v1173 = vsel %vm520, %v1168, 0
        %1175 = vmatprep.subr.mxu0 0.0
        %1176 = vmatpush1.msra.mxu0 0.0
        %1177 = vmatprep.subr.mxu0 0.0
        %1178 = vmatpush1.msra.mxu0 0.0
        %1179 = vmatprep.subr.mxu0 0.0
        %1180 = vmatpush1.msra.mxu0 0.0
        %1181 = vmatprep.subr.mxu0 0.0
        %1182 = vmatpush1.msra.mxu0 0.0
        %1183 = vmatprep.subr.mxu0 0.0
        %1184 = vmatpush1.msra.mxu0 0.0
        %1185 = vmatprep.subr.mxu0 0.0
        %1186 = vmatpush1.msra.mxu0 0.0
        %1187 = vmatprep.subr.mxu0 0.0
        %1188 = vmatpush1.msra.mxu0 0.0
        %1189 = vmatprep.subr.mxu0 0.0
        %1190 = vmatpush1.msra.mxu0 0.0
        %1191 = vmatprep.subr.mxu0 0.0
        %1192 = vmatpush1.msra.mxu0 0.0
        %1193 = vmatprep.subr.mxu0 0.0
        %1194 = vmatpush1.msra.mxu0 0.0
        %1195 = vmatprep.subr.mxu0 0.0
        %1196 = vmatpush1.msra.mxu0 0.0
        %1197 = vmatprep.subr.mxu0 0.0
        %1198 = vmatpush1.msra.mxu0 0.0
        %1199 = vmatprep.subr.mxu0 0.0
        %1200 = vmatpush1.msra.mxu0 0.0
        %1201 = vmatprep.subr.mxu0 0.0
        %1202 = vmatpush1.msra.mxu0 0.0
        %1203 = vmatprep.subr.mxu0 0.0
        %1204 = vmatpush1.msra.mxu0 0.0
        %1205 = vmatprep.subr.mxu0 0.0
        %1206 = vmatpush1.msra.mxu0 %v1063
        %1207 = vmatprep.subr.mxu0 0.0
        %1208 = vmatpush2.msra.mxu0 0.0
        %1209 = vmatprep.subr.mxu0 0.0
        %1210 = vmatpush2.msra.mxu0 0.0
        %1211 = vmatprep.subr.mxu0 0.0
        %1212 = vmatpush2.msra.mxu0 0.0
        %1213 = vmatprep.subr.mxu0 0.0
        %1214 = vmatpush2.msra.mxu0 0.0
        %1215 = vmatprep.subr.mxu0 0.0
        %1216 = vmatpush2.msra.mxu0 0.0
        %1217 = vmatprep.subr.mxu0 0.0
        %1218 = vmatpush2.msra.mxu0 0.0
        %1219 = vmatprep.subr.mxu0 0.0
        %1220 = vmatpush2.msra.mxu0 0.0
        %1221 = vmatprep.subr.mxu0 0.0
        %1222 = vmatpush2.msra.mxu0 0.0
        %1223 = vmatprep.subr.mxu0 0.0
        %1224 = vmatpush2.msra.mxu0 0.0
        %1225 = vmatprep.subr.mxu0 0.0
        %1226 = vmatpush2.msra.mxu0 0.0
        %1227 = vmatprep.subr.mxu0 0.0
        %1228 = vmatpush2.msra.mxu0 0.0
        %1229 = vmatprep.subr.mxu0 0.0
        %1230 = vmatpush2.msra.mxu0 0.0
        %1231 = vmatprep.subr.mxu0 0.0
        %1232 = vmatpush2.msra.mxu0 0.0
        %1233 = vmatprep.subr.mxu0 0.0
        %1234 = vmatpush2.msra.mxu0 0.0
        %1235 = vmatprep.subr.mxu0 0.0
        %1236 = vmatpush2.msra.mxu0 0.0
        %1237 = vmatprep.subr.mxu0 0.0
        %1238 = vmatpush2.msra.mxu0 0.0
        %1239 = vmatprep.mubr.f32.mxu0 0.0
        %1240 = vmatmul.mubr.f32.gmra.mxu0 %v1170
        %v1241 = vpop.f32.mrf.mxu0
        %v1242 = vadd.f32 0.0, %v1241
        %v1243 = vpop.f32.mrf.mxu0
        %1244 = vmatprep.mubr.f32.mxu0 0.0
        %1245 = vmatmul.mubr.f32.gmra.mxu0 %v1173
        %v1246 = vpop.f32.mrf.mxu0
        %v1247 = vadd.f32 0.0, %v1246
        %v1248 = vpop.f32.mrf.mxu0
        %1249 = vdwg.mxu0
        %s1250 = scalar_lea.vmem [#allocation10], 16
        %v1251 = vld [vmem:[%s1250] sm:$0xff]
        %v1253 = vsel %vm520, %v1242, 0
        %v1256 = vsel %vm520, %v1247, 0
        %1258 = vmatprep.subr.mxu0 0.0
        %1259 = vmatpush1.msra.mxu0 0.0
        %1260 = vmatprep.subr.mxu0 0.0
        %1261 = vmatpush1.msra.mxu0 0.0
        %1262 = vmatprep.subr.mxu0 0.0
        %1263 = vmatpush1.msra.mxu0 0.0
        %1264 = vmatprep.subr.mxu0 0.0
        %1265 = vmatpush1.msra.mxu0 0.0
        %1266 = vmatprep.subr.mxu0 0.0
        %1267 = vmatpush1.msra.mxu0 0.0
        %1268 = vmatprep.subr.mxu0 0.0
        %1269 = vmatpush1.msra.mxu0 0.0
        %1270 = vmatprep.subr.mxu0 0.0
        %1271 = vmatpush1.msra.mxu0 0.0
        %1272 = vmatprep.subr.mxu0 0.0
        %1273 = vmatpush1.msra.mxu0 0.0
        %1274 = vmatprep.subr.mxu0 0.0
        %1275 = vmatpush1.msra.mxu0 0.0
        %1276 = vmatprep.subr.mxu0 0.0
        %1277 = vmatpush1.msra.mxu0 0.0
        %1278 = vmatprep.subr.mxu0 0.0
        %1279 = vmatpush1.msra.mxu0 0.0
        %1280 = vmatprep.subr.mxu0 0.0
        %1281 = vmatpush1.msra.mxu0 0.0
        %1282 = vmatprep.subr.mxu0 0.0
        %1283 = vmatpush1.msra.mxu0 0.0
        %1284 = vmatprep.subr.mxu0 0.0
        %1285 = vmatpush1.msra.mxu0 0.0
        %1286 = vmatprep.subr.mxu0 0.0
        %1287 = vmatpush1.msra.mxu0 0.0
        %1288 = vmatprep.subr.mxu0 0.0
        %1289 = vmatpush1.msra.mxu0 %v1251
        %1290 = vmatprep.subr.mxu0 0.0
        %1291 = vmatpush2.msra.mxu0 0.0
        %1292 = vmatprep.subr.mxu0 0.0
        %1293 = vmatpush2.msra.mxu0 0.0
        %1294 = vmatprep.subr.mxu0 0.0
        %1295 = vmatpush2.msra.mxu0 0.0
        %1296 = vmatprep.subr.mxu0 0.0
        %1297 = vmatpush2.msra.mxu0 0.0
        %1298 = vmatprep.subr.mxu0 0.0
        %1299 = vmatpush2.msra.mxu0 0.0
        %1300 = vmatprep.subr.mxu0 0.0
        %1301 = vmatpush2.msra.mxu0 0.0
        %1302 = vmatprep.subr.mxu0 0.0
        %1303 = vmatpush2.msra.mxu0 0.0
        %1304 = vmatprep.subr.mxu0 0.0
        %1305 = vmatpush2.msra.mxu0 0.0
        %1306 = vmatprep.subr.mxu0 0.0
        %1307 = vmatpush2.msra.mxu0 0.0
        %1308 = vmatprep.subr.mxu0 0.0
        %1309 = vmatpush2.msra.mxu0 0.0
        %1310 = vmatprep.subr.mxu0 0.0
        %1311 = vmatpush2.msra.mxu0 0.0
        %1312 = vmatprep.subr.mxu0 0.0
        %1313 = vmatpush2.msra.mxu0 0.0
        %1314 = vmatprep.subr.mxu0 0.0
        %1315 = vmatpush2.msra.mxu0 0.0
        %1316 = vmatprep.subr.mxu0 0.0
        %1317 = vmatpush2.msra.mxu0 0.0
        %1318 = vmatprep.subr.mxu0 0.0
        %1319 = vmatpush2.msra.mxu0 0.0
        %1320 = vmatprep.subr.mxu0 0.0
        %1321 = vmatpush2.msra.mxu0 0.0
        %1322 = vmatprep.mubr.f32.mxu0 0.0
        %1323 = vmatmul.mubr.f32.gmra.mxu0 %v1253
        %v1324 = vpop.f32.mrf.mxu0
        %v1325 = vadd.f32 0.0, %v1324
        %v1326 = vpop.f32.mrf.mxu0
        %1327 = vmatprep.mubr.f32.mxu0 0.0
        %1328 = vmatmul.mubr.f32.gmra.mxu0 %v1256
        %v1329 = vpop.f32.mrf.mxu0
        %v1330 = vadd.f32 0.0, %v1329
        %v1331 = vpop.f32.mrf.mxu0
        %1332 = vdwg.mxu0
        %v1333 = vadd.f32 %v1052, %v1325
        %v1334 = vadd.f32 %v1057, %v1330
        %s1335 = scalar_lea.vmem %s363, 24 [#allocation5]
        %v1336 = vld [vmem:[%s1335] sm:$0xff]
        %s1337 = scalar_lea.vmem %s372, 24 [#allocation7]
        %v1338 = vld [vmem:[%s1337] sm:$0xff]
        %1339 = vrot.lane.b32.xlu0 %v510, 104
        %v1340 = vpop.permute.xlu0 %1339
        %1341 = vrot.lane.b32.xlu0 %v515, 104
        %v1342 = vpop.permute.xlu0 %1341
        %v1343 = vsel %vm520, %v1340, 0
        %v1345 = vsel %vm520, %v1342, 0
        %1347 = vmatprep.subr.mxu0 0.0
        %1348 = vmatpush1.msra.mxu0 0.0
        %1349 = vmatprep.subr.mxu0 0.0
        %1350 = vmatpush1.msra.mxu0 0.0
        %1351 = vmatprep.subr.mxu0 0.0
        %1352 = vmatpush1.msra.mxu0 0.0
        %1353 = vmatprep.subr.mxu0 0.0
        %1354 = vmatpush1.msra.mxu0 0.0
        %1355 = vmatprep.subr.mxu0 0.0
        %1356 = vmatpush1.msra.mxu0 0.0
        %1357 = vmatprep.subr.mxu0 0.0
        %1358 = vmatpush1.msra.mxu0 0.0
        %1359 = vmatprep.subr.mxu0 0.0
        %1360 = vmatpush1.msra.mxu0 0.0
        %1361 = vmatprep.subr.mxu0 0.0
        %1362 = vmatpush1.msra.mxu0 0.0
        %1363 = vmatprep.subr.mxu0 0.0
        %1364 = vmatpush1.msra.mxu0 0.0
        %1365 = vmatprep.subr.mxu0 0.0
        %1366 = vmatpush1.msra.mxu0 0.0
        %1367 = vmatprep.subr.mxu0 0.0
        %1368 = vmatpush1.msra.mxu0 0.0
        %1369 = vmatprep.subr.mxu0 0.0
        %1370 = vmatpush1.msra.mxu0 0.0
        %1371 = vmatprep.subr.mxu0 0.0
        %1372 = vmatpush1.msra.mxu0 0.0
        %1373 = vmatprep.subr.mxu0 0.0
        %1374 = vmatpush1.msra.mxu0 0.0
        %1375 = vmatprep.subr.mxu0 0.0
        %1376 = vmatpush1.msra.mxu0 0.0
        %1377 = vmatprep.subr.mxu0 0.0
        %1378 = vmatpush1.msra.mxu0 %v1336
        %1379 = vmatprep.subr.mxu0 0.0
        %1380 = vmatpush2.msra.mxu0 0.0
        %1381 = vmatprep.subr.mxu0 0.0
        %1382 = vmatpush2.msra.mxu0 0.0
        %1383 = vmatprep.subr.mxu0 0.0
        %1384 = vmatpush2.msra.mxu0 0.0
        %1385 = vmatprep.subr.mxu0 0.0
        %1386 = vmatpush2.msra.mxu0 0.0
        %1387 = vmatprep.subr.mxu0 0.0
        %1388 = vmatpush2.msra.mxu0 0.0
        %1389 = vmatprep.subr.mxu0 0.0
        %1390 = vmatpush2.msra.mxu0 0.0
        %1391 = vmatprep.subr.mxu0 0.0
        %1392 = vmatpush2.msra.mxu0 0.0
        %1393 = vmatprep.subr.mxu0 0.0
        %1394 = vmatpush2.msra.mxu0 0.0
        %1395 = vmatprep.subr.mxu0 0.0
        %1396 = vmatpush2.msra.mxu0 0.0
        %1397 = vmatprep.subr.mxu0 0.0
        %1398 = vmatpush2.msra.mxu0 0.0
        %1399 = vmatprep.subr.mxu0 0.0
        %1400 = vmatpush2.msra.mxu0 0.0
        %1401 = vmatprep.subr.mxu0 0.0
        %1402 = vmatpush2.msra.mxu0 0.0
        %1403 = vmatprep.subr.mxu0 0.0
        %1404 = vmatpush2.msra.mxu0 0.0
        %1405 = vmatprep.subr.mxu0 0.0
        %1406 = vmatpush2.msra.mxu0 0.0
        %1407 = vmatprep.subr.mxu0 0.0
        %1408 = vmatpush2.msra.mxu0 0.0
        %1409 = vmatprep.subr.mxu0 0.0
        %1410 = vmatpush2.msra.mxu0 0.0
        %1411 = vmatprep.mubr.f32.mxu0 0.0
        %1412 = vmatmul.mubr.f32.gmra.mxu0 %v1343
        %v1413 = vpop.f32.mrf.mxu0
        %v1414 = vadd.f32 0.0, %v1413
        %v1415 = vpop.f32.mrf.mxu0
        %1416 = vmatprep.mubr.f32.mxu0 0.0
        %1417 = vmatmul.mubr.f32.gmra.mxu0 %v1345
        %v1418 = vpop.f32.mrf.mxu0
        %v1419 = vadd.f32 0.0, %v1418
        %v1420 = vpop.f32.mrf.mxu0
        %1421 = vdwg.mxu0
        %v1422 = vsel %vm520, %v1414, -inf
        %1423 = vmax.xlane.f32.xlu0 %v1422
        %v1424 = vpop.xlane.xlu0 %1423
        %v1425 = vsel %vm520, %v1419, -inf
        %1426 = vmax.xlane.f32.xlu0 %v1425
        %v1427 = vpop.xlane.xlu0 %1426
        %v1428 = vsub.f32 %v1414, %v1424
        %v1429 = vsub.f32 %v1419, %v1427
        %v1430 = vmul.f32 %v1428, 1.442695
        %v1431 = vpow.pop %v1430
        %v1432 = vmul.f32 %v1429, 1.442695
        %v1433 = vpow.pop %v1432
        %v1434 = vsel %vm520, %v1431, 0.0
        %1435 = vadd.xlane.f32.xlu0 %v1434
        %v1436 = vpop.xlane.xlu0 %1435
        %v1437 = vsel %vm520, %v1433, 0.0
        %1438 = vadd.xlane.f32.xlu0 %v1437
        %v1439 = vpop.xlane.xlu0 %1438
        %v1440 = vrcp.pop %v1436
        %v1441 = vrcp.pop %v1439
        %v1442 = vmul.f32 %v1431, %v1440
        %v1443 = vmul.f32 %v1433, %v1441
        %v1445 = vsel %vm520, %v1442, 0
        %v1448 = vsel %vm520, %v1443, 0
        %1450 = vmatprep.subr.mxu0 0.0
        %1451 = vmatpush1.msra.mxu0 0.0
        %1452 = vmatprep.subr.mxu0 0.0
        %1453 = vmatpush1.msra.mxu0 0.0
        %1454 = vmatprep.subr.mxu0 0.0
        %1455 = vmatpush1.msra.mxu0 0.0
        %1456 = vmatprep.subr.mxu0 0.0
        %1457 = vmatpush1.msra.mxu0 0.0
        %1458 = vmatprep.subr.mxu0 0.0
        %1459 = vmatpush1.msra.mxu0 0.0
        %1460 = vmatprep.subr.mxu0 0.0
        %1461 = vmatpush1.msra.mxu0 0.0
        %1462 = vmatprep.subr.mxu0 0.0
        %1463 = vmatpush1.msra.mxu0 0.0
        %1464 = vmatprep.subr.mxu0 0.0
        %1465 = vmatpush1.msra.mxu0 0.0
        %1466 = vmatprep.subr.mxu0 0.0
        %1467 = vmatpush1.msra.mxu0 0.0
        %1468 = vmatprep.subr.mxu0 0.0
        %1469 = vmatpush1.msra.mxu0 0.0
        %1470 = vmatprep.subr.mxu0 0.0
        %1471 = vmatpush1.msra.mxu0 0.0
        %1472 = vmatprep.subr.mxu0 0.0
        %1473 = vmatpush1.msra.mxu0 0.0
        %1474 = vmatprep.subr.mxu0 0.0
        %1475 = vmatpush1.msra.mxu0 0.0
        %1476 = vmatprep.subr.mxu0 0.0
        %1477 = vmatpush1.msra.mxu0 0.0
        %1478 = vmatprep.subr.mxu0 0.0
        %1479 = vmatpush1.msra.mxu0 0.0
        %1480 = vmatprep.subr.mxu0 0.0
        %1481 = vmatpush1.msra.mxu0 %v1338
        %1482 = vmatprep.subr.mxu0 0.0
        %1483 = vmatpush2.msra.mxu0 0.0
        %1484 = vmatprep.subr.mxu0 0.0
        %1485 = vmatpush2.msra.mxu0 0.0
        %1486 = vmatprep.subr.mxu0 0.0
        %1487 = vmatpush2.msra.mxu0 0.0
        %1488 = vmatprep.subr.mxu0 0.0
        %1489 = vmatpush2.msra.mxu0 0.0
        %1490 = vmatprep.subr.mxu0 0.0
        %1491 = vmatpush2.msra.mxu0 0.0
        %1492 = vmatprep.subr.mxu0 0.0
        %1493 = vmatpush2.msra.mxu0 0.0
        %1494 = vmatprep.subr.mxu0 0.0
        %1495 = vmatpush2.msra.mxu0 0.0
        %1496 = vmatprep.subr.mxu0 0.0
        %1497 = vmatpush2.msra.mxu0 0.0
        %1498 = vmatprep.subr.mxu0 0.0
        %1499 = vmatpush2.msra.mxu0 0.0
        %1500 = vmatprep.subr.mxu0 0.0
        %1501 = vmatpush2.msra.mxu0 0.0
        %1502 = vmatprep.subr.mxu0 0.0
        %1503 = vmatpush2.msra.mxu0 0.0
        %1504 = vmatprep.subr.mxu0 0.0
        %1505 = vmatpush2.msra.mxu0 0.0
        %1506 = vmatprep.subr.mxu0 0.0
        %1507 = vmatpush2.msra.mxu0 0.0
        %1508 = vmatprep.subr.mxu0 0.0
        %1509 = vmatpush2.msra.mxu0 0.0
        %1510 = vmatprep.subr.mxu0 0.0
        %1511 = vmatpush2.msra.mxu0 0.0
        %1512 = vmatprep.subr.mxu0 0.0
        %1513 = vmatpush2.msra.mxu0 0.0
        %1514 = vmatprep.mubr.f32.mxu0 0.0
        %1515 = vmatmul.mubr.f32.gmra.mxu0 %v1445
        %v1516 = vpop.f32.mrf.mxu0
        %v1517 = vadd.f32 0.0, %v1516
        %v1518 = vpop.f32.mrf.mxu0
        %1519 = vmatprep.mubr.f32.mxu0 0.0
        %1520 = vmatmul.mubr.f32.gmra.mxu0 %v1448
        %v1521 = vpop.f32.mrf.mxu0
        %v1522 = vadd.f32 0.0, %v1521
        %v1523 = vpop.f32.mrf.mxu0
        %1524 = vdwg.mxu0
        %s1525 = scalar_lea.vmem [#allocation10], 24
        %v1526 = vld [vmem:[%s1525] sm:$0xff]
        %v1528 = vsel %vm520, %v1517, 0
        %v1531 = vsel %vm520, %v1522, 0
        %1533 = vmatprep.subr.mxu0 0.0
        %1534 = vmatpush1.msra.mxu0 0.0
        %1535 = vmatprep.subr.mxu0 0.0
        %1536 = vmatpush1.msra.mxu0 0.0
        %1537 = vmatprep.subr.mxu0 0.0
        %1538 = vmatpush1.msra.mxu0 0.0
        %1539 = vmatprep.subr.mxu0 0.0
        %1540 = vmatpush1.msra.mxu0 0.0
        %1541 = vmatprep.subr.mxu0 0.0
        %1542 = vmatpush1.msra.mxu0 0.0
        %1543 = vmatprep.subr.mxu0 0.0
        %1544 = vmatpush1.msra.mxu0 0.0
        %1545 = vmatprep.subr.mxu0 0.0
        %1546 = vmatpush1.msra.mxu0 0.0
        %1547 = vmatprep.subr.mxu0 0.0
        %1548 = vmatpush1.msra.mxu0 0.0
        %1549 = vmatprep.subr.mxu0 0.0
        %1550 = vmatpush1.msra.mxu0 0.0
        %1551 = vmatprep.subr.mxu0 0.0
        %1552 = vmatpush1.msra.mxu0 0.0
        %1553 = vmatprep.subr.mxu0 0.0
        %1554 = vmatpush1.msra.mxu0 0.0
        %1555 = vmatprep.subr.mxu0 0.0
        %1556 = vmatpush1.msra.mxu0 0.0
        %1557 = vmatprep.subr.mxu0 0.0
        %1558 = vmatpush1.msra.mxu0 0.0
        %1559 = vmatprep.subr.mxu0 0.0
        %1560 = vmatpush1.msra.mxu0 0.0
        %1561 = vmatprep.subr.mxu0 0.0
        %1562 = vmatpush1.msra.mxu0 0.0
        %1563 = vmatprep.subr.mxu0 0.0
        %1564 = vmatpush1.msra.mxu0 %v1526
        %1565 = vmatprep.subr.mxu0 0.0
        %1566 = vmatpush2.msra.mxu0 0.0
        %1567 = vmatprep.subr.mxu0 0.0
        %1568 = vmatpush2.msra.mxu0 0.0
        %1569 = vmatprep.subr.mxu0 0.0
        %1570 = vmatpush2.msra.mxu0 0.0
        %1571 = vmatprep.subr.mxu0 0.0
        %1572 = vmatpush2.msra.mxu0 0.0
        %1573 = vmatprep.subr.mxu0 0.0
        %1574 = vmatpush2.msra.mxu0 0.0
        %1575 = vmatprep.subr.mxu0 0.0
        %1576 = vmatpush2.msra.mxu0 0.0
        %1577 = vmatprep.subr.mxu0 0.0
        %1578 = vmatpush2.msra.mxu0 0.0
        %1579 = vmatprep.subr.mxu0 0.0
        %1580 = vmatpush2.msra.mxu0 0.0
        %1581 = vmatprep.subr.mxu0 0.0
        %1582 = vmatpush2.msra.mxu0 0.0
        %1583 = vmatprep.subr.mxu0 0.0
        %1584 = vmatpush2.msra.mxu0 0.0
        %1585 = vmatprep.subr.mxu0 0.0
        %1586 = vmatpush2.msra.mxu0 0.0
        %1587 = vmatprep.subr.mxu0 0.0
        %1588 = vmatpush2.msra.mxu0 0.0
        %1589 = vmatprep.subr.mxu0 0.0
        %1590 = vmatpush2.msra.mxu0 0.0
        %1591 = vmatprep.subr.mxu0 0.0
        %1592 = vmatpush2.msra.mxu0 0.0
        %1593 = vmatprep.subr.mxu0 0.0
        %1594 = vmatpush2.msra.mxu0 0.0
        %1595 = vmatprep.subr.mxu0 0.0
        %1596 = vmatpush2.msra.mxu0 0.0
        %1597 = vmatprep.mubr.f32.mxu0 0.0
        %1598 = vmatmul.mubr.f32.gmra.mxu0 %v1528
        %v1599 = vpop.f32.mrf.mxu0
        %v1600 = vadd.f32 0.0, %v1599
        %v1601 = vpop.f32.mrf.mxu0
        %1602 = vmatprep.mubr.f32.mxu0 0.0
        %1603 = vmatmul.mubr.f32.gmra.mxu0 %v1531
        %v1604 = vpop.f32.mrf.mxu0
        %v1605 = vadd.f32 0.0, %v1604
        %v1606 = vpop.f32.mrf.mxu0
        %1607 = vdwg.mxu0
        %v1608 = vadd.f32 %v1333, %v1600
        %v1609 = vadd.f32 %v1334, %v1605
        %v1610 = vld [vmem:[%s6] sm:$0x1]
        %v1612 = vlaneseq
        %v1613 = vshrl.u32 %v1612, 7
        %v1614 = vsub.s32 0, %v1613
        %v1615 = vrot.slane %v1610, %v1614
        %v1617 = vadd.f32 %v1608, %v1615
        %v1618 = vadd.f32 %v1609, %v1615
        %1619 = vst.msk [vmem:[%s420] sm:$0xff] %vm436, %v1617
        %1620 = vst.msk [vmem:[%s420 + $0x8] sm:$0xff] %vm436, %v1618
        %s1621 = sand.u32 %s214, 1
        %s1622 = scalar_lea.sflag [#allocation4], %s1621
        %s1623 = sand.u32 %s214, 1
        %s1624 = smul.addr %s1623, 16
        %s1625 = scalar_lea.vmem [#allocation11], %s1624
        // Predicated region
        $region69: #{tpu_custom_call.1} parent=47 // pred_check
          %p1626 = pneg %p224
        $region70: #{tpu_custom_call.1} parent=47 // pred_check_branch
          %1628 = sbr.rel (%p1626) target = $region72
        $region71: #{tpu_custom_call.1} parent=47 // pred_region
          %s1629 = smul.u32 2, %s33
          %s1631 = ssub.s32 256, 256
          %1632 = vsyncadd %s1622, %s1631
          %s1633 = smul.addr %s32, 2
          %s1634 = sadd.s32 %s1629, %s1633
          %s1635 = smul.addr %s1634, 128
          %s1636 = scalar_lea.hbm %s7, %s1635
          %s1637 = sshll.u32 %s1625, 4
          %s1638 = int_to_ptr.vmem [resolvable:$true] %s1637
          %1643 = dma.vmem_to_hbm [thread:$0]  %s1638, 256, %s1636, %s1622, 128, 128, 8
        $region72: #{tpu_custom_call.1} parent=47 // pred_fallthru
          _
      $region48: #{tpu_custom_call.1} parent=5 // pred_fallthru
        _
      %p1644 = scmp.le.s32.totalorder 2, %s23
      // Predicated region
      $region73: #{tpu_custom_call.1} parent=5 // pred_check
        %p1645 = pneg %p1644
      $region74: #{tpu_custom_call.1} parent=5 // pred_check_branch
        %1647 = sbr.rel (%p1645) target = $region76
      $region75: #{tpu_custom_call.1} parent=5 // pred_region
        %s1648 = ssub.s32 %s23, 2
        // Predicated region
        $region77: #{tpu_custom_call.1} parent=75 // pred_check
          %p1649 = pneg %p230
        $region78: #{tpu_custom_call.1} parent=75 // pred_check_branch
          %1651 = sbr.rel (%p1649) target = $region80
        $region79: #{tpu_custom_call.1} parent=75 // pred_region
          %s1652 = sand.u32 %s215, 1
          %s1653 = scalar_lea.sflag [#allocation4], %s1652
          %s1654 = sand.u32 %s215, 1
          %s1655 = smul.addr %s1654, 16
          %s1656 = scalar_lea.vmem [#allocation11], %s1655
          %1657 = dma.done %s1653, 256
        $region80: #{tpu_custom_call.1} parent=75 // pred_fallthru
          _
      $region76: #{tpu_custom_call.1} parent=5 // pred_fallthru
        _
    $region6: #{tpu_custom_call.1} parent=1 // loop_footer
      %s27 = sadd.s32 1, %s23
    $region7: #{tpu_custom_call.1} parent=1 // loop_footer_branch
      %22 = sbr.rel target = $region3
    $region8: #{tpu_custom_call.1} parent=1 // loop_exit
      _
    %1658 = vsyncpa [#allocation3], 1
    %s1659 = scalar_lea.sflag [#allocation3], 1
    %1660 = vsyncpa %s1659, 1
    %1661 = vsyncpa [#allocation6], 1
    %s1662 = scalar_lea.sflag [#allocation6], 1
    %1663 = vsyncpa %s1662, 1
    %1664 = vsyncpa [#allocation9], 1
    %1665 = vsyncpa [#allocation4], 1
    %s1666 = scalar_lea.sflag [#allocation4], 1
    %1667 = vsyncpa %s1666, 1

// kernel: tpu_custom_call.1
$region0: #{tpu_custom_call.1}
  #allocation0 [shape = 'u32[]', space=smem, size = 0x4, offset = 0x4, fixed_abs, tag = 'smem constant byte address 0x4 - core index']
  #allocation1 [shape = 'u32[144,128]{1,0:T(1,128)}', space=vmem, size = 0x12000, scoped, tag = 'internal scratch']
  %s0 = inlined_call_operand.hbm [shape: f32[2,16,32], index: 0, kind: input, shape index: {}]
  %s1 = inlined_call_operand.hbm [shape: f32[2,4,8,8], index: 1, kind: input, shape index: {}]
  %s2 = inlined_call_operand.hbm [shape: f32[2,4,8,8], index: 2, kind: input, shape index: {}]
  %s3 = inlined_call_operand.hbm [shape: f32[32,32], index: 3, kind: input, shape index: {}]
  %s4 = inlined_call_operand.vmem [shape: f32[1,32], index: 4, kind: input, shape index: {}]
  %s5 = inlined_call_operand.hbm [shape: f32[4,8,32], index: 5, kind: input, shape index: {}]
  %s6 = inlined_call_operand.vmem [shape: f32[1,32], index: 6, kind: input, shape index: {}]
  %s7 = inlined_call_operand.hbm [shape: f32[2,16,32], index: 7, kind: output, shape index: {}]
  %s8 = sld [smem:[#allocation0]]
  $region81: #{tpu_custom_call.1} parent=0
    _
  %s10 = ssub.s32 1, %s8
  %s11 = scalar_select 0, %s10, %s8
  $region1: #{tpu_custom_call.1} parent=0
    #allocation2 [shape = 'u8[16384]{0}', space=vmem, size = 0x4000, scoped, tag = 'input window, operand 0']
    #allocation3 [shape = 's32[2]{0}', space=sflag, size = 0x8, scoped, tag = 'scoped memory for tpu_custom_call.1']
    #allocation4 [shape = 's32[2]{0}', space=sflag, size = 0x8, scoped, tag = 'scoped memory for tpu_custom_call.1']
    #allocation5 [shape = 'u8[32768]{0}', space=vmem, size = 0x8000, scoped, tag = 'input window, operand 1']
    #allocation6 [shape = 's32[2]{0}', space=sflag, size = 0x8, scoped, tag = 'scoped memory for tpu_custom_call.1']
    #allocation7 [shape = 'u8[32768]{0}', space=vmem, size = 0x8000, scoped, tag = 'input window, operand 2']
    #allocation8 [shape = 'u8[16384]{0}', space=vmem, size = 0x4000, scoped, tag = 'input window, operand 3, single buffered']
    #allocation9 [shape = 's32[1]{0}', space=sflag, size = 0x4, scoped, tag = 'scoped memory for tpu_custom_call.1']
    #allocation10 [shape = 'u8[16384]{0}', space=vmem, size = 0x4000, scoped, tag = 'input window, operand 5, single buffered']
    #allocation11 [shape = 'u8[16384]{0}', space=vmem, size = 0x4000, scoped, tag = 'output window, operand 0']
    %12 = vsyncpa [#allocation3], 0
    %s13 = scalar_lea.sflag [#allocation3], 1
    %14 = vsyncpa %s13, 0
    %15 = vsyncpa [#allocation6], 0
    %s16 = scalar_lea.sflag [#allocation6], 1
    %17 = vsyncpa %s16, 0
    %18 = vsyncpa [#allocation9], 0
    %19 = vsyncpa [#allocation4], 0
    %s20 = scalar_lea.sflag [#allocation4], 1
    %21 = vsyncpa %s20, 0
    loop: start=0, step=1, limit=4
    $region2: #{tpu_custom_call.1} parent=1 // loop_pre_header
      _
    $region3: #{tpu_custom_call.1} parent=1 // loop_header
      %s23 = sphi 0, %s27
      %p24 = scmp.ge.s32.totalorder %s23, 4
      %s30 = sphi 0, %s42
      %s31 = sphi 0, %s38
      %s32 = sphi 0, %s30
      %s33 = sphi 0, %s31
      %s34 = sphi 0, %s32
      %s35 = sphi 0, %s33
      %s47 = sphi 0, %s49
      %s50 = sphi 0, %s47
      %s51 = sphi 0, %s50
      %s67 = sphi 0, %s51
      %s73 = sphi 0, %s75
      %s76 = sphi 0, %s73
      %s77 = sphi 0, %s76
      %s93 = sphi 0, %s77
      %s99 = sphi 0, %s101
      %s102 = sphi 0, %s99
      %s103 = sphi 0, %s102
      %s119 = sphi 0, %s103
      %s123 = sphi 0, %s123
      %s125 = sphi 0, %s123
      %s126 = sphi 0, %s125
      %s140 = sphi 0, %s126
      %s144 = sphi 0, %s144
      %s146 = sphi 0, %s144
      %s147 = sphi 0, %s146
      %s161 = sphi 0, %s147
      %s165 = sphi 0, %s165
      %s167 = sphi 0, %s165
      %s168 = sphi 0, %s167
      %s182 = sphi 0, %s168
      %s186 = sphi 0, %s186
      %s188 = sphi 0, %s186
      %s189 = sphi 0, %s188
      %s203 = sphi 0, %s189
      %s211 = sphi 0, %s213
      %s214 = sphi 0, %s211
      %s215 = sphi 0, %s214
      %s231 = sphi 0, %s215
    $region4: #{tpu_custom_call.1} parent=1 // loop_header_branch
      %26 = sbr.rel (%p24) target = $region8
    $region5: #{tpu_custom_call.1} parent=1 // loop_body
      %s28 = ssub.s32 %s23, 1
      %s29 = ssub.s32 %s23, 2
      %s36 = sadd.s32 1, %s31
      %p37 = scmp.ge.s32.totalorder %s36, 1
      %s38 = scalar_select %p37, 0, %s36
      %s39 = sadd.s32 1, %s30
      %s40 = scalar_select %p37, %s39, %s30
      %p41 = scmp.ge.s32.totalorder %s40, 2
      %s42 = scalar_select %p41, 0, %s40
      %s43 = ssub.s32 %s30, %s42
      %s44 = ssub.s32 %s31, %s38
      %s45 = sor.u32 %s43, %s44
      %p46 = scmp.eq.s32.totalorder %s45, 0
      %s48 = sadd.s32 %s47, 1
      %s49 = scalar_select %p46, %s47, %s48
      %p52 = pneg %p46
      %p53 = scmp.eq.s32.totalorder %s23, 1
      %p54 = por %p52, %p53
      %p55 = scmp.ne.s32.totalorder %s47, %s50
      %p56 = scmp.eq.s32.totalorder %s23, 0
      %p57 = por %p55, %p56
      %p58 = scmp.ne.s32.totalorder %s47, %s50
      %p59 = scmp.eq.s32.totalorder %s28, 1
      %p60 = por %p58, %p59
      %p61 = scmp.ne.s32.totalorder %s50, %s51
      %p62 = scmp.eq.s32.totalorder %s28, 0
      %p63 = por %p61, %p62
      %p64 = scmp.ne.s32.totalorder %s50, %s51
      %p65 = scmp.eq.s32.totalorder %s29, 1
      %p66 = por %p64, %p65
      %p68 = scmp.ne.s32.totalorder %s51, %s67
      %p69 = scmp.eq.s32.totalorder %s29, 0
      %p70 = por %p68, %p69
      %s71 = ssub.s32 %s30, %s42
      %p72 = scmp.eq.s32.totalorder %s71, 0
      %s74 = sadd.s32 %s73, 1
      %s75 = scalar_select %p72, %s73, %s74
      %p78 = pneg %p72
      %p79 = scmp.eq.s32.totalorder %s23, 1
      %p80 = por %p78, %p79
      %p81 = scmp.ne.s32.totalorder %s73, %s76
      %p82 = scmp.eq.s32.totalorder %s23, 0
      %p83 = por %p81, %p82
      %p84 = scmp.ne.s32.totalorder %s73, %s76
      %p85 = scmp.eq.s32.totalorder %s28, 1
      %p86 = por %p84, %p85
      %p87 = scmp.ne.s32.totalorder %s76, %s77
      %p88 = scmp.eq.s32.totalorder %s28, 0
      %p89 = por %p87, %p88
      %p90 = scmp.ne.s32.totalorder %s76, %s77
      %p91 = scmp.eq.s32.totalorder %s29, 1
      %p92 = por %p90, %p91
      %p94 = scmp.ne.s32.totalorder %s77, %s93
      %p95 = scmp.eq.s32.totalorder %s29, 0
      %p96 = por %p94, %p95
      %s97 = ssub.s32 %s30, %s42
      %p98 = scmp.eq.s32.totalorder %s97, 0
      %s100 = sadd.s32 %s99, 1
      %s101 = scalar_select %p98, %s99, %s100
      %p104 = pneg %p98
      %p105 = scmp.eq.s32.totalorder %s23, 1
      %p106 = por %p104, %p105
      %p107 = scmp.ne.s32.totalorder %s99, %s102
      %p108 = scmp.eq.s32.totalorder %s23, 0
      %p109 = por %p107, %p108
      %p110 = scmp.ne.s32.totalorder %s99, %s102
      %p111 = scmp.eq.s32.totalorder %s28, 1
      %p112 = por %p110, %p111
      %p113 = scmp.ne.s32.totalorder %s102, %s103
      %p114 = scmp.eq.s32.totalorder %s28, 0
      %p115 = por %p113, %p114
      %p116 = scmp.ne.s32.totalorder %s102, %s103
      %p117 = scmp.eq.s32.totalorder %s29, 1
      %p118 = por %p116, %p117
      %p120 = scmp.ne.s32.totalorder %s103, %s119
      %p121 = scmp.eq.s32.totalorder %s29, 0
      %p122 = por %p120, %p121
      %s124 = sadd.s32 %s123, 1
      %p127 = scmp.eq.s32.totalorder %s23, 1
      %p128 = scmp.ne.s32.totalorder %s123, %s125
      %p129 = scmp.eq.s32.totalorder %s23, 0
      %p130 = por %p128, %p129
      %p131 = scmp.ne.s32.totalorder %s123, %s125
      %p132 = scmp.eq.s32.totalorder %s28, 1
      %p133 = por %p131, %p132
      %p134 = scmp.ne.s32.totalorder %s125, %s126
      %p135 = scmp.eq.s32.totalorder %s28, 0
      %p136 = por %p134, %p135
      %p137 = scmp.ne.s32.totalorder %s125, %s126
      %p138 = scmp.eq.s32.totalorder %s29, 1
      %p139 = por %p137, %p138
      %p141 = scmp.ne.s32.totalorder %s126, %s140
      %p142 = scmp.eq.s32.totalorder %s29, 0
      %p143 = por %p141, %p142
      %s145 = sadd.s32 %s144, 1
      %p148 = scmp.eq.s32.totalorder %s23, 1
      %p149 = scmp.ne.s32.totalorder %s144, %s146
      %p150 = scmp.eq.s32.totalorder %s23, 0
      %p151 = por %p149, %p150
      %p152 = scmp.ne.s32.totalorder %s144, %s146
      %p153 = scmp.eq.s32.totalorder %s28, 1
      %p154 = por %p152, %p153
      %p155 = scmp.ne.s32.totalorder %s146, %s147
      %p156 = scmp.eq.s32.totalorder %s28, 0
      %p157 = por %p155, %p156
      %p158 = scmp.ne.s32.totalorder %s146, %s147
      %p159 = scmp.eq.s32.totalorder %s29, 1
      %p160 = por %p158, %p159
      %p162 = scmp.ne.s32.totalorder %s147, %s161
      %p163 = scmp.eq.s32.totalorder %s29, 0
      %p164 = por %p162, %p163
      %s166 = sadd.s32 %s165, 1
      %p169 = scmp.eq.s32.totalorder %s23, 1
      %p170 = scmp.ne.s32.totalorder %s165, %s167
      %p171 = scmp.eq.s32.totalorder %s23, 0
      %p172 = por %p170, %p171
      %p173 = scmp.ne.s32.totalorder %s165, %s167
      %p174 = scmp.eq.s32.totalorder %s28, 1
      %p175 = por %p173, %p174
      %p176 = scmp.ne.s32.totalorder %s167, %s168
      %p177 = scmp.eq.s32.totalorder %s28, 0
      %p178 = por %p176, %p177
      %p179 = scmp.ne.s32.totalorder %s167, %s168
      %p180 = scmp.eq.s32.totalorder %s29, 1
      %p181 = por %p179, %p180
      %p183 = scmp.ne.s32.totalorder %s168, %s182
      %p184 = scmp.eq.s32.totalorder %s29, 0
      %p185 = por %p183, %p184
      %s187 = sadd.s32 %s186, 1
      %p190 = scmp.eq.s32.totalorder %s23, 1
      %p191 = scmp.ne.s32.totalorder %s186, %s188
      %p192 = scmp.eq.s32.totalorder %s23, 0
      %p193 = por %p191, %p192
      %p194 = scmp.ne.s32.totalorder %s186, %s188
      %p195 = scmp.eq.s32.totalorder %s28, 1
      %p196 = por %p194, %p195
      %p197 = scmp.ne.s32.totalorder %s188, %s189
      %p198 = scmp.eq.s32.totalorder %s28, 0
      %p199 = por %p197, %p198
      %p200 = scmp.ne.s32.totalorder %s188, %s189
      %p201 = scmp.eq.s32.totalorder %s29, 1
      %p202 = por %p200, %p201
      %p204 = scmp.ne.s32.totalorder %s189, %s203
      %p205 = scmp.eq.s32.totalorder %s29, 0
      %p206 = por %p204, %p205
      %s207 = ssub.s32 %s30, %s42
      %s208 = ssub.s32 %s31, %s38
      %s209 = sor.u32 %s207, %s208
      %p210 = scmp.eq.s32.totalorder %s209, 0
      %s212 = sadd.s32 %s211, 1
      %s213 = scalar_select %p210, %s211, %s212
      %p216 = pneg %p210
      %p217 = scmp.eq.s32.totalorder %s23, 1
      %p218 = por %p216, %p217
      %p219 = scmp.ne.s32.totalorder %s211, %s214
      %p220 = scmp.eq.s32.totalorder %s23, 0
      %p221 = por %p219, %p220
      %p222 = scmp.ne.s32.totalorder %s211, %s214
      %p223 = scmp.eq.s32.totalorder %s28, 1
      %p224 = por %p222, %p223
      %p225 = scmp.ne.s32.totalorder %s214, %s215
      %p226 = scmp.eq.s32.totalorder %s28, 0
      %p227 = por %p225, %p226
      %p228 = scmp.ne.s32.totalorder %s214, %s215
      %p229 = scmp.eq.s32.totalorder %s29, 1
      %p230 = por %p228, %p229
      %p232 = scmp.ne.s32.totalorder %s215, %s231
      %p233 = scmp.eq.s32.totalorder %s29, 0
      %p234 = por %p232, %p233
      %p235 = scmp.le.s32.totalorder 1, %s23
      %p236 = scmp.lt.s32.totalorder %s23, 3
      %p237 = pnand %p235, %p236
      %p238 = pneg %p237
      // Predicated region
      $region9: #{tpu_custom_call.1} parent=5 // pred_check
        _
      $region10: #{tpu_custom_call.1} parent=5 // pred_check_branch
        %240 = sbr.rel (%p237) target = $region12
      $region11: #{tpu_custom_call.1} parent=5 // pred_region
        %s241 = ssub.s32 %s23, 1
        // Predicated region
        $region13: #{tpu_custom_call.1} parent=11 // pred_check
          %p242 = pneg %p136
        $region14: #{tpu_custom_call.1} parent=11 // pred_check_branch
          %244 = sbr.rel (%p242) target = $region16
        $region15: #{tpu_custom_call.1} parent=11 // pred_region
          %s246 = ssub.s32 512, 512
          %247 = vsyncadd [#allocation9], %s246
          %s248 = sshll.u32 [#allocation8], 4
          %s249 = int_to_ptr.vmem [resolvable:$true] %s248
          %254 = dma.hbm_to_vmem [thread:$0]  %s3, 512, %s249, [#allocation9], 128, 128, 8
        $region16: #{tpu_custom_call.1} parent=11 // pred_fallthru
          _
        // Predicated region
        $region17: #{tpu_custom_call.1} parent=11 // pred_check
          %p255 = pneg %p157
        $region18: #{tpu_custom_call.1} parent=11 // pred_check_branch
          %257 = sbr.rel (%p255) target = $region20
        $region19: #{tpu_custom_call.1} parent=11 // pred_region
          _
        $region20: #{tpu_custom_call.1} parent=11 // pred_fallthru
          _
        // Predicated region
        $region21: #{tpu_custom_call.1} parent=11 // pred_check
          %p258 = pneg %p178
        $region22: #{tpu_custom_call.1} parent=11 // pred_check_branch
          %260 = sbr.rel (%p258) target = $region24
        $region23: #{tpu_custom_call.1} parent=11 // pred_region
          %s262 = ssub.s32 512, 512
          %263 = vsyncadd [#allocation9], %s262
          %s264 = sshll.u32 [#allocation10], 4
          %s265 = int_to_ptr.vmem [resolvable:$true] %s264
          %270 = dma.hbm_to_vmem [thread:$0]  %s5, 512, %s265, [#allocation9], 128, 128, 8
        $region24: #{tpu_custom_call.1} parent=11 // pred_fallthru
          _
        // Predicated region
        $region25: #{tpu_custom_call.1} parent=11 // pred_check
          %p271 = pneg %p199
        $region26: #{tpu_custom_call.1} parent=11 // pred_check_branch
          %273 = sbr.rel (%p271) target = $region28
        $region27: #{tpu_custom_call.1} parent=11 // pred_region
          _
        $region28: #{tpu_custom_call.1} parent=11 // pred_fallthru
          _
      $region12: #{tpu_custom_call.1} parent=5 // pred_fallthru
        _
      %p274 = scmp.lt.s32.totalorder %s23, 2
      // Predicated region
      $region29: #{tpu_custom_call.1} parent=5 // pred_check
        %p275 = pneg %p274
      $region30: #{tpu_custom_call.1} parent=5 // pred_check_branch
        %277 = sbr.rel (%p275) target = $region32
      $region31: #{tpu_custom_call.1} parent=5 // pred_region
        // Predicated region
        $region33: #{tpu_custom_call.1} parent=31 // pred_check
          %p278 = pneg %p57
        $region34: #{tpu_custom_call.1} parent=31 // pred_check_branch
          %280 = sbr.rel (%p278) target = $region36
        $region35: #{tpu_custom_call.1} parent=31 // pred_region
          %s281 = sand.u32 %s47, 1
          %s282 = scalar_lea.sflag [#allocation3], %s281
          %s283 = sand.u32 %s47, 1
          %s284 = smul.addr %s283, 16
          %s285 = scalar_lea.vmem [#allocation2], %s284
          %s286 = smul.u32 2, %s31
          %s288 = ssub.s32 256, 256
          %289 = vsyncadd %s282, %s288
          %s290 = smul.addr %s30, 2
          %s291 = sadd.s32 %s286, %s290
          %s292 = smul.addr %s291, 128
          %s293 = scalar_lea.hbm %s0, %s292
          %s294 = sshll.u32 %s285, 4
          %s295 = int_to_ptr.vmem [resolvable:$true] %s294
          %300 = dma.hbm_to_vmem [thread:$0]  %s293, 256, %s295, %s282, 128, 128, 8
        $region36: #{tpu_custom_call.1} parent=31 // pred_fallthru
          _
        // Predicated region
        $region37: #{tpu_custom_call.1} parent=31 // pred_check
          %p301 = pneg %p83
        $region38: #{tpu_custom_call.1} parent=31 // pred_check_branch
          %303 = sbr.rel (%p301) target = $region40
        $region39: #{tpu_custom_call.1} parent=31 // pred_region
          %s304 = sand.u32 %s23, 1
          %s305 = scalar_lea.sflag [#allocation6], %s304
          %s306 = sand.u32 %s73, 1
          %s307 = smul.addr %s306, 32
          %s308 = scalar_lea.vmem [#allocation5], %s307
          %s310 = ssub.s32 512, 512
          %311 = vsyncadd %s305, %s310
          %s312 = smul.addr %s30, 4
          %s313 = smul.addr %s312, 128
          %s314 = scalar_lea.hbm %s1, %s313
          %s315 = sshll.u32 %s308, 4
          %s316 = int_to_ptr.vmem [resolvable:$true] %s315
          %321 = dma.hbm_to_vmem [thread:$0]  %s314, 512, %s316, %s305, 128, 128, 8
        $region40: #{tpu_custom_call.1} parent=31 // pred_fallthru
          _
        // Predicated region
        $region41: #{tpu_custom_call.1} parent=31 // pred_check
          %p322 = pneg %p109
        $region42: #{tpu_custom_call.1} parent=31 // pred_check_branch
          %324 = sbr.rel (%p322) target = $region44
        $region43: #{tpu_custom_call.1} parent=31 // pred_region
          %s325 = sand.u32 %s23, 1
          %s326 = scalar_lea.sflag [#allocation6], %s325
          %s327 = sand.u32 %s99, 1
          %s328 = smul.addr %s327, 32
          %s329 = scalar_lea.vmem [#allocation7], %s328
          %s331 = ssub.s32 512, 512
          %332 = vsyncadd %s326, %s331
          %s333 = smul.addr %s30, 4
          %s334 = smul.addr %s333, 128
          %s335 = scalar_lea.hbm %s2, %s334
          %s336 = sshll.u32 %s329, 4
          %s337 = int_to_ptr.vmem [resolvable:$true] %s336
          %342 = dma.hbm_to_vmem [thread:$0]  %s335, 512, %s337, %s326, 128, 128, 8
        $region44: #{tpu_custom_call.1} parent=31 // pred_fallthru
          _
      $region32: #{tpu_custom_call.1} parent=5 // pred_fallthru
        _
      %p343 = scmp.le.s32.totalorder 1, %s23
      %p344 = scmp.lt.s32.totalorder %s23, 3
      %p345 = pnand %p343, %p344
      %p346 = pneg %p345
      // Predicated region
      $region45: #{tpu_custom_call.1} parent=5 // pred_check
        _
      $region46: #{tpu_custom_call.1} parent=5 // pred_check_branch
        %348 = sbr.rel (%p345) target = $region48
      $region47: #{tpu_custom_call.1} parent=5 // pred_region
        %s349 = ssub.s32 %s23, 1
        %s350 = sand.u32 %s50, 1
        %s351 = scalar_lea.sflag [#allocation3], %s350
        %s352 = sand.u32 %s50, 1
        %s353 = smul.addr %s352, 16
        %s354 = scalar_lea.vmem [#allocation2], %s353
        // Predicated region
        $region49: #{tpu_custom_call.1} parent=47 // pred_check
          %p355 = pneg %p63
        $region50: #{tpu_custom_call.1} parent=47 // pred_check_branch
          %357 = sbr.rel (%p355) target = $region52
        $region51: #{tpu_custom_call.1} parent=47 // pred_region
          %358 = dma.done %s351, 256
        $region52: #{tpu_custom_call.1} parent=47 // pred_fallthru
          _
        %s359 = sand.u32 %s28, 1
        %s360 = scalar_lea.sflag [#allocation6], %s359
        %s361 = sand.u32 %s76, 1
        %s362 = smul.addr %s361, 32
        %s363 = scalar_lea.vmem [#allocation5], %s362
        // Predicated region
        $region53: #{tpu_custom_call.1} parent=47 // pred_check
          %p364 = pneg %p89
        $region54: #{tpu_custom_call.1} parent=47 // pred_check_branch
          %366 = sbr.rel (%p364) target = $region56
        $region55: #{tpu_custom_call.1} parent=47 // pred_region
          %367 = dma.done %s360, 512
        $region56: #{tpu_custom_call.1} parent=47 // pred_fallthru
          _
        %s368 = sand.u32 %s28, 1
        %s369 = scalar_lea.sflag [#allocation6], %s368
        %s370 = sand.u32 %s102, 1
        %s371 = smul.addr %s370, 32
        %s372 = scalar_lea.vmem [#allocation7], %s371
        // Predicated region
        $region57: #{tpu_custom_call.1} parent=47 // pred_check
          %p373 = pneg %p115
        $region58: #{tpu_custom_call.1} parent=47 // pred_check_branch
          %375 = sbr.rel (%p373) target = $region60
        $region59: #{tpu_custom_call.1} parent=47 // pred_region
          %376 = dma.done %s369, 512
        $region60: #{tpu_custom_call.1} parent=47 // pred_fallthru
          _
        // Predicated region
        $region61: #{tpu_custom_call.1} parent=47 // pred_check
          %p377 = pneg %p136
        $region62: #{tpu_custom_call.1} parent=47 // pred_check_branch
          %379 = sbr.rel (%p377) target = $region64
        $region63: #{tpu_custom_call.1} parent=47 // pred_region
          %380 = dma.done [#allocation9], 512
        $region64: #{tpu_custom_call.1} parent=47 // pred_fallthru
          _
        // Predicated region
        $region65: #{tpu_custom_call.1} parent=47 // pred_check
          %p381 = pneg %p178
        $region66: #{tpu_custom_call.1} parent=47 // pred_check_branch
          %383 = sbr.rel (%p381) target = $region68
        $region67: #{tpu_custom_call.1} parent=47 // pred_region
          %384 = dma.done [#allocation9], 512
        $region68: #{tpu_custom_call.1} parent=47 // pred_fallthru
          _
        %s385 = sand.u32 %s50, 1
        %s386 = scalar_lea.sflag [#allocation3], %s385
        %s387 = sand.u32 %s50, 1
        %s388 = smul.addr %s387, 16
        %s389 = scalar_lea.vmem [#allocation2], %s388
        %p390 = pneg %p63
        %p391 = pneg %p60
        %s392 = sand.u32 %s28, 1
        %s393 = scalar_lea.sflag [#allocation6], %s392
        %s394 = sand.u32 %s76, 1
        %s395 = smul.addr %s394, 32
        %s396 = scalar_lea.vmem [#allocation5], %s395
        %p397 = pneg %p89
        %p398 = pneg %p86
        %s399 = sand.u32 %s28, 1
        %s400 = scalar_lea.sflag [#allocation6], %s399
        %s401 = sand.u32 %s102, 1
        %s402 = smul.addr %s401, 32
        %s403 = scalar_lea.vmem [#allocation7], %s402
        %p404 = pneg %p115
        %p405 = pneg %p112
        %p406 = pneg %p136
        %p407 = pneg %p133
        %p408 = pneg %p157
        %p409 = pneg %p154
        %p410 = pneg %p178
        %p411 = pneg %p175
        %p412 = pneg %p199
        %p413 = pneg %p196
        %p414 = pneg %p227
        %p415 = pneg %p224
        %s416 = sand.u32 %s214, 1
        %s417 = scalar_lea.sflag [#allocation4], %s416
        %s418 = sand.u32 %s214, 1
        %s419 = smul.addr %s418, 16
        %s420 = scalar_lea.vmem [#allocation11], %s419
        %s421 = smul.u32 2, %s33
        %s422 = smul.u32 2, %s33
        %v423 = vld [vmem:[%s354] sm:$0xff]
        %v424 = vld [vmem:[%s354 + $0x8] sm:$0xff]
        %v425 = vld [vmem:[#allocation8] sm:$0xff]
        %v426 = vld [vmem:[#allocation8 + $0x8] sm:$0xff]
        %v427 = vld [vmem:[#allocation8 + $0x10] sm:$0xff]
        %v428 = vld [vmem:[#allocation8 + $0x18] sm:$0xff]
        %v429 = vld [vmem:[%s4] sm:$0x1]
        %v431 = vlaneseq
        %v432 = vshrl.u32 %v431, 7
        %v433 = vsub.s32 0, %v432
        %v434 = vrot.slane %v429, %v433
        %vm436 = vcmask 261120
        %v438 = vsel %vm436, %v423, 0
        %v441 = vsel %vm436, %v424, 0
        %443 = vmatprep.subr.mxu0 0.0
        %444 = vmatpush1.msra.mxu0 0.0
        %445 = vmatprep.subr.mxu0 0.0
        %446 = vmatpush1.msra.mxu0 0.0
        %447 = vmatprep.subr.mxu0 0.0
        %448 = vmatpush1.msra.mxu0 0.0
        %449 = vmatprep.subr.mxu0 0.0
        %450 = vmatpush1.msra.mxu0 0.0
        %451 = vmatprep.subr.mxu0 0.0
        %452 = vmatpush1.msra.mxu0 0.0
        %453 = vmatprep.subr.mxu0 0.0
        %454 = vmatpush1.msra.mxu0 0.0
        %455 = vmatprep.subr.mxu0 0.0
        %456 = vmatpush1.msra.mxu0 0.0
        %457 = vmatprep.subr.mxu0 0.0
        %458 = vmatpush1.msra.mxu0 0.0
        %459 = vmatprep.subr.mxu0 0.0
        %460 = vmatpush1.msra.mxu0 0.0
        %461 = vmatprep.subr.mxu0 0.0
        %462 = vmatpush1.msra.mxu0 0.0
        %463 = vmatprep.subr.mxu0 0.0
        %464 = vmatpush1.msra.mxu0 0.0
        %465 = vmatprep.subr.mxu0 0.0
        %466 = vmatpush1.msra.mxu0 0.0
        %467 = vmatprep.subr.mxu0 0.0
        %468 = vmatpush1.msra.mxu0 %v428
        %469 = vmatprep.subr.mxu0 0.0
        %470 = vmatpush1.msra.mxu0 %v427
        %471 = vmatprep.subr.mxu0 0.0
        %472 = vmatpush1.msra.mxu0 %v426
        %473 = vmatprep.subr.mxu0 0.0
        %474 = vmatpush1.msra.mxu0 %v425
        %475 = vmatprep.subr.mxu0 0.0
        %476 = vmatpush2.msra.mxu0 0.0
        %477 = vmatprep.subr.mxu0 0.0
        %478 = vmatpush2.msra.mxu0 0.0
        %479 = vmatprep.subr.mxu0 0.0
        %480 = vmatpush2.msra.mxu0 0.0
        %481 = vmatprep.subr.mxu0 0.0
        %482 = vmatpush2.msra.mxu0 0.0
        %483 = vmatprep.subr.mxu0 0.0
        %484 = vmatpush2.msra.mxu0 0.0
        %485 = vmatprep.subr.mxu0 0.0
        %486 = vmatpush2.msra.mxu0 0.0
        %487 = vmatprep.subr.mxu0 0.0
        %488 = vmatpush2.msra.mxu0 0.0
        %489 = vmatprep.subr.mxu0 0.0
        %490 = vmatpush2.msra.mxu0 0.0
        %491 = vmatprep.subr.mxu0 0.0
        %492 = vmatpush2.msra.mxu0 0.0
        %493 = vmatprep.subr.mxu0 0.0
        %494 = vmatpush2.msra.mxu0 0.0
        %495 = vmatprep.subr.mxu0 0.0
        %496 = vmatpush2.msra.mxu0 0.0
        %497 = vmatprep.subr.mxu0 0.0
        %498 = vmatpush2.msra.mxu0 0.0
        %499 = vmatprep.subr.mxu0 0.0
        %500 = vmatpush2.msra.mxu0 0.0
        %501 = vmatprep.subr.mxu0 0.0
        %502 = vmatpush2.msra.mxu0 0.0
        %503 = vmatprep.subr.mxu0 0.0
        %504 = vmatpush2.msra.mxu0 0.0
        %505 = vmatprep.subr.mxu0 0.0
        %506 = vmatpush2.msra.mxu0 0.0
        %507 = vmatprep.mubr.f32.mxu0 0.0
        %508 = vmatmul.mubr.f32.gmra.mxu0 %v438
        %v509 = vpop.f32.mrf.mxu0
        %v510 = vadd.f32 %v434, %v509
        %v511 = vpop.f32.mrf.mxu0
        %512 = vmatprep.mubr.f32.mxu0 0.0
        %513 = vmatmul.mubr.f32.gmra.mxu0 %v441
        %v514 = vpop.f32.mrf.mxu0
        %v515 = vadd.f32 %v434, %v514
        %v516 = vpop.f32.mrf.mxu0
        %517 = vdwg.mxu0
        %v518 = vld [vmem:[%s363] sm:$0xff]
        %v519 = vld [vmem:[%s372] sm:$0xff]
        %vm520 = vcmask 64512
        %v522 = vsel %vm520, %v510, 0
        %v525 = vsel %vm520, %v515, 0
        %527 = vmatprep.subr.mxu0 0.0
        %528 = vmatpush1.msra.mxu0 0.0
        %529 = vmatprep.subr.mxu0 0.0
        %530 = vmatpush1.msra.mxu0 0.0
        %531 = vmatprep.subr.mxu0 0.0
        %532 = vmatpush1.msra.mxu0 0.0
        %533 = vmatprep.subr.mxu0 0.0
        %534 = vmatpush1.msra.mxu0 0.0
        %535 = vmatprep.subr.mxu0 0.0
        %536 = vmatpush1.msra.mxu0 0.0
        %537 = vmatprep.subr.mxu0 0.0
        %538 = vmatpush1.msra.mxu0 0.0
        %539 = vmatprep.subr.mxu0 0.0
        %540 = vmatpush1.msra.mxu0 0.0
        %541 = vmatprep.subr.mxu0 0.0
        %542 = vmatpush1.msra.mxu0 0.0
        %543 = vmatprep.subr.mxu0 0.0
        %544 = vmatpush1.msra.mxu0 0.0
        %545 = vmatprep.subr.mxu0 0.0
        %546 = vmatpush1.msra.mxu0 0.0
        %547 = vmatprep.subr.mxu0 0.0
        %548 = vmatpush1.msra.mxu0 0.0
        %549 = vmatprep.subr.mxu0 0.0
        %550 = vmatpush1.msra.mxu0 0.0
        %551 = vmatprep.subr.mxu0 0.0
        %552 = vmatpush1.msra.mxu0 0.0
        %553 = vmatprep.subr.mxu0 0.0
        %554 = vmatpush1.msra.mxu0 0.0
        %555 = vmatprep.subr.mxu0 0.0
        %556 = vmatpush1.msra.mxu0 0.0
        %557 = vmatprep.subr.mxu0 0.0
        %558 = vmatpush1.msra.mxu0 %v518
        %559 = vmatprep.subr.mxu0 0.0
        %560 = vmatpush2.msra.mxu0 0.0
        %561 = vmatprep.subr.mxu0 0.0
        %562 = vmatpush2.msra.mxu0 0.0
        %563 = vmatprep.subr.mxu0 0.0
        %564 = vmatpush2.msra.mxu0 0.0
        %565 = vmatprep.subr.mxu0 0.0
        %566 = vmatpush2.msra.mxu0 0.0
        %567 = vmatprep.subr.mxu0 0.0
        %568 = vmatpush2.msra.mxu0 0.0
        %569 = vmatprep.subr.mxu0 0.0
        %570 = vmatpush2.msra.mxu0 0.0
        %571 = vmatprep.subr.mxu0 0.0
        %572 = vmatpush2.msra.mxu0 0.0
        %573 = vmatprep.subr.mxu0 0.0
        %574 = vmatpush2.msra.mxu0 0.0
        %575 = vmatprep.subr.mxu0 0.0
        %576 = vmatpush2.msra.mxu0 0.0
        %577 = vmatprep.subr.mxu0 0.0
        %578 = vmatpush2.msra.mxu0 0.0
        %579 = vmatprep.subr.mxu0 0.0
        %580 = vmatpush2.msra.mxu0 0.0
        %581 = vmatprep.subr.mxu0 0.0
        %582 = vmatpush2.msra.mxu0 0.0
        %583 = vmatprep.subr.mxu0 0.0
        %584 = vmatpush2.msra.mxu0 0.0
        %585 = vmatprep.subr.mxu0 0.0
        %586 = vmatpush2.msra.mxu0 0.0
        %587 = vmatprep.subr.mxu0 0.0
        %588 = vmatpush2.msra.mxu0 0.0
        %589 = vmatprep.subr.mxu0 0.0
        %590 = vmatpush2.msra.mxu0 0.0
        %591 = vmatprep.mubr.f32.mxu0 0.0
        %592 = vmatmul.mubr.f32.gmra.mxu0 %v522
        %v593 = vpop.f32.mrf.mxu0
        %v594 = vadd.f32 0.0, %v593
        %v595 = vpop.f32.mrf.mxu0
        %596 = vmatprep.mubr.f32.mxu0 0.0
        %597 = vmatmul.mubr.f32.gmra.mxu0 %v525
        %v598 = vpop.f32.mrf.mxu0
        %v599 = vadd.f32 0.0, %v598
        %v600 = vpop.f32.mrf.mxu0
        %601 = vdwg.mxu0
        %v602 = vsel %vm520, %v594, -inf
        %603 = vmax.xlane.f32.xlu0 %v602
        %v604 = vpop.xlane.xlu0 %603
        %v605 = vsel %vm520, %v599, -inf
        %606 = vmax.xlane.f32.xlu0 %v605
        %v607 = vpop.xlane.xlu0 %606
        %v608 = vsub.f32 %v594, %v604
        %v609 = vsub.f32 %v599, %v607
        %v610 = vmul.f32 %v608, 1.442695
        %v611 = vpow.pop %v610
        %v612 = vmul.f32 %v609, 1.442695
        %v613 = vpow.pop %v612
        %v614 = vsel %vm520, %v611, 0.0
        %615 = vadd.xlane.f32.xlu0 %v614
        %v616 = vpop.xlane.xlu0 %615
        %v617 = vsel %vm520, %v613, 0.0
        %618 = vadd.xlane.f32.xlu0 %v617
        %v619 = vpop.xlane.xlu0 %618
        %v620 = vrcp.pop %v616
        %v621 = vrcp.pop %v619
        %v622 = vmul.f32 %v611, %v620
        %v623 = vmul.f32 %v613, %v621
        %v625 = vsel %vm520, %v622, 0
        %v628 = vsel %vm520, %v623, 0
        %630 = vmatprep.subr.mxu0 0.0
        %631 = vmatpush1.msra.mxu0 0.0
        %632 = vmatprep.subr.mxu0 0.0
        %633 = vmatpush1.msra.mxu0 0.0
        %634 = vmatprep.subr.mxu0 0.0
        %635 = vmatpush1.msra.mxu0 0.0
        %636 = vmatprep.subr.mxu0 0.0
        %637 = vmatpush1.msra.mxu0 0.0
        %638 = vmatprep.subr.mxu0 0.0
        %639 = vmatpush1.msra.mxu0 0.0
        %640 = vmatprep.subr.mxu0 0.0
        %641 = vmatpush1.msra.mxu0 0.0
        %642 = vmatprep.subr.mxu0 0.0
        %643 = vmatpush1.msra.mxu0 0.0
        %644 = vmatprep.subr.mxu0 0.0
        %645 = vmatpush1.msra.mxu0 0.0
        %646 = vmatprep.subr.mxu0 0.0
        %647 = vmatpush1.msra.mxu0 0.0
        %648 = vmatprep.subr.mxu0 0.0
        %649 = vmatpush1.msra.mxu0 0.0
        %650 = vmatprep.subr.mxu0 0.0
        %651 = vmatpush1.msra.mxu0 0.0
        %652 = vmatprep.subr.mxu0 0.0
        %653 = vmatpush1.msra.mxu0 0.0
        %654 = vmatprep.subr.mxu0 0.0
        %655 = vmatpush1.msra.mxu0 0.0
        %656 = vmatprep.subr.mxu0 0.0
        %657 = vmatpush1.msra.mxu0 0.0
        %658 = vmatprep.subr.mxu0 0.0
        %659 = vmatpush1.msra.mxu0 0.0
        %660 = vmatprep.subr.mxu0 0.0
        %661 = vmatpush1.msra.mxu0 %v519
        %662 = vmatprep.subr.mxu0 0.0
        %663 = vmatpush2.msra.mxu0 0.0
        %664 = vmatprep.subr.mxu0 0.0
        %665 = vmatpush2.msra.mxu0 0.0
        %666 = vmatprep.subr.mxu0 0.0
        %667 = vmatpush2.msra.mxu0 0.0
        %668 = vmatprep.subr.mxu0 0.0
        %669 = vmatpush2.msra.mxu0 0.0
        %670 = vmatprep.subr.mxu0 0.0
        %671 = vmatpush2.msra.mxu0 0.0
        %672 = vmatprep.subr.mxu0 0.0
        %673 = vmatpush2.msra.mxu0 0.0
        %674 = vmatprep.subr.mxu0 0.0
        %675 = vmatpush2.msra.mxu0 0.0
        %676 = vmatprep.subr.mxu0 0.0
        %677 = vmatpush2.msra.mxu0 0.0
        %678 = vmatprep.subr.mxu0 0.0
        %679 = vmatpush2.msra.mxu0 0.0
        %680 = vmatprep.subr.mxu0 0.0
        %681 = vmatpush2.msra.mxu0 0.0
        %682 = vmatprep.subr.mxu0 0.0
        %683 = vmatpush2.msra.mxu0 0.0
        %684 = vmatprep.subr.mxu0 0.0
        %685 = vmatpush2.msra.mxu0 0.0
        %686 = vmatprep.subr.mxu0 0.0
        %687 = vmatpush2.msra.mxu0 0.0
        %688 = vmatprep.subr.mxu0 0.0
        %689 = vmatpush2.msra.mxu0 0.0
        %690 = vmatprep.subr.mxu0 0.0
        %691 = vmatpush2.msra.mxu0 0.0
        %692 = vmatprep.subr.mxu0 0.0
        %693 = vmatpush2.msra.mxu0 0.0
        %694 = vmatprep.mubr.f32.mxu0 0.0
        %695 = vmatmul.mubr.f32.gmra.mxu0 %v625
        %v696 = vpop.f32.mrf.mxu0
        %v697 = vadd.f32 0.0, %v696
        %v698 = vpop.f32.mrf.mxu0
        %699 = vmatprep.mubr.f32.mxu0 0.0
        %700 = vmatmul.mubr.f32.gmra.mxu0 %v628
        %v701 = vpop.f32.mrf.mxu0
        %v702 = vadd.f32 0.0, %v701
        %v703 = vpop.f32.mrf.mxu0
        %704 = vdwg.mxu0
        %v705 = vld [vmem:[#allocation10] sm:$0xff]
        %s706 = scalar_lea.vmem %s363, 8 [#allocation5]
        %v707 = vld [vmem:[%s706] sm:$0xff]
        %s708 = scalar_lea.vmem %s372, 8 [#allocation7]
        %v709 = vld [vmem:[%s708] sm:$0xff]
        %710 = vrot.lane.b32.xlu0 %v510, 120
        %v711 = vpop.permute.xlu0 %710
        %712 = vrot.lane.b32.xlu0 %v515, 120
        %v713 = vpop.permute.xlu0 %712
        %v714 = vsel %vm520, %v711, 0
        %v716 = vsel %vm520, %v713, 0
        %718 = vmatprep.subr.mxu0 0.0
        %719 = vmatpush1.msra.mxu0 0.0
        %720 = vmatprep.subr.mxu0 0.0
        %721 = vmatpush1.msra.mxu0 0.0
        %722 = vmatprep.subr.mxu0 0.0
        %723 = vmatpush1.msra.mxu0 0.0
        %724 = vmatprep.subr.mxu0 0.0
        %725 = vmatpush1.msra.mxu0 0.0
        %726 = vmatprep.subr.mxu0 0.0
        %727 = vmatpush1.msra.mxu0 0.0
        %728 = vmatprep.subr.mxu0 0.0
        %729 = vmatpush1.msra.mxu0 0.0
        %730 = vmatprep.subr.mxu0 0.0
        %731 = vmatpush1.msra.mxu0 0.0
        %732 = vmatprep.subr.mxu0 0.0
        %733 = vmatpush1.msra.mxu0 0.0
        %734 = vmatprep.subr.mxu0 0.0
        %735 = vmatpush1.msra.mxu0 0.0
        %736 = vmatprep.subr.mxu0 0.0
        %737 = vmatpush1.msra.mxu0 0.0
        %738 = vmatprep.subr.mxu0 0.0
        %739 = vmatpush1.msra.mxu0 0.0
        %740 = vmatprep.subr.mxu0 0.0
        %741 = vmatpush1.msra.mxu0 0.0
        %742 = vmatprep.subr.mxu0 0.0
        %743 = vmatpush1.msra.mxu0 0.0
        %744 = vmatprep.subr.mxu0 0.0
        %745 = vmatpush1.msra.mxu0 0.0
        %746 = vmatprep.subr.mxu0 0.0
        %747 = vmatpush1.msra.mxu0 0.0
        %748 = vmatprep.subr.mxu0 0.0
        %749 = vmatpush1.msra.mxu0 %v707
        %750 = vmatprep.subr.mxu0 0.0
        %751 = vmatpush2.msra.mxu0 0.0
        %752 = vmatprep.subr.mxu0 0.0
        %753 = vmatpush2.msra.mxu0 0.0
        %754 = vmatprep.subr.mxu0 0.0
        %755 = vmatpush2.msra.mxu0 0.0
        %756 = vmatprep.subr.mxu0 0.0
        %757 = vmatpush2.msra.mxu0 0.0
        %758 = vmatprep.subr.mxu0 0.0
        %759 = vmatpush2.msra.mxu0 0.0
        %760 = vmatprep.subr.mxu0 0.0
        %761 = vmatpush2.msra.mxu0 0.0
        %762 = vmatprep.subr.mxu0 0.0
        %763 = vmatpush2.msra.mxu0 0.0
        %764 = vmatprep.subr.mxu0 0.0
        %765 = vmatpush2.msra.mxu0 0.0
        %766 = vmatprep.subr.mxu0 0.0
        %767 = vmatpush2.msra.mxu0 0.0
        %768 = vmatprep.subr.mxu0 0.0
        %769 = vmatpush2.msra.mxu0 0.0
        %770 = vmatprep.subr.mxu0 0.0
        %771 = vmatpush2.msra.mxu0 0.0
        %772 = vmatprep.subr.mxu0 0.0
        %773 = vmatpush2.msra.mxu0 0.0
        %774 = vmatprep.subr.mxu0 0.0
        %775 = vmatpush2.msra.mxu0 0.0
        %776 = vmatprep.subr.mxu0 0.0
        %777 = vmatpush2.msra.mxu0 0.0
        %778 = vmatprep.subr.mxu0 0.0
        %779 = vmatpush2.msra.mxu0 0.0
        %780 = vmatprep.subr.mxu0 0.0
        %781 = vmatpush2.msra.mxu0 0.0
        %782 = vmatprep.mubr.f32.mxu0 0.0
        %783 = vmatmul.mubr.f32.gmra.mxu0 %v714
        %v784 = vpop.f32.mrf.mxu0
        %v785 = vadd.f32 0.0, %v784
        %v786 = vpop.f32.mrf.mxu0
        %787 = vmatprep.mubr.f32.mxu0 0.0
        %788 = vmatmul.mubr.f32.gmra.mxu0 %v716
        %v789 = vpop.f32.mrf.mxu0
        %v790 = vadd.f32 0.0, %v789
        %v791 = vpop.f32.mrf.mxu0
        %792 = vdwg.mxu0
        %v793 = vsel %vm520, %v785, -inf
        %794 = vmax.xlane.f32.xlu0 %v793
        %v795 = vpop.xlane.xlu0 %794
        %v796 = vsel %vm520, %v790, -inf
        %797 = vmax.xlane.f32.xlu0 %v796
        %v798 = vpop.xlane.xlu0 %797
        %v799 = vsub.f32 %v785, %v795
        %v800 = vsub.f32 %v790, %v798
        %v801 = vmul.f32 %v799, 1.442695
        %v802 = vpow.pop %v801
        %v803 = vmul.f32 %v800, 1.442695
        %v804 = vpow.pop %v803
        %v805 = vsel %vm520, %v802, 0.0
        %806 = vadd.xlane.f32.xlu0 %v805
        %v807 = vpop.xlane.xlu0 %806
        %v808 = vsel %vm520, %v804, 0.0
        %809 = vadd.xlane.f32.xlu0 %v808
        %v810 = vpop.xlane.xlu0 %809
        %v811 = vrcp.pop %v807
        %v812 = vrcp.pop %v810
        %v813 = vmul.f32 %v802, %v811
        %v814 = vmul.f32 %v804, %v812
        %v816 = vsel %vm520, %v813, 0
        %v819 = vsel %vm520, %v814, 0
        %821 = vmatprep.subr.mxu0 0.0
        %822 = vmatpush1.msra.mxu0 0.0
        %823 = vmatprep.subr.mxu0 0.0
        %824 = vmatpush1.msra.mxu0 0.0
        %825 = vmatprep.subr.mxu0 0.0
        %826 = vmatpush1.msra.mxu0 0.0
        %827 = vmatprep.subr.mxu0 0.0
        %828 = vmatpush1.msra.mxu0 0.0
        %829 = vmatprep.subr.mxu0 0.0
        %830 = vmatpush1.msra.mxu0 0.0
        %831 = vmatprep.subr.mxu0 0.0
        %832 = vmatpush1.msra.mxu0 0.0
        %833 = vmatprep.subr.mxu0 0.0
        %834 = vmatpush1.msra.mxu0 0.0
        %835 = vmatprep.subr.mxu0 0.0
        %836 = vmatpush1.msra.mxu0 0.0
        %837 = vmatprep.subr.mxu0 0.0
        %838 = vmatpush1.msra.mxu0 0.0
        %839 = vmatprep.subr.mxu0 0.0
        %840 = vmatpush1.msra.mxu0 0.0
        %841 = vmatprep.subr.mxu0 0.0
        %842 = vmatpush1.msra.mxu0 0.0
        %843 = vmatprep.subr.mxu0 0.0
        %844 = vmatpush1.msra.mxu0 0.0
        %845 = vmatprep.subr.mxu0 0.0
        %846 = vmatpush1.msra.mxu0 0.0
        %847 = vmatprep.subr.mxu0 0.0
        %848 = vmatpush1.msra.mxu0 0.0
        %849 = vmatprep.subr.mxu0 0.0
        %850 = vmatpush1.msra.mxu0 0.0
        %851 = vmatprep.subr.mxu0 0.0
        %852 = vmatpush1.msra.mxu0 %v709
        %853 = vmatprep.subr.mxu0 0.0
        %854 = vmatpush2.msra.mxu0 0.0
        %855 = vmatprep.subr.mxu0 0.0
        %856 = vmatpush2.msra.mxu0 0.0
        %857 = vmatprep.subr.mxu0 0.0
        %858 = vmatpush2.msra.mxu0 0.0
        %859 = vmatprep.subr.mxu0 0.0
        %860 = vmatpush2.msra.mxu0 0.0
        %861 = vmatprep.subr.mxu0 0.0
        %862 = vmatpush2.msra.mxu0 0.0
        %863 = vmatprep.subr.mxu0 0.0
        %864 = vmatpush2.msra.mxu0 0.0
        %865 = vmatprep.subr.mxu0 0.0
        %866 = vmatpush2.msra.mxu0 0.0
        %867 = vmatprep.subr.mxu0 0.0
        %868 = vmatpush2.msra.mxu0 0.0
        %869 = vmatprep.subr.mxu0 0.0
        %870 = vmatpush2.msra.mxu0 0.0
        %871 = vmatprep.subr.mxu0 0.0
        %872 = vmatpush2.msra.mxu0 0.0
        %873 = vmatprep.subr.mxu0 0.0
        %874 = vmatpush2.msra.mxu0 0.0
        %875 = vmatprep.subr.mxu0 0.0
        %876 = vmatpush2.msra.mxu0 0.0
        %877 = vmatprep.subr.mxu0 0.0
        %878 = vmatpush2.msra.mxu0 0.0
        %879 = vmatprep.subr.mxu0 0.0
        %880 = vmatpush2.msra.mxu0 0.0
        %881 = vmatprep.subr.mxu0 0.0
        %882 = vmatpush2.msra.mxu0 0.0
        %883 = vmatprep.subr.mxu0 0.0
        %884 = vmatpush2.msra.mxu0 0.0
        %885 = vmatprep.mubr.f32.mxu0 0.0
        %886 = vmatmul.mubr.f32.gmra.mxu0 %v816
        %v887 = vpop.f32.mrf.mxu0
        %v888 = vadd.f32 0.0, %v887
        %v889 = vpop.f32.mrf.mxu0
        %890 = vmatprep.mubr.f32.mxu0 0.0
        %891 = vmatmul.mubr.f32.gmra.mxu0 %v819
        %v892 = vpop.f32.mrf.mxu0
        %v893 = vadd.f32 0.0, %v892
        %v894 = vpop.f32.mrf.mxu0
        %895 = vdwg.mxu0
        %s896 = scalar_lea.vmem [#allocation10], 8
        %v897 = vld [vmem:[%s896] sm:$0xff]
        %v899 = vsel %vm520, %v888, 0
        %v902 = vsel %vm520, %v893, 0
        %904 = vmatprep.subr.mxu0 0.0
        %905 = vmatpush1.msra.mxu0 0.0
        %906 = vmatprep.subr.mxu0 0.0
        %907 = vmatpush1.msra.mxu0 0.0
        %908 = vmatprep.subr.mxu0 0.0
        %909 = vmatpush1.msra.mxu0 0.0
        %910 = vmatprep.subr.mxu0 0.0
        %911 = vmatpush1.msra.mxu0 0.0
        %912 = vmatprep.subr.mxu0 0.0
        %913 = vmatpush1.msra.mxu0 0.0
        %914 = vmatprep.subr.mxu0 0.0
        %915 = vmatpush1.msra.mxu0 0.0
        %916 = vmatprep.subr.mxu0 0.0
        %917 = vmatpush1.msra.mxu0 0.0
        %918 = vmatprep.subr.mxu0 0.0
        %919 = vmatpush1.msra.mxu0 0.0
        %920 = vmatprep.subr.mxu0 0.0
        %921 = vmatpush1.msra.mxu0 0.0
        %922 = vmatprep.subr.mxu0 0.0
        %923 = vmatpush1.msra.mxu0 0.0
        %924 = vmatprep.subr.mxu0 0.0
        %925 = vmatpush1.msra.mxu0 0.0
        %926 = vmatprep.subr.mxu0 0.0
        %927 = vmatpush1.msra.mxu0 0.0
        %928 = vmatprep.subr.mxu0 0.0
        %929 = vmatpush1.msra.mxu0 0.0
        %930 = vmatprep.subr.mxu0 0.0
        %931 = vmatpush1.msra.mxu0 0.0
        %932 = vmatprep.subr.mxu0 0.0
        %933 = vmatpush1.msra.mxu0 0.0
        %934 = vmatprep.subr.mxu0 0.0
        %935 = vmatpush1.msra.mxu0 %v897
        %936 = vmatprep.subr.mxu0 0.0
        %937 = vmatpush2.msra.mxu0 0.0
        %938 = vmatprep.subr.mxu0 0.0
        %939 = vmatpush2.msra.mxu0 0.0
        %940 = vmatprep.subr.mxu0 0.0
        %941 = vmatpush2.msra.mxu0 0.0
        %942 = vmatprep.subr.mxu0 0.0
        %943 = vmatpush2.msra.mxu0 0.0
        %944 = vmatprep.subr.mxu0 0.0
        %945 = vmatpush2.msra.mxu0 0.0
        %946 = vmatprep.subr.mxu0 0.0
        %947 = vmatpush2.msra.mxu0 0.0
        %948 = vmatprep.subr.mxu0 0.0
        %949 = vmatpush2.msra.mxu0 0.0
        %950 = vmatprep.subr.mxu0 0.0
        %951 = vmatpush2.msra.mxu0 0.0
        %952 = vmatprep.subr.mxu0 0.0
        %953 = vmatpush2.msra.mxu0 0.0
        %954 = vmatprep.subr.mxu0 0.0
        %955 = vmatpush2.msra.mxu0 0.0
        %956 = vmatprep.subr.mxu0 0.0
        %957 = vmatpush2.msra.mxu0 0.0
        %958 = vmatprep.subr.mxu0 0.0
        %959 = vmatpush2.msra.mxu0 0.0
        %960 = vmatprep.subr.mxu0 0.0
        %961 = vmatpush2.msra.mxu0 0.0
        %962 = vmatprep.subr.mxu0 0.0
        %963 = vmatpush2.msra.mxu0 0.0
        %964 = vmatprep.subr.mxu0 0.0
        %965 = vmatpush2.msra.mxu0 0.0
        %966 = vmatprep.subr.mxu0 0.0
        %967 = vmatpush2.msra.mxu0 0.0
        %968 = vmatprep.mubr.f32.mxu0 0.0
        %969 = vmatmul.mubr.f32.gmra.mxu0 %v899
        %v970 = vpop.f32.mrf.mxu0
        %v971 = vadd.f32 0.0, %v970
        %v972 = vpop.f32.mrf.mxu0
        %973 = vmatprep.mubr.f32.mxu0 0.0
        %974 = vmatmul.mubr.f32.gmra.mxu0 %v902
        %v975 = vpop.f32.mrf.mxu0
        %v976 = vadd.f32 0.0, %v975
        %v977 = vpop.f32.mrf.mxu0
        %978 = vdwg.mxu0
        %v980 = vsel %vm520, %v697, 0
        %v983 = vsel %vm520, %v702, 0
        %985 = vmatprep.subr.mxu0 0.0
        %986 = vmatpush1.msra.mxu0 0.0
        %987 = vmatprep.subr.mxu0 0.0
        %988 = vmatpush1.msra.mxu0 0.0
        %989 = vmatprep.subr.mxu0 0.0
        %990 = vmatpush1.msra.mxu0 0.0
        %991 = vmatprep.subr.mxu0 0.0
        %992 = vmatpush1.msra.mxu0 0.0
        %993 = vmatprep.subr.mxu0 0.0
        %994 = vmatpush1.msra.mxu0 0.0
        %995 = vmatprep.subr.mxu0 0.0
        %996 = vmatpush1.msra.mxu0 0.0
        %997 = vmatprep.subr.mxu0 0.0
        %998 = vmatpush1.msra.mxu0 0.0
        %999 = vmatprep.subr.mxu0 0.0
        %1000 = vmatpush1.msra.mxu0 0.0
        %1001 = vmatprep.subr.mxu0 0.0
        %1002 = vmatpush1.msra.mxu0 0.0
        %1003 = vmatprep.subr.mxu0 0.0
        %1004 = vmatpush1.msra.mxu0 0.0
        %1005 = vmatprep.subr.mxu0 0.0
        %1006 = vmatpush1.msra.mxu0 0.0
        %1007 = vmatprep.subr.mxu0 0.0
        %1008 = vmatpush1.msra.mxu0 0.0
        %1009 = vmatprep.subr.mxu0 0.0
        %1010 = vmatpush1.msra.mxu0 0.0
        %1011 = vmatprep.subr.mxu0 0.0
        %1012 = vmatpush1.msra.mxu0 0.0
        %1013 = vmatprep.subr.mxu0 0.0
        %1014 = vmatpush1.msra.mxu0 0.0
        %1015 = vmatprep.subr.mxu0 0.0
        %1016 = vmatpush1.msra.mxu0 %v705
        %1017 = vmatprep.subr.mxu0 0.0
        %1018 = vmatpush2.msra.mxu0 0.0
        %1019 = vmatprep.subr.mxu0 0.0
        %1020 = vmatpush2.msra.mxu0 0.0
        %1021 = vmatprep.subr.mxu0 0.0
        %1022 = vmatpush2.msra.mxu0 0.0
        %1023 = vmatprep.subr.mxu0 0.0
        %1024 = vmatpush2.msra.mxu0 0.0
        %1025 = vmatprep.subr.mxu0 0.0
        %1026 = vmatpush2.msra.mxu0 0.0
        %1027 = vmatprep.subr.mxu0 0.0
        %1028 = vmatpush2.msra.mxu0 0.0
        %1029 = vmatprep.subr.mxu0 0.0
        %1030 = vmatpush2.msra.mxu0 0.0
        %1031 = vmatprep.subr.mxu0 0.0
        %1032 = vmatpush2.msra.mxu0 0.0
        %1033 = vmatprep.subr.mxu0 0.0
        %1034 = vmatpush2.msra.mxu0 0.0
        %1035 = vmatprep.subr.mxu0 0.0
        %1036 = vmatpush2.msra.mxu0 0.0
        %1037 = vmatprep.subr.mxu0 0.0
        %1038 = vmatpush2.msra.mxu0 0.0
        %1039 = vmatprep.subr.mxu0 0.0
        %1040 = vmatpush2.msra.mxu0 0.0
        %1041 = vmatprep.subr.mxu0 0.0
        %1042 = vmatpush2.msra.mxu0 0.0
        %1043 = vmatprep.subr.mxu0 0.0
        %1044 = vmatpush2.msra.mxu0 0.0
        %1045 = vmatprep.subr.mxu0 0.0
        %1046 = vmatpush2.msra.mxu0 0.0
        %1047 = vmatprep.subr.mxu0 0.0
        %1048 = vmatpush2.msra.mxu0 0.0
        %1049 = vmatprep.mubr.f32.mxu0 0.0
        %1050 = vmatmul.mubr.f32.gmra.mxu0 %v980
        %v1051 = vpop.f32.mrf.mxu0
        %v1052 = vadd.f32 %v971, %v1051
        %v1053 = vpop.f32.mrf.mxu0
        %1054 = vmatprep.mubr.f32.mxu0 0.0
        %1055 = vmatmul.mubr.f32.gmra.mxu0 %v983
        %v1056 = vpop.f32.mrf.mxu0
        %v1057 = vadd.f32 %v976, %v1056
        %v1058 = vpop.f32.mrf.mxu0
        %1059 = vdwg.mxu0
        %s1060 = scalar_lea.vmem %s363, 16 [#allocation5]
        %v1061 = vld [vmem:[%s1060] sm:$0xff]
        %s1062 = scalar_lea.vmem %s372, 16 [#allocation7]
        %v1063 = vld [vmem:[%s1062] sm:$0xff]
        %1064 = vrot.lane.b32.xlu0 %v510, 112
        %v1065 = vpop.permute.xlu0 %1064
        %1066 = vrot.lane.b32.xlu0 %v515, 112
        %v1067 = vpop.permute.xlu0 %1066
        %v1068 = vsel %vm520, %v1065, 0
        %v1070 = vsel %vm520, %v1067, 0
        %1072 = vmatprep.subr.mxu0 0.0
        %1073 = vmatpush1.msra.mxu0 0.0
        %1074 = vmatprep.subr.mxu0 0.0
        %1075 = vmatpush1.msra.mxu0 0.0
        %1076 = vmatprep.subr.mxu0 0.0
        %1077 = vmatpush1.msra.mxu0 0.0
        %1078 = vmatprep.subr.mxu0 0.0
        %1079 = vmatpush1.msra.mxu0 0.0
        %1080 = vmatprep.subr.mxu0 0.0
        %1081 = vmatpush1.msra.mxu0 0.0
        %1082 = vmatprep.subr.mxu0 0.0
        %1083 = vmatpush1.msra.mxu0 0.0
        %1084 = vmatprep.subr.mxu0 0.0
        %1085 = vmatpush1.msra.mxu0 0.0
        %1086 = vmatprep.subr.mxu0 0.0
        %1087 = vmatpush1.msra.mxu0 0.0
        %1088 = vmatprep.subr.mxu0 0.0
        %1089 = vmatpush1.msra.mxu0 0.0
        %1090 = vmatprep.subr.mxu0 0.0
        %1091 = vmatpush1.msra.mxu0 0.0
        %1092 = vmatprep.subr.mxu0 0.0
        %1093 = vmatpush1.msra.mxu0 0.0
        %1094 = vmatprep.subr.mxu0 0.0
        %1095 = vmatpush1.msra.mxu0 0.0
        %1096 = vmatprep.subr.mxu0 0.0
        %1097 = vmatpush1.msra.mxu0 0.0
        %1098 = vmatprep.subr.mxu0 0.0
        %1099 = vmatpush1.msra.mxu0 0.0
        %1100 = vmatprep.subr.mxu0 0.0
        %1101 = vmatpush1.msra.mxu0 0.0
        %1102 = vmatprep.subr.mxu0 0.0
        %1103 = vmatpush1.msra.mxu0 %v1061
        %1104 = vmatprep.subr.mxu0 0.0
        %1105 = vmatpush2.msra.mxu0 0.0
        %1106 = vmatprep.subr.mxu0 0.0
        %1107 = vmatpush2.msra.mxu0 0.0
        %1108 = vmatprep.subr.mxu0 0.0
        %1109 = vmatpush2.msra.mxu0 0.0
        %1110 = vmatprep.subr.mxu0 0.0
        %1111 = vmatpush2.msra.mxu0 0.0
        %1112 = vmatprep.subr.mxu0 0.0
        %1113 = vmatpush2.msra.mxu0 0.0
        %1114 = vmatprep.subr.mxu0 0.0
        %1115 = vmatpush2.msra.mxu0 0.0
        %1116 = vmatprep.subr.mxu0 0.0
        %1117 = vmatpush2.msra.mxu0 0.0
        %1118 = vmatprep.subr.mxu0 0.0
        %1119 = vmatpush2.msra.mxu0 0.0
        %1120 = vmatprep.subr.mxu0 0.0
        %1121 = vmatpush2.msra.mxu0 0.0
        %1122 = vmatprep.subr.mxu0 0.0
        %1123 = vmatpush2.msra.mxu0 0.0
        %1124 = vmatprep.subr.mxu0 0.0
        %1125 = vmatpush2.msra.mxu0 0.0
        %1126 = vmatprep.subr.mxu0 0.0
        %1127 = vmatpush2.msra.mxu0 0.0
        %1128 = vmatprep.subr.mxu0 0.0
        %1129 = vmatpush2.msra.mxu0 0.0
        %1130 = vmatprep.subr.mxu0 0.0
        %1131 = vmatpush2.msra.mxu0 0.0
        %1132 = vmatprep.subr.mxu0 0.0
        %1133 = vmatpush2.msra.mxu0 0.0
        %1134 = vmatprep.subr.mxu0 0.0
        %1135 = vmatpush2.msra.mxu0 0.0
        %1136 = vmatprep.mubr.f32.mxu0 0.0
        %1137 = vmatmul.mubr.f32.gmra.mxu0 %v1068
        %v1138 = vpop.f32.mrf.mxu0
        %v1139 = vadd.f32 0.0, %v1138
        %v1140 = vpop.f32.mrf.mxu0
        %1141 = vmatprep.mubr.f32.mxu0 0.0
        %1142 = vmatmul.mubr.f32.gmra.mxu0 %v1070
        %v1143 = vpop.f32.mrf.mxu0
        %v1144 = vadd.f32 0.0, %v1143
        %v1145 = vpop.f32.mrf.mxu0
        %1146 = vdwg.mxu0
        %v1147 = vsel %vm520, %v1139, -inf
        %1148 = vmax.xlane.f32.xlu0 %v1147
        %v1149 = vpop.xlane.xlu0 %1148
        %v1150 = vsel %vm520, %v1144, -inf
        %1151 = vmax.xlane.f32.xlu0 %v1150
        %v1152 = vpop.xlane.xlu0 %1151
        %v1153 = vsub.f32 %v1139, %v1149
        %v1154 = vsub.f32 %v1144, %v1152
        %v1155 = vmul.f32 %v1153, 1.442695
        %v1156 = vpow.pop %v1155
        %v1157 = vmul.f32 %v1154, 1.442695
        %v1158 = vpow.pop %v1157
        %v1159 = vsel %vm520, %v1156, 0.0
        %1160 = vadd.xlane.f32.xlu0 %v1159
        %v1161 = vpop.xlane.xlu0 %1160
        %v1162 = vsel %vm520, %v1158, 0.0
        %1163 = vadd.xlane.f32.xlu0 %v1162
        %v1164 = vpop.xlane.xlu0 %1163
        %v1165 = vrcp.pop %v1161
        %v1166 = vrcp.pop %v1164
        %v1167 = vmul.f32 %v1156, %v1165
        %v1168 = vmul.f32 %v1158, %v1166
        %v1170 = vsel %vm520, %v1167, 0
        %v1173 = vsel %vm520, %v1168, 0
        %1175 = vmatprep.subr.mxu0 0.0
        %1176 = vmatpush1.msra.mxu0 0.0
        %1177 = vmatprep.subr.mxu0 0.0
        %1178 = vmatpush1.msra.mxu0 0.0
        %1179 = vmatprep.subr.mxu0 0.0
        %1180 = vmatpush1.msra.mxu0 0.0
        %1181 = vmatprep.subr.mxu0 0.0
        %1182 = vmatpush1.msra.mxu0 0.0
        %1183 = vmatprep.subr.mxu0 0.0
        %1184 = vmatpush1.msra.mxu0 0.0
        %1185 = vmatprep.subr.mxu0 0.0
        %1186 = vmatpush1.msra.mxu0 0.0
        %1187 = vmatprep.subr.mxu0 0.0
        %1188 = vmatpush1.msra.mxu0 0.0
        %1189 = vmatprep.subr.mxu0 0.0
        %1190 = vmatpush1.msra.mxu0 0.0
        %1191 = vmatprep.subr.mxu0 0.0
        %1192 = vmatpush1.msra.mxu0 0.0
        %1193 = vmatprep.subr.mxu0 0.0
        %1194 = vmatpush1.msra.mxu0 0.0
        %1195 = vmatprep.subr.mxu0 0.0
        %1196 = vmatpush1.msra.mxu0 0.0
        %1197 = vmatprep.subr.mxu0 0.0
        %1198 = vmatpush1.msra.mxu0 0.0
        %1199 = vmatprep.subr.mxu0 0.0
        %1200 = vmatpush1.msra.mxu0 0.0
        %1201 = vmatprep.subr.mxu0 0.0
        %1202 = vmatpush1.msra.mxu0 0.0
        %1203 = vmatprep.subr.mxu0 0.0
        %1204 = vmatpush1.msra.mxu0 0.0
        %1205 = vmatprep.subr.mxu0 0.0
        %1206 = vmatpush1.msra.mxu0 %v1063
        %1207 = vmatprep.subr.mxu0 0.0
        %1208 = vmatpush2.msra.mxu0 0.0
        %1209 = vmatprep.subr.mxu0 0.0
        %1210 = vmatpush2.msra.mxu0 0.0
        %1211 = vmatprep.subr.mxu0 0.0
        %1212 = vmatpush2.msra.mxu0 0.0
        %1213 = vmatprep.subr.mxu0 0.0
        %1214 = vmatpush2.msra.mxu0 0.0
        %1215 = vmatprep.subr.mxu0 0.0
        %1216 = vmatpush2.msra.mxu0 0.0
        %1217 = vmatprep.subr.mxu0 0.0
        %1218 = vmatpush2.msra.mxu0 0.0
        %1219 = vmatprep.subr.mxu0 0.0
        %1220 = vmatpush2.msra.mxu0 0.0
        %1221 = vmatprep.subr.mxu0 0.0
        %1222 = vmatpush2.msra.mxu0 0.0
        %1223 = vmatprep.subr.mxu0 0.0
        %1224 = vmatpush2.msra.mxu0 0.0
        %1225 = vmatprep.subr.mxu0 0.0
        %1226 = vmatpush2.msra.mxu0 0.0
        %1227 = vmatprep.subr.mxu0 0.0
        %1228 = vmatpush2.msra.mxu0 0.0
        %1229 = vmatprep.subr.mxu0 0.0
        %1230 = vmatpush2.msra.mxu0 0.0
        %1231 = vmatprep.subr.mxu0 0.0
        %1232 = vmatpush2.msra.mxu0 0.0
        %1233 = vmatprep.subr.mxu0 0.0
        %1234 = vmatpush2.msra.mxu0 0.0
        %1235 = vmatprep.subr.mxu0 0.0
        %1236 = vmatpush2.msra.mxu0 0.0
        %1237 = vmatprep.subr.mxu0 0.0
        %1238 = vmatpush2.msra.mxu0 0.0
        %1239 = vmatprep.mubr.f32.mxu0 0.0
        %1240 = vmatmul.mubr.f32.gmra.mxu0 %v1170
        %v1241 = vpop.f32.mrf.mxu0
        %v1242 = vadd.f32 0.0, %v1241
        %v1243 = vpop.f32.mrf.mxu0
        %1244 = vmatprep.mubr.f32.mxu0 0.0
        %1245 = vmatmul.mubr.f32.gmra.mxu0 %v1173
        %v1246 = vpop.f32.mrf.mxu0
        %v1247 = vadd.f32 0.0, %v1246
        %v1248 = vpop.f32.mrf.mxu0
        %1249 = vdwg.mxu0
        %s1250 = scalar_lea.vmem [#allocation10], 16
        %v1251 = vld [vmem:[%s1250] sm:$0xff]
        %v1253 = vsel %vm520, %v1242, 0
        %v1256 = vsel %vm520, %v1247, 0
        %1258 = vmatprep.subr.mxu0 0.0
        %1259 = vmatpush1.msra.mxu0 0.0
        %1260 = vmatprep.subr.mxu0 0.0
        %1261 = vmatpush1.msra.mxu0 0.0
        %1262 = vmatprep.subr.mxu0 0.0
        %1263 = vmatpush1.msra.mxu0 0.0
        %1264 = vmatprep.subr.mxu0 0.0
        %1265 = vmatpush1.msra.mxu0 0.0
        %1266 = vmatprep.subr.mxu0 0.0
        %1267 = vmatpush1.msra.mxu0 0.0
        %1268 = vmatprep.subr.mxu0 0.0
        %1269 = vmatpush1.msra.mxu0 0.0
        %1270 = vmatprep.subr.mxu0 0.0
        %1271 = vmatpush1.msra.mxu0 0.0
        %1272 = vmatprep.subr.mxu0 0.0
        %1273 = vmatpush1.msra.mxu0 0.0
        %1274 = vmatprep.subr.mxu0 0.0
        %1275 = vmatpush1.msra.mxu0 0.0
        %1276 = vmatprep.subr.mxu0 0.0
        %1277 = vmatpush1.msra.mxu0 0.0
        %1278 = vmatprep.subr.mxu0 0.0
        %1279 = vmatpush1.msra.mxu0 0.0
        %1280 = vmatprep.subr.mxu0 0.0
        %1281 = vmatpush1.msra.mxu0 0.0
        %1282 = vmatprep.subr.mxu0 0.0
        %1283 = vmatpush1.msra.mxu0 0.0
        %1284 = vmatprep.subr.mxu0 0.0
        %1285 = vmatpush1.msra.mxu0 0.0
        %1286 = vmatprep.subr.mxu0 0.0
        %1287 = vmatpush1.msra.mxu0 0.0
        %1288 = vmatprep.subr.mxu0 0.0
        %1289 = vmatpush1.msra.mxu0 %v1251
        %1290 = vmatprep.subr.mxu0 0.0
        %1291 = vmatpush2.msra.mxu0 0.0
        %1292 = vmatprep.subr.mxu0 0.0
        %1293 = vmatpush2.msra.mxu0 0.0
        %1294 = vmatprep.subr.mxu0 0.0
        %1295 = vmatpush2.msra.mxu0 0.0
        %1296 = vmatprep.subr.mxu0 0.0
        %1297 = vmatpush2.msra.mxu0 0.0
        %1298 = vmatprep.subr.mxu0 0.0
        %1299 = vmatpush2.msra.mxu0 0.0
        %1300 = vmatprep.subr.mxu0 0.0
        %1301 = vmatpush2.msra.mxu0 0.0
        %1302 = vmatprep.subr.mxu0 0.0
        %1303 = vmatpush2.msra.mxu0 0.0
        %1304 = vmatprep.subr.mxu0 0.0
        %1305 = vmatpush2.msra.mxu0 0.0
        %1306 = vmatprep.subr.mxu0 0.0
        %1307 = vmatpush2.msra.mxu0 0.0
        %1308 = vmatprep.subr.mxu0 0.0
        %1309 = vmatpush2.msra.mxu0 0.0
        %1310 = vmatprep.subr.mxu0 0.0
        %1311 = vmatpush2.msra.mxu0 0.0
        %1312 = vmatprep.subr.mxu0 0.0
        %1313 = vmatpush2.msra.mxu0 0.0
        %1314 = vmatprep.subr.mxu0 0.0
        %1315 = vmatpush2.msra.mxu0 0.0
        %1316 = vmatprep.subr.mxu0 0.0
        %1317 = vmatpush2.msra.mxu0 0.0
        %1318 = vmatprep.subr.mxu0 0.0
        %1319 = vmatpush2.msra.mxu0 0.0
        %1320 = vmatprep.subr.mxu0 0.0
        %1321 = vmatpush2.msra.mxu0 0.0
        %1322 = vmatprep.mubr.f32.mxu0 0.0
        %1323 = vmatmul.mubr.f32.gmra.mxu0 %v1253
        %v1324 = vpop.f32.mrf.mxu0
        %v1325 = vadd.f32 0.0, %v1324
        %v1326 = vpop.f32.mrf.mxu0
        %1327 = vmatprep.mubr.f32.mxu0 0.0
        %1328 = vmatmul.mubr.f32.gmra.mxu0 %v1256
        %v1329 = vpop.f32.mrf.mxu0
        %v1330 = vadd.f32 0.0, %v1329
        %v1331 = vpop.f32.mrf.mxu0
        %1332 = vdwg.mxu0
        %v1333 = vadd.f32 %v1052, %v1325
        %v1334 = vadd.f32 %v1057, %v1330
        %s1335 = scalar_lea.vmem %s363, 24 [#allocation5]
        %v1336 = vld [vmem:[%s1335] sm:$0xff]
        %s1337 = scalar_lea.vmem %s372, 24 [#allocation7]
        %v1338 = vld [vmem:[%s1337] sm:$0xff]
        %1339 = vrot.lane.b32.xlu0 %v510, 104
        %v1340 = vpop.permute.xlu0 %1339
        %1341 = vrot.lane.b32.xlu0 %v515, 104
        %v1342 = vpop.permute.xlu0 %1341
        %v1343 = vsel %vm520, %v1340, 0
        %v1345 = vsel %vm520, %v1342, 0
        %1347 = vmatprep.subr.mxu0 0.0
        %1348 = vmatpush1.msra.mxu0 0.0
        %1349 = vmatprep.subr.mxu0 0.0
        %1350 = vmatpush1.msra.mxu0 0.0
        %1351 = vmatprep.subr.mxu0 0.0
        %1352 = vmatpush1.msra.mxu0 0.0
        %1353 = vmatprep.subr.mxu0 0.0
        %1354 = vmatpush1.msra.mxu0 0.0
        %1355 = vmatprep.subr.mxu0 0.0
        %1356 = vmatpush1.msra.mxu0 0.0
        %1357 = vmatprep.subr.mxu0 0.0
        %1358 = vmatpush1.msra.mxu0 0.0
        %1359 = vmatprep.subr.mxu0 0.0
        %1360 = vmatpush1.msra.mxu0 0.0
        %1361 = vmatprep.subr.mxu0 0.0
        %1362 = vmatpush1.msra.mxu0 0.0
        %1363 = vmatprep.subr.mxu0 0.0
        %1364 = vmatpush1.msra.mxu0 0.0
        %1365 = vmatprep.subr.mxu0 0.0
        %1366 = vmatpush1.msra.mxu0 0.0
        %1367 = vmatprep.subr.mxu0 0.0
        %1368 = vmatpush1.msra.mxu0 0.0
        %1369 = vmatprep.subr.mxu0 0.0
        %1370 = vmatpush1.msra.mxu0 0.0
        %1371 = vmatprep.subr.mxu0 0.0
        %1372 = vmatpush1.msra.mxu0 0.0
        %1373 = vmatprep.subr.mxu0 0.0
        %1374 = vmatpush1.msra.mxu0 0.0
        %1375 = vmatprep.subr.mxu0 0.0
        %1376 = vmatpush1.msra.mxu0 0.0
        %1377 = vmatprep.subr.mxu0 0.0
        %1378 = vmatpush1.msra.mxu0 %v1336
        %1379 = vmatprep.subr.mxu0 0.0
        %1380 = vmatpush2.msra.mxu0 0.0
        %1381 = vmatprep.subr.mxu0 0.0
        %1382 = vmatpush2.msra.mxu0 0.0
        %1383 = vmatprep.subr.mxu0 0.0
        %1384 = vmatpush2.msra.mxu0 0.0
        %1385 = vmatprep.subr.mxu0 0.0
        %1386 = vmatpush2.msra.mxu0 0.0
        %1387 = vmatprep.subr.mxu0 0.0
        %1388 = vmatpush2.msra.mxu0 0.0
        %1389 = vmatprep.subr.mxu0 0.0
        %1390 = vmatpush2.msra.mxu0 0.0
        %1391 = vmatprep.subr.mxu0 0.0
        %1392 = vmatpush2.msra.mxu0 0.0
        %1393 = vmatprep.subr.mxu0 0.0
        %1394 = vmatpush2.msra.mxu0 0.0
        %1395 = vmatprep.subr.mxu0 0.0
        %1396 = vmatpush2.msra.mxu0 0.0
        %1397 = vmatprep.subr.mxu0 0.0
        %1398 = vmatpush2.msra.mxu0 0.0
        %1399 = vmatprep.subr.mxu0 0.0
        %1400 = vmatpush2.msra.mxu0 0.0
        %1401 = vmatprep.subr.mxu0 0.0
        %1402 = vmatpush2.msra.mxu0 0.0
        %1403 = vmatprep.subr.mxu0 0.0
        %1404 = vmatpush2.msra.mxu0 0.0
        %1405 = vmatprep.subr.mxu0 0.0
        %1406 = vmatpush2.msra.mxu0 0.0
        %1407 = vmatprep.subr.mxu0 0.0
        %1408 = vmatpush2.msra.mxu0 0.0
        %1409 = vmatprep.subr.mxu0 0.0
        %1410 = vmatpush2.msra.mxu0 0.0
        %1411 = vmatprep.mubr.f32.mxu0 0.0
        %1412 = vmatmul.mubr.f32.gmra.mxu0 %v1343
        %v1413 = vpop.f32.mrf.mxu0
        %v1414 = vadd.f32 0.0, %v1413
        %v1415 = vpop.f32.mrf.mxu0
        %1416 = vmatprep.mubr.f32.mxu0 0.0
        %1417 = vmatmul.mubr.f32.gmra.mxu0 %v1345
        %v1418 = vpop.f32.mrf.mxu0
        %v1419 = vadd.f32 0.0, %v1418
        %v1420 = vpop.f32.mrf.mxu0
        %1421 = vdwg.mxu0
        %v1422 = vsel %vm520, %v1414, -inf
        %1423 = vmax.xlane.f32.xlu0 %v1422
        %v1424 = vpop.xlane.xlu0 %1423
        %v1425 = vsel %vm520, %v1419, -inf
        %1426 = vmax.xlane.f32.xlu0 %v1425
        %v1427 = vpop.xlane.xlu0 %1426
        %v1428 = vsub.f32 %v1414, %v1424
        %v1429 = vsub.f32 %v1419, %v1427
        %v1430 = vmul.f32 %v1428, 1.442695
        %v1431 = vpow.pop %v1430
        %v1432 = vmul.f32 %v1429, 1.442695
        %v1433 = vpow.pop %v1432
        %v1434 = vsel %vm520, %v1431, 0.0
        %1435 = vadd.xlane.f32.xlu0 %v1434
        %v1436 = vpop.xlane.xlu0 %1435
        %v1437 = vsel %vm520, %v1433, 0.0
        %1438 = vadd.xlane.f32.xlu0 %v1437
        %v1439 = vpop.xlane.xlu0 %1438
        %v1440 = vrcp.pop %v1436
        %v1441 = vrcp.pop %v1439
        %v1442 = vmul.f32 %v1431, %v1440
        %v1443 = vmul.f32 %v1433, %v1441
        %v1445 = vsel %vm520, %v1442, 0
        %v1448 = vsel %vm520, %v1443, 0
        %1450 = vmatprep.subr.mxu0 0.0
        %1451 = vmatpush1.msra.mxu0 0.0
        %1452 = vmatprep.subr.mxu0 0.0
        %1453 = vmatpush1.msra.mxu0 0.0
        %1454 = vmatprep.subr.mxu0 0.0
        %1455 = vmatpush1.msra.mxu0 0.0
        %1456 = vmatprep.subr.mxu0 0.0
        %1457 = vmatpush1.msra.mxu0 0.0
        %1458 = vmatprep.subr.mxu0 0.0
        %1459 = vmatpush1.msra.mxu0 0.0
        %1460 = vmatprep.subr.mxu0 0.0
        %1461 = vmatpush1.msra.mxu0 0.0
        %1462 = vmatprep.subr.mxu0 0.0
        %1463 = vmatpush1.msra.mxu0 0.0
        %1464 = vmatprep.subr.mxu0 0.0
        %1465 = vmatpush1.msra.mxu0 0.0
        %1466 = vmatprep.subr.mxu0 0.0
        %1467 = vmatpush1.msra.mxu0 0.0
        %1468 = vmatprep.subr.mxu0 0.0
        %1469 = vmatpush1.msra.mxu0 0.0
        %1470 = vmatprep.subr.mxu0 0.0
        %1471 = vmatpush1.msra.mxu0 0.0
        %1472 = vmatprep.subr.mxu0 0.0
        %1473 = vmatpush1.msra.mxu0 0.0
        %1474 = vmatprep.subr.mxu0 0.0
        %1475 = vmatpush1.msra.mxu0 0.0
        %1476 = vmatprep.subr.mxu0 0.0
        %1477 = vmatpush1.msra.mxu0 0.0
        %1478 = vmatprep.subr.mxu0 0.0
        %1479 = vmatpush1.msra.mxu0 0.0
        %1480 = vmatprep.subr.mxu0 0.0
        %1481 = vmatpush1.msra.mxu0 %v1338
        %1482 = vmatprep.subr.mxu0 0.0
        %1483 = vmatpush2.msra.mxu0 0.0
        %1484 = vmatprep.subr.mxu0 0.0
        %1485 = vmatpush2.msra.mxu0 0.0
        %1486 = vmatprep.subr.mxu0 0.0
        %1487 = vmatpush2.msra.mxu0 0.0
        %1488 = vmatprep.subr.mxu0 0.0
        %1489 = vmatpush2.msra.mxu0 0.0
        %1490 = vmatprep.subr.mxu0 0.0
        %1491 = vmatpush2.msra.mxu0 0.0
        %1492 = vmatprep.subr.mxu0 0.0
        %1493 = vmatpush2.msra.mxu0 0.0
        %1494 = vmatprep.subr.mxu0 0.0
        %1495 = vmatpush2.msra.mxu0 0.0
        %1496 = vmatprep.subr.mxu0 0.0
        %1497 = vmatpush2.msra.mxu0 0.0
        %1498 = vmatprep.subr.mxu0 0.0
        %1499 = vmatpush2.msra.mxu0 0.0
        %1500 = vmatprep.subr.mxu0 0.0
        %1501 = vmatpush2.msra.mxu0 0.0
        %1502 = vmatprep.subr.mxu0 0.0
        %1503 = vmatpush2.msra.mxu0 0.0
        %1504 = vmatprep.subr.mxu0 0.0
        %1505 = vmatpush2.msra.mxu0 0.0
        %1506 = vmatprep.subr.mxu0 0.0
        %1507 = vmatpush2.msra.mxu0 0.0
        %1508 = vmatprep.subr.mxu0 0.0
        %1509 = vmatpush2.msra.mxu0 0.0
        %1510 = vmatprep.subr.mxu0 0.0
        %1511 = vmatpush2.msra.mxu0 0.0
        %1512 = vmatprep.subr.mxu0 0.0
        %1513 = vmatpush2.msra.mxu0 0.0
        %1514 = vmatprep.mubr.f32.mxu0 0.0
        %1515 = vmatmul.mubr.f32.gmra.mxu0 %v1445
        %v1516 = vpop.f32.mrf.mxu0
        %v1517 = vadd.f32 0.0, %v1516
        %v1518 = vpop.f32.mrf.mxu0
        %1519 = vmatprep.mubr.f32.mxu0 0.0
        %1520 = vmatmul.mubr.f32.gmra.mxu0 %v1448
        %v1521 = vpop.f32.mrf.mxu0
        %v1522 = vadd.f32 0.0, %v1521
        %v1523 = vpop.f32.mrf.mxu0
        %1524 = vdwg.mxu0
        %s1525 = scalar_lea.vmem [#allocation10], 24
        %v1526 = vld [vmem:[%s1525] sm:$0xff]
        %v1528 = vsel %vm520, %v1517, 0
        %v1531 = vsel %vm520, %v1522, 0
        %1533 = vmatprep.subr.mxu0 0.0
        %1534 = vmatpush1.msra.mxu0 0.0
        %1535 = vmatprep.subr.mxu0 0.0
        %1536 = vmatpush1.msra.mxu0 0.0
        %1537 = vmatprep.subr.mxu0 0.0
        %1538 = vmatpush1.msra.mxu0 0.0
        %1539 = vmatprep.subr.mxu0 0.0
        %1540 = vmatpush1.msra.mxu0 0.0
        %1541 = vmatprep.subr.mxu0 0.0
        %1542 = vmatpush1.msra.mxu0 0.0
        %1543 = vmatprep.subr.mxu0 0.0
        %1544 = vmatpush1.msra.mxu0 0.0
        %1545 = vmatprep.subr.mxu0 0.0
        %1546 = vmatpush1.msra.mxu0 0.0
        %1547 = vmatprep.subr.mxu0 0.0
        %1548 = vmatpush1.msra.mxu0 0.0
        %1549 = vmatprep.subr.mxu0 0.0
        %1550 = vmatpush1.msra.mxu0 0.0
        %1551 = vmatprep.subr.mxu0 0.0
        %1552 = vmatpush1.msra.mxu0 0.0
        %1553 = vmatprep.subr.mxu0 0.0
        %1554 = vmatpush1.msra.mxu0 0.0
        %1555 = vmatprep.subr.mxu0 0.0
        %1556 = vmatpush1.msra.mxu0 0.0
        %1557 = vmatprep.subr.mxu0 0.0
        %1558 = vmatpush1.msra.mxu0 0.0
        %1559 = vmatprep.subr.mxu0 0.0
        %1560 = vmatpush1.msra.mxu0 0.0
        %1561 = vmatprep.subr.mxu0 0.0
        %1562 = vmatpush1.msra.mxu0 0.0
        %1563 = vmatprep.subr.mxu0 0.0
        %1564 = vmatpush1.msra.mxu0 %v1526
        %1565 = vmatprep.subr.mxu0 0.0
        %1566 = vmatpush2.msra.mxu0 0.0
        %1567 = vmatprep.subr.mxu0 0.0
        %1568 = vmatpush2.msra.mxu0 0.0
        %1569 = vmatprep.subr.mxu0 0.0
        %1570 = vmatpush2.msra.mxu0 0.0
        %1571 = vmatprep.subr.mxu0 0.0
        %1572 = vmatpush2.msra.mxu0 0.0
        %1573 = vmatprep.subr.mxu0 0.0
        %1574 = vmatpush2.msra.mxu0 0.0
        %1575 = vmatprep.subr.mxu0 0.0
        %1576 = vmatpush2.msra.mxu0 0.0
        %1577 = vmatprep.subr.mxu0 0.0
        %1578 = vmatpush2.msra.mxu0 0.0
        %1579 = vmatprep.subr.mxu0 0.0
        %1580 = vmatpush2.msra.mxu0 0.0
        %1581 = vmatprep.subr.mxu0 0.0
        %1582 = vmatpush2.msra.mxu0 0.0
        %1583 = vmatprep.subr.mxu0 0.0
        %1584 = vmatpush2.msra.mxu0 0.0
        %1585 = vmatprep.subr.mxu0 0.0
        %1586 = vmatpush2.msra.mxu0 0.0
        %1587 = vmatprep.subr.mxu0 0.0
        %1588 = vmatpush2.msra.mxu0 0.0
        %1589 = vmatprep.subr.mxu0 0.0
        %1590 = vmatpush2.msra.mxu0 0.0
        %1591 = vmatprep.subr.mxu0 0.0
        %1592 = vmatpush2.msra.mxu0 0.0
        %1593 = vmatprep.subr.mxu0 0.0
        %1594 = vmatpush2.msra.mxu0 0.0
        %1595 = vmatprep.subr.mxu0 0.0
        %1596 = vmatpush2.msra.mxu0 0.0
        %1597 = vmatprep.mubr.f32.mxu0 0.0
        %1598 = vmatmul.mubr.f32.gmra.mxu0 %v1528
        %v1599 = vpop.f32.mrf.mxu0
        %v1600 = vadd.f32 0.0, %v1599
        %v1601 = vpop.f32.mrf.mxu0
        %1602 = vmatprep.mubr.f32.mxu0 0.0
        %1603 = vmatmul.mubr.f32.gmra.mxu0 %v1531
        %v1604 = vpop.f32.mrf.mxu0
        %v1605 = vadd.f32 0.0, %v1604
        %v1606 = vpop.f32.mrf.mxu0
        %1607 = vdwg.mxu0
        %v1608 = vadd.f32 %v1333, %v1600
        %v1609 = vadd.f32 %v1334, %v1605
        %v1610 = vld [vmem:[%s6] sm:$0x1]
        %v1612 = vlaneseq
        %v1613 = vshrl.u32 %v1612, 7
        %v1614 = vsub.s32 0, %v1613
        %v1615 = vrot.slane %v1610, %v1614
        %v1617 = vadd.f32 %v1608, %v1615
        %v1618 = vadd.f32 %v1609, %v1615
        %1619 = vst.msk [vmem:[%s420] sm:$0xff] %vm436, %v1617
        %1620 = vst.msk [vmem:[%s420 + $0x8] sm:$0xff] %vm436, %v1618
        %s1621 = sand.u32 %s214, 1
        %s1622 = scalar_lea.sflag [#allocation4], %s1621
        %s1623 = sand.u32 %s214, 1
        %s1624 = smul.addr %s1623, 16
        %s1625 = scalar_lea.vmem [#allocation11], %s1624
        // Predicated region
        $region69: #{tpu_custom_call.1} parent=47 // pred_check
          %p1626 = pneg %p224
        $region70: #{tpu_custom_call.1} parent=47 // pred_check_branch
          %1628 = sbr.rel (%p1626) target = $region72
        $region71: #{tpu_custom_call.1} parent=47 // pred_region
          %s1629 = smul.u32 2, %s33
          %s1631 = ssub.s32 256, 256
          %1632 = vsyncadd %s1622, %s1631
          %s1633 = smul.addr %s32, 2
          %s1634 = sadd.s32 %s1629, %s1633
          %s1635 = smul.addr %s1634, 128
          %s1636 = scalar_lea.hbm %s7, %s1635
          %s1637 = sshll.u32 %s1625, 4
          %s1638 = int_to_ptr.vmem [resolvable:$true] %s1637
          %1643 = dma.vmem_to_hbm [thread:$0]  %s1638, 256, %s1636, %s1622, 128, 128, 8
        $region72: #{tpu_custom_call.1} parent=47 // pred_fallthru
          _
      $region48: #{tpu_custom_call.1} parent=5 // pred_fallthru
        _
      %p1644 = scmp.le.s32.totalorder 2, %s23
      // Predicated region
      $region73: #{tpu_custom_call.1} parent=5 // pred_check
        %p1645 = pneg %p1644
      $region74: #{tpu_custom_call.1} parent=5 // pred_check_branch
        %1647 = sbr.rel (%p1645) target = $region76
      $region75: #{tpu_custom_call.1} parent=5 // pred_region
        %s1648 = ssub.s32 %s23, 2
        // Predicated region
        $region77: #{tpu_custom_call.1} parent=75 // pred_check
          %p1649 = pneg %p230
        $region78: #{tpu_custom_call.1} parent=75 // pred_check_branch
          %1651 = sbr.rel (%p1649) target = $region80
        $region79: #{tpu_custom_call.1} parent=75 // pred_region
          %s1652 = sand.u32 %s215, 1
          %s1653 = scalar_lea.sflag [#allocation4], %s1652
          %s1654 = sand.u32 %s215, 1
          %s1655 = smul.addr %s1654, 16
          %s1656 = scalar_lea.vmem [#allocation11], %s1655
          %1657 = dma.done %s1653, 256
        $region80: #{tpu_custom_call.1} parent=75 // pred_fallthru
          _
      $region76: #{tpu_custom_call.1} parent=5 // pred_fallthru
        _
    $region6: #{tpu_custom_call.1} parent=1 // loop_footer
      %s27 = sadd.s32 1, %s23
    $region7: #{tpu_custom_call.1} parent=1 // loop_footer_branch
      %22 = sbr.rel target = $region3
    $region8: #{tpu_custom_call.1} parent=1 // loop_exit
      _
    %1658 = vsyncpa [#allocation3], 1
    %s1659 = scalar_lea.sflag [#allocation3], 1
    %1660 = vsyncpa %s1659, 1
    %1661 = vsyncpa [#allocation6], 1
    %s1662 = scalar_lea.sflag [#allocation6], 1
    %1663 = vsyncpa %s1662, 1
    %1664 = vsyncpa [#allocation9], 1
    %1665 = vsyncpa [#allocation4], 1
    %s1666 = scalar_lea.sflag [#allocation4], 1
    %1667 = vsyncpa %s1666, 1

</llo_original>
